<compile_context>
chip_gen: v6e
topology: v6e:2x2x1
jax: 0.10.0
libtpu: 0.0.40
codegen_flags: <defaults>
</compile_context>

<pallas_src>
import jax
import jax.numpy as jnp
import numpy as np
from jax.experimental import pallas as pl
from jax.experimental.pallas import tpu as pltpu


# ----------------------------- fused kernel -------------------------------- #

def _down_fused_kernel(ph_ref, w1_ref, b1_ref, w2_ref, b2_ref, out_ref,
                       pad1_ref, pad2_ref):
    """maxpool(3,2,1) + conv3x3+ReLU + conv3x3+ReLU for G images.

    ph_ref : (4, G*(Ho+1), Wo+1, CIP) f32   2x2 stride phases of the (-inf)
                                            padded, channel-padded input.
                                            phase = 2*row_parity + col_parity.
    w1_ref : (9, CIP, C1P) bf16  conv1 taps, tap index t = ky*3 + kx
    b1_ref : (1, C1P) f32
    w2_ref : (9, C1P, C2P) bf16  conv2 taps (C2P is a multiple of 128)
    b2_ref : (1, C2P) f32
    out_ref: (G, Ho*Wo, C2P) f32            lane-dense output block
    pad1_ref/pad2_ref : VMEM f32 scratch, zero-bordered conv inputs.
    """
    G, Hp2, Wp2, CIP = pad1_ref.shape
    Ho, Wo = Hp2 - 2, Wp2 - 2
    C1P = pad2_ref.shape[3]
    C2P = out_ref.shape[2]
    M = G * Ho * Wo
    f32 = jnp.float32

    # ---- zero only the 1-px border of the pad scratches (interior is fully
    #      overwritten below; no full-scratch memset per step) ----------------
    def zero_border(pref, c):
        pref[:, 0:1, :, :] = jnp.zeros((G, 1, Wp2, c), f32)
        pref[:, Ho + 1:Ho + 2, :, :] = jnp.zeros((G, 1, Wp2, c), f32)
        pref[:, :, 0:1, :] = jnp.zeros((G, Hp2, 1, c), f32)
        pref[:, :, Wo + 1:Wo + 2, :] = jnp.zeros((G, Hp2, 1, c), f32)

    zero_border(pad1_ref, CIP)
    zero_border(pad2_ref, C1P)

    # ---- MaxPool2d(3, 2, 1): 9 taps from the 2x2 stride-phase split --------
    ee = ph_ref[0].reshape(G, Ho + 1, Wo + 1, CIP)   # even rows, even cols
    eo = ph_ref[1].reshape(G, Ho + 1, Wo + 1, CIP)   # even rows, odd  cols
    oe = ph_ref[2].reshape(G, Ho + 1, Wo + 1, CIP)   # odd  rows, even cols
    oo = ph_ref[3].reshape(G, Ho + 1, Wo + 1, CIP)   # odd  rows, odd  cols

    ee_c = jnp.maximum(ee[:, :, 0:Wo], ee[:, :, 1:Wo + 1])
    oe_c = jnp.maximum(oe[:, :, 0:Wo], oe[:, :, 1:Wo + 1])
    top = jnp.maximum(jnp.maximum(ee_c[:, 0:Ho], ee_c[:, 1:Ho + 1]),
                      jnp.maximum(eo[:, 0:Ho, 0:Wo], eo[:, 1:Ho + 1, 0:Wo]))
    bot = jnp.maximum(oe_c[:, 0:Ho], oo[:, 0:Ho, 0:Wo])
    pooled = jnp.maximum(top, bot)                     # (G, Ho, Wo, CIP) f32
    pad1_ref[:, 1:Ho + 1, 1:Wo + 1, :] = pooled

    # ---- 3x3 conv (pad=1) + bias + ReLU: 9 accumulating bf16 MXU dots ------
    def conv3x3_relu(pad_ref, w_ref, b_ref):
        cin = pad_ref.shape[3]
        acc = None
        for t in range(9):
            ky, kx = divmod(t, 3)
            slab = pad_ref[:, ky:ky + Ho, kx:kx + Wo, :]       # (G,Ho,Wo,cin)
            slab = slab.reshape(M, cin).astype(jnp.bfloat16)   # layout-trivial
            d = jnp.dot(slab, w_ref[t], preferred_element_type=f32)
            acc = d if acc is None else acc + d
        return jnp.maximum(acc + b_ref[...], 0.0)              # (M, cout) f32

    h = conv3x3_relu(pad1_ref, w1_ref, b1_ref)                 # (M, C1P)
    pad2_ref[:, 1:Ho + 1, 1:Wo + 1, :] = h.reshape(G, Ho, Wo, C1P)
    y = conv3x3_relu(pad2_ref, w2_ref, b2_ref)                 # (M, C2P)
    out_ref[...] = y.reshape(G, Ho * Wo, C2P)                  # dense store


# ----------------------------- wrapper -------------------------------------- #

def _round_up(n, m):
    return (n + m - 1) // m * m


def _pick_group(b, max_g=4):
    g = min(b, max_g)
    while b % g:
        g -= 1
    return g


def _conv_taps(w_oihw, cin_p, cout_p):
    # PyTorch (Co, Ci, 3, 3) -> (9, cin_p, cout_p) bf16, tap t = ky*3 + kx
    co, ci, kh, kw = w_oihw.shape
    assert kh == 3 and kw == 3
    wt = jnp.transpose(w_oihw, (2, 3, 1, 0)).reshape(kh * kw, ci, co)
    wt = jnp.pad(wt, ((0, 0), (0, cin_p - ci), (0, cout_p - co)))
    return wt.astype(jnp.bfloat16)


def down_forward(x_nchw, params):
    """Matches PyTorch `down.forward`: input/output in NCHW."""
    x = jnp.transpose(x_nchw, (0, 2, 3, 1)).astype(jnp.float32)   # NCHW->NHWC
    B, H, W, Ci = x.shape
    # TODO(synk): general H/W needs masked edges / relayout-tolerant reshapes.
    assert H % 2 == 0 and W % 16 == 0, "kernel assumes even H and Wo % 8 == 0"
    Ho, Wo = H // 2, W // 2
    C1 = params["w1"].shape[0]
    C2 = params["w2"].shape[0]
    CIP = _round_up(Ci, 8)          # sublane/lane friendly channel padding
    C1P = _round_up(C1, 8)          # hidden channels stay in VMEM only
    C2P = _round_up(C2, 128)        # lane-dense output block (dense vst/DMA)
    G = _pick_group(B)              # images folded into one grid step

    # (-inf) spatial pad + zero channel pad + 2x2 stride-phase split, emitted
    # phase-major so the kernel reads each phase for all G images in one slab.
    # TODO(synk): fold this HBM->HBM reorder into the kernel with strided DMA.
    xp = jnp.pad(x, ((0, 0), (1, 1), (1, 1), (0, 0)),
                 constant_values=-jnp.inf)
    if CIP > Ci:
        xp = jnp.pad(xp, ((0, 0), (0, 0), (0, 0), (0, CIP - Ci)))
    ph = xp.reshape(B, Ho + 1, 2, Wo + 1, 2, CIP)
    ph = jnp.transpose(ph, (2, 4, 0, 1, 3, 5))       # (2, 2, B, Ho+1, Wo+1, C)
    ph = ph.reshape(4, B * (Ho + 1), Wo + 1, CIP)

    w1 = _conv_taps(params["w1"], CIP, C1P)
    w2 = _conv_taps(params["w2"], C1P, C2P)
    b1 = jnp.pad(params["b1"], (0, C1P - C1)).reshape(1, C1P).astype(jnp.float32)
    b2 = jnp.pad(params["b2"], (0, C2P - C2)).reshape(1, C2P).astype(jnp.float32)

    flops = 2 * B * Ho * Wo * 9 * (CIP * C1P + C1P * C2P)
    bytes_accessed = (ph.size * 4 + w1.size * 2 + w2.size * 2
                      + (b1.size + b2.size) * 4 + B * Ho * Wo * C2P * 4)

    y = pl.pallas_call(
        _down_fused_kernel,
        out_shape=jax.ShapeDtypeStruct((B, Ho * Wo, C2P), jnp.float32),
        grid=(B // G,),
        in_specs=[
            pl.BlockSpec((4, G * (Ho + 1), Wo + 1, CIP),
                         lambda b: (0, b, 0, 0)),
            pl.BlockSpec((9, CIP, C1P), lambda b: (0, 0, 0)),   # constant idx ->
            pl.BlockSpec((1, C1P), lambda b: (0, 0)),           #  weights stay
            pl.BlockSpec((9, C1P, C2P), lambda b: (0, 0, 0)),   #  resident
            pl.BlockSpec((1, C2P), lambda b: (0, 0)),
        ],
        out_specs=pl.BlockSpec((G, Ho * Wo, C2P), lambda b: (b, 0, 0)),
        scratch_shapes=[
            pltpu.VMEM((G, Ho + 2, Wo + 2, CIP), jnp.float32),  # padded pooled
            pltpu.VMEM((G, Ho + 2, Wo + 2, C1P), jnp.float32),  # padded hidden
        ],
        compiler_params=pltpu.CompilerParams(
            dimension_semantics=("parallel",),
            vmem_limit_bytes=64 * 1024 * 1024),
        cost_estimate=pl.CostEstimate(flops=flops, transcendentals=0,
                                      bytes_accessed=bytes_accessed),
    )(ph, w1, b1, w2, b2)

    y = y.reshape(B, Ho, Wo, C2P)[..., :C2]          # drop channel padding
    return jnp.transpose(y, (0, 3, 1, 2))            # NHWC -> NCHW


# ----------------------------- "module" ------------------------------------- #

def make_down_params(in_nc, out_nc, key):
    k1, k2, k3, k4 = jax.random.split(key, 4)
    # PyTorch Conv2d weight layout: (out, in, kH, kW)
    return {
        "w1": 0.1 * jax.random.normal(k1, (out_nc, in_nc, 3, 3), jnp.float32),
        "b1": 0.1 * jax.random.normal(k2, (out_nc,), jnp.float32),
        "w2": 0.1 * jax.random.normal(k3, (out_nc, out_nc, 3, 3), jnp.float32),
        "b2": 0.1 * jax.random.normal(k4, (out_nc,), jnp.float32),
    }


# ----------------------------- reference ------------------------------------ #

def _down_ref(x_nchw, params):
    xp = jnp.pad(x_nchw, ((0, 0), (0, 0), (1, 1), (1, 1)),
                 constant_values=-jnp.inf)
    pooled = jax.lax.reduce_window(xp, -jnp.inf, jax.lax.max,
                                   (1, 1, 3, 3), (1, 1, 2, 2), "VALID")

    def conv(x, w, b):
        y = jax.lax.conv_general_dilated(
            x, w, window_strides=(1, 1), padding=((1, 1), (1, 1)),
            dimension_numbers=("NCHW", "OIHW", "NCHW"),
            precision=jax.lax.Precision.HIGHEST)
        return jax.nn.relu(y + b[None, :, None, None])

    h = conv(pooled, params["w1"], params["b1"])
    return conv(h, params["w2"], params["b2"])


# ----------------------------- main ------------------------------------------ #

if __name__ == "__main__":
    key = jax.random.PRNGKey(0)
    kx, kp = jax.random.split(key)
    B, in_nc, out_nc, H, W = 2, 4, 8, 16, 16

    x = jax.random.normal(kx, (B, in_nc, H, W), jnp.float32)
    params = make_down_params(in_nc, out_nc, kp)

    down = jax.jit(down_forward)
    y = jax.block_until_ready(down(x, params))
    assert y.shape == (B, out_nc, H // 2, W // 2), y.shape

    y_ref = jax.block_until_ready(_down_ref(x, params))
    # bf16 MXU operands with f32 accumulation -> slightly looser tolerance.
    np.testing.assert_allclose(np.asarray(y), np.asarray(y_ref),
                               rtol=2e-2, atol=2e-2)
    print("KERNEL_OK")
</pallas_src>

<mosaic_0001>
module attributes {stable_mosaic.version = 11 : i64} {
  func.func @_down_fused_kernel(%arg0: i32, %arg1: memref<4x18x9x8xf32, #tpu.memory_space<vmem>>, %arg2: memref<9x8x8xbf16, #tpu.memory_space<vmem>>, %arg3: memref<1x8xf32, #tpu.memory_space<vmem>>, %arg4: memref<9x8x128xbf16, #tpu.memory_space<vmem>>, %arg5: memref<1x128xf32, #tpu.memory_space<vmem>>, %arg6: memref<2x64x128xf32, #tpu.memory_space<vmem>>, %arg7: memref<2x10x10x8xf32, #tpu.memory_space<vmem>>, %arg8: memref<2x10x10x8xf32, #tpu.memory_space<vmem>>) attributes {dimension_semantics = [#tpu.dimension_semantics<parallel>], iteration_bounds = array<i64: 1>, scalar_prefetch = 0 : i64, scratch_operands = 2 : i64, tpu.core_type = #tpu.core_type<tc>, window_params = [{transform_indices = @transform_0, window_bounds = array<i64: 4, 18, 9, 8>}, {pipeline_mode = #tpu.pipeline_mode<synchronous>, transform_indices = @transform_1, window_bounds = array<i64: 9, 8, 8>}, {pipeline_mode = #tpu.pipeline_mode<synchronous>, transform_indices = @transform_2, window_bounds = array<i64: 1, 8>}, {pipeline_mode = #tpu.pipeline_mode<synchronous>, transform_indices = @transform_3, window_bounds = array<i64: 9, 8, 128>}, {pipeline_mode = #tpu.pipeline_mode<synchronous>, transform_indices = @transform_4, window_bounds = array<i64: 1, 128>}, {transform_indices = @transform_5, window_bounds = array<i64: 2, 64, 128>}]} {
    %cst = arith.constant 0.000000e+00 : f32
    %0 = vector.broadcast %cst : f32 to vector<2x1x10x8xf32>
    %c0 = arith.constant 0 : index
    %c0_0 = arith.constant 0 : index
    %c0_1 = arith.constant 0 : index
    %c0_2 = arith.constant 0 : index
    %1 = vector.load %arg7[%c0, %c0_0, %c0_1, %c0_2] : memref<2x10x10x8xf32, #tpu.memory_space<vmem>>, vector<2x1x10x8xf32>
    tpu.vector_store %arg7[%c0, %c0_0, %c0_1, %c0_2], %0 {strides = array<i32>} : memref<2x10x10x8xf32, #tpu.memory_space<vmem>>, vector<2x1x10x8xf32>,
    %cst_3 = arith.constant 0.000000e+00 : f32
    %2 = vector.broadcast %cst_3 : f32 to vector<2x1x10x8xf32>
    %c0_4 = arith.constant 0 : index
    %c9 = arith.constant 9 : index
    %c0_5 = arith.constant 0 : index
    %c0_6 = arith.constant 0 : index
    %3 = vector.load %arg7[%c0_4, %c9, %c0_5, %c0_6] : memref<2x10x10x8xf32, #tpu.memory_space<vmem>>, vector<2x1x10x8xf32>
    tpu.vector_store %arg7[%c0_4, %c9, %c0_5, %c0_6], %2 {strides = array<i32>} : memref<2x10x10x8xf32, #tpu.memory_space<vmem>>, vector<2x1x10x8xf32>,
    %cst_7 = arith.constant 0.000000e+00 : f32
    %4 = vector.broadcast %cst_7 : f32 to vector<2x10x1x8xf32>
    %c0_8 = arith.constant 0 : index
    %c0_9 = arith.constant 0 : index
    %c0_10 = arith.constant 0 : index
    %c0_11 = arith.constant 0 : index
    %5 = vector.load %arg7[%c0_8, %c0_9, %c0_10, %c0_11] : memref<2x10x10x8xf32, #tpu.memory_space<vmem>>, vector<2x10x1x8xf32>
    tpu.vector_store %arg7[%c0_8, %c0_9, %c0_10, %c0_11], %4 {strides = array<i32>} : memref<2x10x10x8xf32, #tpu.memory_space<vmem>>, vector<2x10x1x8xf32>,
    %cst_12 = arith.constant 0.000000e+00 : f32
    %6 = vector.broadcast %cst_12 : f32 to vector<2x10x1x8xf32>
    %c0_13 = arith.constant 0 : index
    %c0_14 = arith.constant 0 : index
    %c9_15 = arith.constant 9 : index
    %c0_16 = arith.constant 0 : index
    %7 = vector.load %arg7[%c0_13, %c0_14, %c9_15, %c0_16] : memref<2x10x10x8xf32, #tpu.memory_space<vmem>>, vector<2x10x1x8xf32>
    tpu.vector_store %arg7[%c0_13, %c0_14, %c9_15, %c0_16], %6 {strides = array<i32>} : memref<2x10x10x8xf32, #tpu.memory_space<vmem>>, vector<2x10x1x8xf32>,
    %cst_17 = arith.constant 0.000000e+00 : f32
    %8 = vector.broadcast %cst_17 : f32 to vector<2x1x10x8xf32>
    %c0_18 = arith.constant 0 : index
    %c0_19 = arith.constant 0 : index
    %c0_20 = arith.constant 0 : index
    %c0_21 = arith.constant 0 : index
    %9 = vector.load %arg8[%c0_18, %c0_19, %c0_20, %c0_21] : memref<2x10x10x8xf32, #tpu.memory_space<vmem>>, vector<2x1x10x8xf32>
    tpu.vector_store %arg8[%c0_18, %c0_19, %c0_20, %c0_21], %8 {strides = array<i32>} : memref<2x10x10x8xf32, #tpu.memory_space<vmem>>, vector<2x1x10x8xf32>,
    %cst_22 = arith.constant 0.000000e+00 : f32
    %10 = vector.broadcast %cst_22 : f32 to vector<2x1x10x8xf32>
    %c0_23 = arith.constant 0 : index
    %c9_24 = arith.constant 9 : index
    %c0_25 = arith.constant 0 : index
    %c0_26 = arith.constant 0 : index
    %11 = vector.load %arg8[%c0_23, %c9_24, %c0_25, %c0_26] : memref<2x10x10x8xf32, #tpu.memory_space<vmem>>, vector<2x1x10x8xf32>
    tpu.vector_store %arg8[%c0_23, %c9_24, %c0_25, %c0_26], %10 {strides = array<i32>} : memref<2x10x10x8xf32, #tpu.memory_space<vmem>>, vector<2x1x10x8xf32>,
    %cst_27 = arith.constant 0.000000e+00 : f32
    %12 = vector.broadcast %cst_27 : f32 to vector<2x10x1x8xf32>
    %c0_28 = arith.constant 0 : index
    %c0_29 = arith.constant 0 : index
    %c0_30 = arith.constant 0 : index
    %c0_31 = arith.constant 0 : index
    %13 = vector.load %arg8[%c0_28, %c0_29, %c0_30, %c0_31] : memref<2x10x10x8xf32, #tpu.memory_space<vmem>>, vector<2x10x1x8xf32>
    tpu.vector_store %arg8[%c0_28, %c0_29, %c0_30, %c0_31], %12 {strides = array<i32>} : memref<2x10x10x8xf32, #tpu.memory_space<vmem>>, vector<2x10x1x8xf32>,
    %cst_32 = arith.constant 0.000000e+00 : f32
    %14 = vector.broadcast %cst_32 : f32 to vector<2x10x1x8xf32>
    %c0_33 = arith.constant 0 : index
    %c0_34 = arith.constant 0 : index
    %c9_35 = arith.constant 9 : index
    %c0_36 = arith.constant 0 : index
    %15 = vector.load %arg8[%c0_33, %c0_34, %c9_35, %c0_36] : memref<2x10x10x8xf32, #tpu.memory_space<vmem>>, vector<2x10x1x8xf32>
    tpu.vector_store %arg8[%c0_33, %c0_34, %c9_35, %c0_36], %14 {strides = array<i32>} : memref<2x10x10x8xf32, #tpu.memory_space<vmem>>, vector<2x10x1x8xf32>,
    %c0_37 = arith.constant 0 : index
    %c0_38 = arith.constant 0 : index
    %c0_39 = arith.constant 0 : index
    %c0_40 = arith.constant 0 : index
    %16 = vector.load %arg1[%c0_37, %c0_38, %c0_39, %c0_40] : memref<4x18x9x8xf32, #tpu.memory_space<vmem>>, vector<1x18x9x8xf32>
    %17 = vector.shape_cast %16 : vector<1x18x9x8xf32> to vector<18x9x8xf32>
    %18 = vector.shape_cast %17 : vector<18x9x8xf32> to vector<2x9x9x8xf32>
    %c1 = arith.constant 1 : index
    %c0_41 = arith.constant 0 : index
    %c0_42 = arith.constant 0 : index
    %c0_43 = arith.constant 0 : index
    %19 = vector.load %arg1[%c1, %c0_41, %c0_42, %c0_43] : memref<4x18x9x8xf32, #tpu.memory_space<vmem>>, vector<1x18x9x8xf32>
    %20 = vector.shape_cast %19 : vector<1x18x9x8xf32> to vector<18x9x8xf32>
    %21 = vector.shape_cast %20 : vector<18x9x8xf32> to vector<2x9x9x8xf32>
    %c2 = arith.constant 2 : index
    %c0_44 = arith.constant 0 : index
    %c0_45 = arith.constant 0 : index
    %c0_46 = arith.constant 0 : index
    %22 = vector.load %arg1[%c2, %c0_44, %c0_45, %c0_46] : memref<4x18x9x8xf32, #tpu.memory_space<vmem>>, vector<1x18x9x8xf32>
    %23 = vector.shape_cast %22 : vector<1x18x9x8xf32> to vector<18x9x8xf32>
    %24 = vector.shape_cast %23 : vector<18x9x8xf32> to vector<2x9x9x8xf32>
    %c3 = arith.constant 3 : index
    %c0_47 = arith.constant 0 : index
    %c0_48 = arith.constant 0 : index
    %c0_49 = arith.constant 0 : index
    %25 = vector.load %arg1[%c3, %c0_47, %c0_48, %c0_49] : memref<4x18x9x8xf32, #tpu.memory_space<vmem>>, vector<1x18x9x8xf32>
    %26 = vector.shape_cast %25 : vector<1x18x9x8xf32> to vector<18x9x8xf32>
    %27 = vector.shape_cast %26 : vector<18x9x8xf32> to vector<2x9x9x8xf32>
    %28 = vector.extract_strided_slice %18 {offsets = [0, 0, 0, 0], sizes = [2, 9, 8, 8], strides = [1, 1, 1, 1]} : vector<2x9x9x8xf32> to vector<2x9x8x8xf32>
    %29 = vector.extract_strided_slice %18 {offsets = [0, 0, 1, 0], sizes = [2, 9, 8, 8], strides = [1, 1, 1, 1]} : vector<2x9x9x8xf32> to vector<2x9x8x8xf32>
    %30 = arith.maximumf %28, %29 : vector<2x9x8x8xf32>
    %31 = vector.extract_strided_slice %24 {offsets = [0, 0, 0, 0], sizes = [2, 9, 8, 8], strides = [1, 1, 1, 1]} : vector<2x9x9x8xf32> to vector<2x9x8x8xf32>
    %32 = vector.extract_strided_slice %24 {offsets = [0, 0, 1, 0], sizes = [2, 9, 8, 8], strides = [1, 1, 1, 1]} : vector<2x9x9x8xf32> to vector<2x9x8x8xf32>
    %33 = arith.maximumf %31, %32 : vector<2x9x8x8xf32>
    %34 = vector.extract_strided_slice %30 {offsets = [0, 0, 0, 0], sizes = [2, 8, 8, 8], strides = [1, 1, 1, 1]} : vector<2x9x8x8xf32> to vector<2x8x8x8xf32>
    %35 = vector.extract_strided_slice %30 {offsets = [0, 1, 0, 0], sizes = [2, 8, 8, 8], strides = [1, 1, 1, 1]} : vector<2x9x8x8xf32> to vector<2x8x8x8xf32>
    %36 = arith.maximumf %34, %35 : vector<2x8x8x8xf32>
    %37 = vector.extract_strided_slice %21 {offsets = [0, 0, 0, 0], sizes = [2, 8, 8, 8], strides = [1, 1, 1, 1]} : vector<2x9x9x8xf32> to vector<2x8x8x8xf32>
    %38 = vector.extract_strided_slice %21 {offsets = [0, 1, 0, 0], sizes = [2, 8, 8, 8], strides = [1, 1, 1, 1]} : vector<2x9x9x8xf32> to vector<2x8x8x8xf32>
    %39 = arith.maximumf %37, %38 : vector<2x8x8x8xf32>
    %40 = arith.maximumf %36, %39 : vector<2x8x8x8xf32>
    %41 = vector.extract_strided_slice %33 {offsets = [0, 0, 0, 0], sizes = [2, 8, 8, 8], strides = [1, 1, 1, 1]} : vector<2x9x8x8xf32> to vector<2x8x8x8xf32>
    %42 = vector.extract_strided_slice %27 {offsets = [0, 0, 0, 0], sizes = [2, 8, 8, 8], strides = [1, 1, 1, 1]} : vector<2x9x9x8xf32> to vector<2x8x8x8xf32>
    %43 = arith.maximumf %41, %42 : vector<2x8x8x8xf32>
    %44 = arith.maximumf %40, %43 : vector<2x8x8x8xf32>
    %c0_50 = arith.constant 0 : index
    %c1_51 = arith.constant 1 : index
    %c1_52 = arith.constant 1 : index
    %c0_53 = arith.constant 0 : index
    %45 = vector.load %arg7[%c0_50, %c1_51, %c1_52, %c0_53] : memref<2x10x10x8xf32, #tpu.memory_space<vmem>>, vector<2x8x8x8xf32>
    tpu.vector_store %arg7[%c0_50, %c1_51, %c1_52, %c0_53], %44 {strides = array<i32>} : memref<2x10x10x8xf32, #tpu.memory_space<vmem>>, vector<2x8x8x8xf32>,
    %c0_54 = arith.constant 0 : index
    %c0_55 = arith.constant 0 : index
    %c0_56 = arith.constant 0 : index
    %c0_57 = arith.constant 0 : index
    %46 = vector.load %arg7[%c0_54, %c0_55, %c0_56, %c0_57] : memref<2x10x10x8xf32, #tpu.memory_space<vmem>>, vector<2x8x8x8xf32>
    %47 = vector.shape_cast %46 : vector<2x8x8x8xf32> to vector<128x8xf32>
    %48 = arith.truncf %47 : vector<128x8xf32> to vector<128x8xbf16>
    %c0_58 = arith.constant 0 : index
    %c0_59 = arith.constant 0 : index
    %c0_60 = arith.constant 0 : index
    %49 = vector.load %arg2[%c0_58, %c0_59, %c0_60] : memref<9x8x8xbf16, #tpu.memory_space<vmem>>, vector<1x8x8xbf16>
    %50 = vector.shape_cast %49 : vector<1x8x8xbf16> to vector<8x8xbf16>
    %cst_61 = arith.constant dense<0.000000e+00> : vector<128x8xf32>
    %51 = tpu.matmul %48, %50, %cst_61 {dimension_numbers = #tpu.dot_dimension_numbers<[1], [0], [0], [1], [0, 0, 1, 1], [], []>} : vector<128x8xbf16>, vector<8x8xbf16>, vector<128x8xf32> -> vector<128x8xf32>
    %c0_62 = arith.constant 0 : index
    %c0_63 = arith.constant 0 : index
    %c1_64 = arith.constant 1 : index
    %c0_65 = arith.constant 0 : index
    %52 = vector.load %arg7[%c0_62, %c0_63, %c1_64, %c0_65] : memref<2x10x10x8xf32, #tpu.memory_space<vmem>>, vector<2x8x8x8xf32>
    %53 = vector.shape_cast %52 : vector<2x8x8x8xf32> to vector<128x8xf32>
    %54 = arith.truncf %53 : vector<128x8xf32> to vector<128x8xbf16>
    %c1_66 = arith.constant 1 : index
    %c0_67 = arith.constant 0 : index
    %c0_68 = arith.constant 0 : index
    %55 = vector.load %arg2[%c1_66, %c0_67, %c0_68] : memref<9x8x8xbf16, #tpu.memory_space<vmem>>, vector<1x8x8xbf16>
    %56 = vector.shape_cast %55 : vector<1x8x8xbf16> to vector<8x8xbf16>
    %cst_69 = arith.constant dense<0.000000e+00> : vector<128x8xf32>
    %57 = tpu.matmul %54, %56, %cst_69 {dimension_numbers = #tpu.dot_dimension_numbers<[1], [0], [0], [1], [0, 0, 1, 1], [], []>} : vector<128x8xbf16>, vector<8x8xbf16>, vector<128x8xf32> -> vector<128x8xf32>
    %58 = arith.addf %51, %57 : vector<128x8xf32>
    %c0_70 = arith.constant 0 : index
    %c0_71 = arith.constant 0 : index
    %c2_72 = arith.constant 2 : index
    %c0_73 = arith.constant 0 : index
    %59 = vector.load %arg7[%c0_70, %c0_71, %c2_72, %c0_73] : memref<2x10x10x8xf32, #tpu.memory_space<vmem>>, vector<2x8x8x8xf32>
    %60 = vector.shape_cast %59 : vector<2x8x8x8xf32> to vector<128x8xf32>
    %61 = arith.truncf %60 : vector<128x8xf32> to vector<128x8xbf16>
    %c2_74 = arith.constant 2 : index
    %c0_75 = arith.constant 0 : index
    %c0_76 = arith.constant 0 : index
    %62 = vector.load %arg2[%c2_74, %c0_75, %c0_76] : memref<9x8x8xbf16, #tpu.memory_space<vmem>>, vector<1x8x8xbf16>
    %63 = vector.shape_cast %62 : vector<1x8x8xbf16> to vector<8x8xbf16>
    %cst_77 = arith.constant dense<0.000000e+00> : vector<128x8xf32>
    %64 = tpu.matmul %61, %63, %cst_77 {dimension_numbers = #tpu.dot_dimension_numbers<[1], [0], [0], [1], [0, 0, 1, 1], [], []>} : vector<128x8xbf16>, vector<8x8xbf16>, vector<128x8xf32> -> vector<128x8xf32>
    %65 = arith.addf %58, %64 : vector<128x8xf32>
    %c0_78 = arith.constant 0 : index
    %c1_79 = arith.constant 1 : index
    %c0_80 = arith.constant 0 : index
    %c0_81 = arith.constant 0 : index
    %66 = vector.load %arg7[%c0_78, %c1_79, %c0_80, %c0_81] : memref<2x10x10x8xf32, #tpu.memory_space<vmem>>, vector<2x8x8x8xf32>
    %67 = vector.shape_cast %66 : vector<2x8x8x8xf32> to vector<128x8xf32>
    %68 = arith.truncf %67 : vector<128x8xf32> to vector<128x8xbf16>
    %c3_82 = arith.constant 3 : index
    %c0_83 = arith.constant 0 : index
    %c0_84 = arith.constant 0 : index
    %69 = vector.load %arg2[%c3_82, %c0_83, %c0_84] : memref<9x8x8xbf16, #tpu.memory_space<vmem>>, vector<1x8x8xbf16>
    %70 = vector.shape_cast %69 : vector<1x8x8xbf16> to vector<8x8xbf16>
    %cst_85 = arith.constant dense<0.000000e+00> : vector<128x8xf32>
    %71 = tpu.matmul %68, %70, %cst_85 {dimension_numbers = #tpu.dot_dimension_numbers<[1], [0], [0], [1], [0, 0, 1, 1], [], []>} : vector<128x8xbf16>, vector<8x8xbf16>, vector<128x8xf32> -> vector<128x8xf32>
    %72 = arith.addf %65, %71 : vector<128x8xf32>
    %c0_86 = arith.constant 0 : index
    %c1_87 = arith.constant 1 : index
    %c1_88 = arith.constant 1 : index
    %c0_89 = arith.constant 0 : index
    %73 = vector.load %arg7[%c0_86, %c1_87, %c1_88, %c0_89] : memref<2x10x10x8xf32, #tpu.memory_space<vmem>>, vector<2x8x8x8xf32>
    %74 = vector.shape_cast %73 : vector<2x8x8x8xf32> to vector<128x8xf32>
    %75 = arith.truncf %74 : vector<128x8xf32> to vector<128x8xbf16>
    %c4 = arith.constant 4 : index
    %c0_90 = arith.constant 0 : index
    %c0_91 = arith.constant 0 : index
    %76 = vector.load %arg2[%c4, %c0_90, %c0_91] : memref<9x8x8xbf16, #tpu.memory_space<vmem>>, vector<1x8x8xbf16>
    %77 = vector.shape_cast %76 : vector<1x8x8xbf16> to vector<8x8xbf16>
    %cst_92 = arith.constant dense<0.000000e+00> : vector<128x8xf32>
    %78 = tpu.matmul %75, %77, %cst_92 {dimension_numbers = #tpu.dot_dimension_numbers<[1], [0], [0], [1], [0, 0, 1, 1], [], []>} : vector<128x8xbf16>, vector<8x8xbf16>, vector<128x8xf32> -> vector<128x8xf32>
    %79 = arith.addf %72, %78 : vector<128x8xf32>
    %c0_93 = arith.constant 0 : index
    %c1_94 = arith.constant 1 : index
    %c2_95 = arith.constant 2 : index
    %c0_96 = arith.constant 0 : index
    %80 = vector.load %arg7[%c0_93, %c1_94, %c2_95, %c0_96] : memref<2x10x10x8xf32, #tpu.memory_space<vmem>>, vector<2x8x8x8xf32>
    %81 = vector.shape_cast %80 : vector<2x8x8x8xf32> to vector<128x8xf32>
    %82 = arith.truncf %81 : vector<128x8xf32> to vector<128x8xbf16>
    %c5 = arith.constant 5 : index
    %c0_97 = arith.constant 0 : index
    %c0_98 = arith.constant 0 : index
    %83 = vector.load %arg2[%c5, %c0_97, %c0_98] : memref<9x8x8xbf16, #tpu.memory_space<vmem>>, vector<1x8x8xbf16>
    %84 = vector.shape_cast %83 : vector<1x8x8xbf16> to vector<8x8xbf16>
    %cst_99 = arith.constant dense<0.000000e+00> : vector<128x8xf32>
    %85 = tpu.matmul %82, %84, %cst_99 {dimension_numbers = #tpu.dot_dimension_numbers<[1], [0], [0], [1], [0, 0, 1, 1], [], []>} : vector<128x8xbf16>, vector<8x8xbf16>, vector<128x8xf32> -> vector<128x8xf32>
    %86 = arith.addf %79, %85 : vector<128x8xf32>
    %c0_100 = arith.constant 0 : index
    %c2_101 = arith.constant 2 : index
    %c0_102 = arith.constant 0 : index
    %c0_103 = arith.constant 0 : index
    %87 = vector.load %arg7[%c0_100, %c2_101, %c0_102, %c0_103] : memref<2x10x10x8xf32, #tpu.memory_space<vmem>>, vector<2x8x8x8xf32>
    %88 = vector.shape_cast %87 : vector<2x8x8x8xf32> to vector<128x8xf32>
    %89 = arith.truncf %88 : vector<128x8xf32> to vector<128x8xbf16>
    %c6 = arith.constant 6 : index
    %c0_104 = arith.constant 0 : index
    %c0_105 = arith.constant 0 : index
    %90 = vector.load %arg2[%c6, %c0_104, %c0_105] : memref<9x8x8xbf16, #tpu.memory_space<vmem>>, vector<1x8x8xbf16>
    %91 = vector.shape_cast %90 : vector<1x8x8xbf16> to vector<8x8xbf16>
    %cst_106 = arith.constant dense<0.000000e+00> : vector<128x8xf32>
    %92 = tpu.matmul %89, %91, %cst_106 {dimension_numbers = #tpu.dot_dimension_numbers<[1], [0], [0], [1], [0, 0, 1, 1], [], []>} : vector<128x8xbf16>, vector<8x8xbf16>, vector<128x8xf32> -> vector<128x8xf32>
    %93 = arith.addf %86, %92 : vector<128x8xf32>
    %c0_107 = arith.constant 0 : index
    %c2_108 = arith.constant 2 : index
    %c1_109 = arith.constant 1 : index
    %c0_110 = arith.constant 0 : index
    %94 = vector.load %arg7[%c0_107, %c2_108, %c1_109, %c0_110] : memref<2x10x10x8xf32, #tpu.memory_space<vmem>>, vector<2x8x8x8xf32>
    %95 = vector.shape_cast %94 : vector<2x8x8x8xf32> to vector<128x8xf32>
    %96 = arith.truncf %95 : vector<128x8xf32> to vector<128x8xbf16>
    %c7 = arith.constant 7 : index
    %c0_111 = arith.constant 0 : index
    %c0_112 = arith.constant 0 : index
    %97 = vector.load %arg2[%c7, %c0_111, %c0_112] : memref<9x8x8xbf16, #tpu.memory_space<vmem>>, vector<1x8x8xbf16>
    %98 = vector.shape_cast %97 : vector<1x8x8xbf16> to vector<8x8xbf16>
    %cst_113 = arith.constant dense<0.000000e+00> : vector<128x8xf32>
    %99 = tpu.matmul %96, %98, %cst_113 {dimension_numbers = #tpu.dot_dimension_numbers<[1], [0], [0], [1], [0, 0, 1, 1], [], []>} : vector<128x8xbf16>, vector<8x8xbf16>, vector<128x8xf32> -> vector<128x8xf32>
    %100 = arith.addf %93, %99 : vector<128x8xf32>
    %c0_114 = arith.constant 0 : index
    %c2_115 = arith.constant 2 : index
    %c2_116 = arith.constant 2 : index
    %c0_117 = arith.constant 0 : index
    %101 = vector.load %arg7[%c0_114, %c2_115, %c2_116, %c0_117] : memref<2x10x10x8xf32, #tpu.memory_space<vmem>>, vector<2x8x8x8xf32>
    %102 = vector.shape_cast %101 : vector<2x8x8x8xf32> to vector<128x8xf32>
    %103 = arith.truncf %102 : vector<128x8xf32> to vector<128x8xbf16>
    %c8 = arith.constant 8 : index
    %c0_118 = arith.constant 0 : index
    %c0_119 = arith.constant 0 : index
    %104 = vector.load %arg2[%c8, %c0_118, %c0_119] : memref<9x8x8xbf16, #tpu.memory_space<vmem>>, vector<1x8x8xbf16>
    %105 = vector.shape_cast %104 : vector<1x8x8xbf16> to vector<8x8xbf16>
    %cst_120 = arith.constant dense<0.000000e+00> : vector<128x8xf32>
    %106 = tpu.matmul %103, %105, %cst_120 {dimension_numbers = #tpu.dot_dimension_numbers<[1], [0], [0], [1], [0, 0, 1, 1], [], []>} : vector<128x8xbf16>, vector<8x8xbf16>, vector<128x8xf32> -> vector<128x8xf32>
    %107 = arith.addf %100, %106 : vector<128x8xf32>
    %c0_121 = arith.constant 0 : index
    %c0_122 = arith.constant 0 : index
    %108 = vector.load %arg3[%c0_121, %c0_122] : memref<1x8xf32, #tpu.memory_space<vmem>>, vector<1x8xf32>
    %109 = vector.broadcast %108 : vector<1x8xf32> to vector<128x8xf32>
    %110 = arith.addf %107, %109 : vector<128x8xf32>
    %cst_123 = arith.constant 0.000000e+00 : f32
    %111 = vector.broadcast %cst_123 : f32 to vector<128x8xf32>
    %112 = arith.maximumf %110, %111 : vector<128x8xf32>
    %113 = vector.shape_cast %112 : vector<128x8xf32> to vector<2x8x8x8xf32>
    %c0_124 = arith.constant 0 : index
    %c1_125 = arith.constant 1 : index
    %c1_126 = arith.constant 1 : index
    %c0_127 = arith.constant 0 : index
    %114 = vector.load %arg8[%c0_124, %c1_125, %c1_126, %c0_127] : memref<2x10x10x8xf32, #tpu.memory_space<vmem>>, vector<2x8x8x8xf32>
    tpu.vector_store %arg8[%c0_124, %c1_125, %c1_126, %c0_127], %113 {strides = array<i32>} : memref<2x10x10x8xf32, #tpu.memory_space<vmem>>, vector<2x8x8x8xf32>,
    %c0_128 = arith.constant 0 : index
    %c0_129 = arith.constant 0 : index
    %c0_130 = arith.constant 0 : index
    %c0_131 = arith.constant 0 : index
    %115 = vector.load %arg8[%c0_128, %c0_129, %c0_130, %c0_131] : memref<2x10x10x8xf32, #tpu.memory_space<vmem>>, vector<2x8x8x8xf32>
    %116 = vector.shape_cast %115 : vector<2x8x8x8xf32> to vector<128x8xf32>
    %117 = arith.truncf %116 : vector<128x8xf32> to vector<128x8xbf16>
    %c0_132 = arith.constant 0 : index
    %c0_133 = arith.constant 0 : index
    %c0_134 = arith.constant 0 : index
    %118 = vector.load %arg4[%c0_132, %c0_133, %c0_134] : memref<9x8x128xbf16, #tpu.memory_space<vmem>>, vector<1x8x128xbf16>
    %119 = vector.shape_cast %118 : vector<1x8x128xbf16> to vector<8x128xbf16>
    %cst_135 = arith.constant dense<0.000000e+00> : vector<128x128xf32>
    %120 = tpu.matmul %117, %119, %cst_135 {dimension_numbers = #tpu.dot_dimension_numbers<[1], [0], [0], [1], [0, 0, 1, 1], [], []>} : vector<128x8xbf16>, vector<8x128xbf16>, vector<128x128xf32> -> vector<128x128xf32>
    %c0_136 = arith.constant 0 : index
    %c0_137 = arith.constant 0 : index
    %c1_138 = arith.constant 1 : index
    %c0_139 = arith.constant 0 : index
    %121 = vector.load %arg8[%c0_136, %c0_137, %c1_138, %c0_139] : memref<2x10x10x8xf32, #tpu.memory_space<vmem>>, vector<2x8x8x8xf32>
    %122 = vector.shape_cast %121 : vector<2x8x8x8xf32> to vector<128x8xf32>
    %123 = arith.truncf %122 : vector<128x8xf32> to vector<128x8xbf16>
    %c1_140 = arith.constant 1 : index
    %c0_141 = arith.constant 0 : index
    %c0_142 = arith.constant 0 : index
    %124 = vector.load %arg4[%c1_140, %c0_141, %c0_142] : memref<9x8x128xbf16, #tpu.memory_space<vmem>>, vector<1x8x128xbf16>
    %125 = vector.shape_cast %124 : vector<1x8x128xbf16> to vector<8x128xbf16>
    %cst_143 = arith.constant dense<0.000000e+00> : vector<128x128xf32>
    %126 = tpu.matmul %123, %125, %cst_143 {dimension_numbers = #tpu.dot_dimension_numbers<[1], [0], [0], [1], [0, 0, 1, 1], [], []>} : vector<128x8xbf16>, vector<8x128xbf16>, vector<128x128xf32> -> vector<128x128xf32>
    %127 = arith.addf %120, %126 : vector<128x128xf32>
    %c0_144 = arith.constant 0 : index
    %c0_145 = arith.constant 0 : index
    %c2_146 = arith.constant 2 : index
    %c0_147 = arith.constant 0 : index
    %128 = vector.load %arg8[%c0_144, %c0_145, %c2_146, %c0_147] : memref<2x10x10x8xf32, #tpu.memory_space<vmem>>, vector<2x8x8x8xf32>
    %129 = vector.shape_cast %128 : vector<2x8x8x8xf32> to vector<128x8xf32>
    %130 = arith.truncf %129 : vector<128x8xf32> to vector<128x8xbf16>
    %c2_148 = arith.constant 2 : index
    %c0_149 = arith.constant 0 : index
    %c0_150 = arith.constant 0 : index
    %131 = vector.load %arg4[%c2_148, %c0_149, %c0_150] : memref<9x8x128xbf16, #tpu.memory_space<vmem>>, vector<1x8x128xbf16>
    %132 = vector.shape_cast %131 : vector<1x8x128xbf16> to vector<8x128xbf16>
    %cst_151 = arith.constant dense<0.000000e+00> : vector<128x128xf32>
    %133 = tpu.matmul %130, %132, %cst_151 {dimension_numbers = #tpu.dot_dimension_numbers<[1], [0], [0], [1], [0, 0, 1, 1], [], []>} : vector<128x8xbf16>, vector<8x128xbf16>, vector<128x128xf32> -> vector<128x128xf32>
    %134 = arith.addf %127, %133 : vector<128x128xf32>
    %c0_152 = arith.constant 0 : index
    %c1_153 = arith.constant 1 : index
    %c0_154 = arith.constant 0 : index
    %c0_155 = arith.constant 0 : index
    %135 = vector.load %arg8[%c0_152, %c1_153, %c0_154, %c0_155] : memref<2x10x10x8xf32, #tpu.memory_space<vmem>>, vector<2x8x8x8xf32>
    %136 = vector.shape_cast %135 : vector<2x8x8x8xf32> to vector<128x8xf32>
    %137 = arith.truncf %136 : vector<128x8xf32> to vector<128x8xbf16>
    %c3_156 = arith.constant 3 : index
    %c0_157 = arith.constant 0 : index
    %c0_158 = arith.constant 0 : index
    %138 = vector.load %arg4[%c3_156, %c0_157, %c0_158] : memref<9x8x128xbf16, #tpu.memory_space<vmem>>, vector<1x8x128xbf16>
    %139 = vector.shape_cast %138 : vector<1x8x128xbf16> to vector<8x128xbf16>
    %cst_159 = arith.constant dense<0.000000e+00> : vector<128x128xf32>
    %140 = tpu.matmul %137, %139, %cst_159 {dimension_numbers = #tpu.dot_dimension_numbers<[1], [0], [0], [1], [0, 0, 1, 1], [], []>} : vector<128x8xbf16>, vector<8x128xbf16>, vector<128x128xf32> -> vector<128x128xf32>
    %141 = arith.addf %134, %140 : vector<128x128xf32>
    %c0_160 = arith.constant 0 : index
    %c1_161 = arith.constant 1 : index
    %c1_162 = arith.constant 1 : index
    %c0_163 = arith.constant 0 : index
    %142 = vector.load %arg8[%c0_160, %c1_161, %c1_162, %c0_163] : memref<2x10x10x8xf32, #tpu.memory_space<vmem>>, vector<2x8x8x8xf32>
    %143 = vector.shape_cast %142 : vector<2x8x8x8xf32> to vector<128x8xf32>
    %144 = arith.truncf %143 : vector<128x8xf32> to vector<128x8xbf16>
    %c4_164 = arith.constant 4 : index
    %c0_165 = arith.constant 0 : index
    %c0_166 = arith.constant 0 : index
    %145 = vector.load %arg4[%c4_164, %c0_165, %c0_166] : memref<9x8x128xbf16, #tpu.memory_space<vmem>>, vector<1x8x128xbf16>
    %146 = vector.shape_cast %145 : vector<1x8x128xbf16> to vector<8x128xbf16>
    %cst_167 = arith.constant dense<0.000000e+00> : vector<128x128xf32>
    %147 = tpu.matmul %144, %146, %cst_167 {dimension_numbers = #tpu.dot_dimension_numbers<[1], [0], [0], [1], [0, 0, 1, 1], [], []>} : vector<128x8xbf16>, vector<8x128xbf16>, vector<128x128xf32> -> vector<128x128xf32>
    %148 = arith.addf %141, %147 : vector<128x128xf32>
    %c0_168 = arith.constant 0 : index
    %c1_169 = arith.constant 1 : index
    %c2_170 = arith.constant 2 : index
    %c0_171 = arith.constant 0 : index
    %149 = vector.load %arg8[%c0_168, %c1_169, %c2_170, %c0_171] : memref<2x10x10x8xf32, #tpu.memory_space<vmem>>, vector<2x8x8x8xf32>
    %150 = vector.shape_cast %149 : vector<2x8x8x8xf32> to vector<128x8xf32>
    %151 = arith.truncf %150 : vector<128x8xf32> to vector<128x8xbf16>
    %c5_172 = arith.constant 5 : index
    %c0_173 = arith.constant 0 : index
    %c0_174 = arith.constant 0 : index
    %152 = vector.load %arg4[%c5_172, %c0_173, %c0_174] : memref<9x8x128xbf16, #tpu.memory_space<vmem>>, vector<1x8x128xbf16>
    %153 = vector.shape_cast %152 : vector<1x8x128xbf16> to vector<8x128xbf16>
    %cst_175 = arith.constant dense<0.000000e+00> : vector<128x128xf32>
    %154 = tpu.matmul %151, %153, %cst_175 {dimension_numbers = #tpu.dot_dimension_numbers<[1], [0], [0], [1], [0, 0, 1, 1], [], []>} : vector<128x8xbf16>, vector<8x128xbf16>, vector<128x128xf32> -> vector<128x128xf32>
    %155 = arith.addf %148, %154 : vector<128x128xf32>
    %c0_176 = arith.constant 0 : index
    %c2_177 = arith.constant 2 : index
    %c0_178 = arith.constant 0 : index
    %c0_179 = arith.constant 0 : index
    %156 = vector.load %arg8[%c0_176, %c2_177, %c0_178, %c0_179] : memref<2x10x10x8xf32, #tpu.memory_space<vmem>>, vector<2x8x8x8xf32>
    %157 = vector.shape_cast %156 : vector<2x8x8x8xf32> to vector<128x8xf32>
    %158 = arith.truncf %157 : vector<128x8xf32> to vector<128x8xbf16>
    %c6_180 = arith.constant 6 : index
    %c0_181 = arith.constant 0 : index
    %c0_182 = arith.constant 0 : index
    %159 = vector.load %arg4[%c6_180, %c0_181, %c0_182] : memref<9x8x128xbf16, #tpu.memory_space<vmem>>, vector<1x8x128xbf16>
    %160 = vector.shape_cast %159 : vector<1x8x128xbf16> to vector<8x128xbf16>
    %cst_183 = arith.constant dense<0.000000e+00> : vector<128x128xf32>
    %161 = tpu.matmul %158, %160, %cst_183 {dimension_numbers = #tpu.dot_dimension_numbers<[1], [0], [0], [1], [0, 0, 1, 1], [], []>} : vector<128x8xbf16>, vector<8x128xbf16>, vector<128x128xf32> -> vector<128x128xf32>
    %162 = arith.addf %155, %161 : vector<128x128xf32>
    %c0_184 = arith.constant 0 : index
    %c2_185 = arith.constant 2 : index
    %c1_186 = arith.constant 1 : index
    %c0_187 = arith.constant 0 : index
    %163 = vector.load %arg8[%c0_184, %c2_185, %c1_186, %c0_187] : memref<2x10x10x8xf32, #tpu.memory_space<vmem>>, vector<2x8x8x8xf32>
    %164 = vector.shape_cast %163 : vector<2x8x8x8xf32> to vector<128x8xf32>
    %165 = arith.truncf %164 : vector<128x8xf32> to vector<128x8xbf16>
    %c7_188 = arith.constant 7 : index
    %c0_189 = arith.constant 0 : index
    %c0_190 = arith.constant 0 : index
    %166 = vector.load %arg4[%c7_188, %c0_189, %c0_190] : memref<9x8x128xbf16, #tpu.memory_space<vmem>>, vector<1x8x128xbf16>
    %167 = vector.shape_cast %166 : vector<1x8x128xbf16> to vector<8x128xbf16>
    %cst_191 = arith.constant dense<0.000000e+00> : vector<128x128xf32>
    %168 = tpu.matmul %165, %167, %cst_191 {dimension_numbers = #tpu.dot_dimension_numbers<[1], [0], [0], [1], [0, 0, 1, 1], [], []>} : vector<128x8xbf16>, vector<8x128xbf16>, vector<128x128xf32> -> vector<128x128xf32>
    %169 = arith.addf %162, %168 : vector<128x128xf32>
    %c0_192 = arith.constant 0 : index
    %c2_193 = arith.constant 2 : index
    %c2_194 = arith.constant 2 : index
    %c0_195 = arith.constant 0 : index
    %170 = vector.load %arg8[%c0_192, %c2_193, %c2_194, %c0_195] : memref<2x10x10x8xf32, #tpu.memory_space<vmem>>, vector<2x8x8x8xf32>
    %171 = vector.shape_cast %170 : vector<2x8x8x8xf32> to vector<128x8xf32>
    %172 = arith.truncf %171 : vector<128x8xf32> to vector<128x8xbf16>
    %c8_196 = arith.constant 8 : index
    %c0_197 = arith.constant 0 : index
    %c0_198 = arith.constant 0 : index
    %173 = vector.load %arg4[%c8_196, %c0_197, %c0_198] : memref<9x8x128xbf16, #tpu.memory_space<vmem>>, vector<1x8x128xbf16>
    %174 = vector.shape_cast %173 : vector<1x8x128xbf16> to vector<8x128xbf16>
    %cst_199 = arith.constant dense<0.000000e+00> : vector<128x128xf32>
    %175 = tpu.matmul %172, %174, %cst_199 {dimension_numbers = #tpu.dot_dimension_numbers<[1], [0], [0], [1], [0, 0, 1, 1], [], []>} : vector<128x8xbf16>, vector<8x128xbf16>, vector<128x128xf32> -> vector<128x128xf32>
    %176 = arith.addf %169, %175 : vector<128x128xf32>
    %c0_200 = arith.constant 0 : index
    %c0_201 = arith.constant 0 : index
    %177 = vector.load %arg5[%c0_200, %c0_201] : memref<1x128xf32, #tpu.memory_space<vmem>>, vector<1x128xf32>
    %178 = vector.broadcast %177 : vector<1x128xf32> to vector<128x128xf32>
    %179 = arith.addf %176, %178 : vector<128x128xf32>
    %cst_202 = arith.constant 0.000000e+00 : f32
    %180 = vector.broadcast %cst_202 : f32 to vector<128x128xf32>
    %181 = arith.maximumf %179, %180 : vector<128x128xf32>
    %182 = vector.shape_cast %181 : vector<128x128xf32> to vector<2x64x128xf32>
    %c0_203 = arith.constant 0 : index
    %c0_204 = arith.constant 0 : index
    %c0_205 = arith.constant 0 : index
    %183 = vector.load %arg6[%c0_203, %c0_204, %c0_205] : memref<2x64x128xf32, #tpu.memory_space<vmem>>, vector<2x64x128xf32>
    tpu.vector_store %arg6[%c0_203, %c0_204, %c0_205], %182 {strides = array<i32>} : memref<2x64x128xf32, #tpu.memory_space<vmem>>, vector<2x64x128xf32>,
    return
  }
  func.func @transform_0(%arg0: i32) -> (i32, i32, i32, i32) {
    %c0_i32 = arith.constant 0 : i32
    %c0_i32_0 = arith.constant 0 : i32
    %c0_i32_1 = arith.constant 0 : i32
    %c0_i32_2 = arith.constant 0 : i32
    return %c0_i32, %arg0, %c0_i32_0, %c0_i32_1 : i32, i32, i32, i32
  }
  func.func @transform_1(%arg0: i32) -> (i32, i32, i32) {
    %c0_i32 = arith.constant 0 : i32
    %c0_i32_0 = arith.constant 0 : i32
    %c0_i32_1 = arith.constant 0 : i32
    %c0_i32_2 = arith.constant 0 : i32
    return %c0_i32, %c0_i32_0, %c0_i32_1 : i32, i32, i32
  }
  func.func @transform_2(%arg0: i32) -> (i32, i32) {
    %c0_i32 = arith.constant 0 : i32
    %c0_i32_0 = arith.constant 0 : i32
    %c0_i32_1 = arith.constant 0 : i32
    return %c0_i32, %c0_i32_0 : i32, i32
  }
  func.func @transform_3(%arg0: i32) -> (i32, i32, i32) {
    %c0_i32 = arith.constant 0 : i32
    %c0_i32_0 = arith.constant 0 : i32
    %c0_i32_1 = arith.constant 0 : i32
    %c0_i32_2 = arith.constant 0 : i32
    return %c0_i32, %c0_i32_0, %c0_i32_1 : i32, i32, i32
  }
  func.func @transform_4(%arg0: i32) -> (i32, i32) {
    %c0_i32 = arith.constant 0 : i32
    %c0_i32_0 = arith.constant 0 : i32
    %c0_i32_1 = arith.constant 0 : i32
    return %c0_i32, %c0_i32_0 : i32, i32
  }
  func.func @transform_5(%arg0: i32) -> (i32, i32, i32) {
    %c0_i32 = arith.constant 0 : i32
    %c0_i32_0 = arith.constant 0 : i32
    %c0_i32_1 = arith.constant 0 : i32
    return %arg0, %c0_i32, %c0_i32_0 : i32, i32, i32
  }
}

</mosaic_0001>

<llo_original>
// kernel: down_forward.1
$region0: #{down_forward.1}
  #allocation0 [shape = 'u32[]', space=smem, size = 0x4, offset = 0x4, fixed_abs, tag = 'smem constant byte address 0x4 - core index']
  #allocation1 [shape = 'u32[144,128]{1,0:T(1,128)}', space=vmem, size = 0x12000, scoped, tag = 'internal scratch']
  #allocation2 [shape = 'f32[2,10,10,8]{3,2,1,0:T(8,128)}', space=vmem, size = 0x28000, scoped, tag = 'scratch operand']
  #allocation3 [shape = 'f32[2,10,10,8]{3,2,1,0:T(8,128)}', space=vmem, size = 0x28000, scoped, tag = 'scratch operand']
  %s0 = inlined_call_operand.vmem [shape: f32[4,18,9,8], index: 0, kind: input, shape index: {}]
  %s1 = inlined_call_operand.vmem [shape: bf16[9,8,8], index: 1, kind: input, shape index: {}]
  %s2 = inlined_call_operand.vmem [shape: f32[1,8], index: 2, kind: input, shape index: {}]
  %s3 = inlined_call_operand.vmem [shape: bf16[9,8,128], index: 3, kind: input, shape index: {}]
  %s4 = inlined_call_operand.vmem [shape: f32[1,128], index: 4, kind: input, shape index: {}]
  %s5 = inlined_call_operand.vmem [shape: f32[2,64,128], index: 5, kind: output, shape index: {}]
  %s6 = sld [smem:[#allocation0]]
  $region30: #{down_forward.1} parent=0
    _
  %s8 = ssub.s32 1, %s6
  %s9 = scalar_select 0, %s8, %s6
  // Predicated region
  $region2: #{down_forward.1} parent=0 // pred_check
    _
  $region3: #{down_forward.1} parent=0 // pred_check_branch
    %11 = sbr.rel (0) target = $region5
  $region4: #{down_forward.1} parent=0 // pred_region
    _
  $region5: #{down_forward.1} parent=0 // pred_fallthru
    _
  // Predicated region
  $region6: #{down_forward.1} parent=0 // pred_check
    _
  $region7: #{down_forward.1} parent=0 // pred_check_branch
    %13 = sbr.rel (0) target = $region9
  $region8: #{down_forward.1} parent=0 // pred_region
    _
  $region9: #{down_forward.1} parent=0 // pred_fallthru
    _
  // Predicated region
  $region10: #{down_forward.1} parent=0 // pred_check
    _
  $region11: #{down_forward.1} parent=0 // pred_check_branch
    %15 = sbr.rel (0) target = $region13
  $region12: #{down_forward.1} parent=0 // pred_region
    _
  $region13: #{down_forward.1} parent=0 // pred_fallthru
    _
  // Predicated region
  $region14: #{down_forward.1} parent=0 // pred_check
    _
  $region15: #{down_forward.1} parent=0 // pred_check_branch
    %17 = sbr.rel (0) target = $region17
  $region16: #{down_forward.1} parent=0 // pred_region
    _
  $region17: #{down_forward.1} parent=0 // pred_fallthru
    _
  // Predicated region
  $region18: #{down_forward.1} parent=0 // pred_check
    _
  $region19: #{down_forward.1} parent=0 // pred_check_branch
    %19 = sbr.rel (0) target = $region21
  $region20: #{down_forward.1} parent=0 // pred_region
    _
  $region21: #{down_forward.1} parent=0 // pred_fallthru
    _
  %vm21 = vcmask 64512
  %22 = vst.msk [vmem:[#allocation2] sm:$0xff] %vm21, 0.0
  %vm23 = vcmask 58368
  %24 = vst.msk [vmem:[#allocation2 + $0x8] sm:$0x3] %vm23, 0.0
  %25 = vst.msk [vmem:[#allocation2 + $0xa0] sm:$0xff] %vm21, 0.0
  %26 = vst.msk [vmem:[#allocation2 + $0xa8] sm:$0x3] %vm23, 0.0
  %s27 = scalar_lea.vmem [#allocation2], 144
  %28 = vst.msk [vmem:[%s27] sm:$0xff] %vm21, 0.0
  %29 = vst.msk [vmem:[%s27 + $0x8] sm:$0x3] %vm23, 0.0
  %30 = vst.msk [vmem:[%s27 + $0xa0] sm:$0xff] %vm21, 0.0
  %31 = vst.msk [vmem:[%s27 + $0xa8] sm:$0x3] %vm23, 0.0
  %vm32 = vcmask 57344
  %33 = vst.msk [vmem:[#allocation2] sm:$0x1] %vm32, 0.0
  %34 = vst.msk [vmem:[#allocation2 + $0x10] sm:$0x1] %vm32, 0.0
  %35 = vst.msk [vmem:[#allocation2 + $0x20] sm:$0x1] %vm32, 0.0
  %36 = vst.msk [vmem:[#allocation2 + $0x30] sm:$0x1] %vm32, 0.0
  %37 = vst.msk [vmem:[#allocation2 + $0x40] sm:$0x1] %vm32, 0.0
  %38 = vst.msk [vmem:[#allocation2 + $0x50] sm:$0x1] %vm32, 0.0
  %39 = vst.msk [vmem:[#allocation2 + $0x60] sm:$0x1] %vm32, 0.0
  %40 = vst.msk [vmem:[#allocation2 + $0x70] sm:$0x1] %vm32, 0.0
  %41 = vst.msk [vmem:[#allocation2 + $0x80] sm:$0x1] %vm32, 0.0
  %42 = vst.msk [vmem:[#allocation2 + $0x90] sm:$0x1] %vm32, 0.0
  %43 = vst.msk [vmem:[#allocation2 + $0xa0] sm:$0x1] %vm32, 0.0
  %44 = vst.msk [vmem:[#allocation2 + $0xb0] sm:$0x1] %vm32, 0.0
  %45 = vst.msk [vmem:[#allocation2 + $0xc0] sm:$0x1] %vm32, 0.0
  %46 = vst.msk [vmem:[#allocation2 + $0xd0] sm:$0x1] %vm32, 0.0
  %47 = vst.msk [vmem:[#allocation2 + $0xe0] sm:$0x1] %vm32, 0.0
  %48 = vst.msk [vmem:[#allocation2 + $0xf0] sm:$0x1] %vm32, 0.0
  %49 = vst.msk [vmem:[#allocation2 + $0x100] sm:$0x1] %vm32, 0.0
  %50 = vst.msk [vmem:[#allocation2 + $0x110] sm:$0x1] %vm32, 0.0
  %51 = vst.msk [vmem:[#allocation2 + $0x120] sm:$0x1] %vm32, 0.0
  %52 = vst.msk [vmem:[#allocation2 + $0x130] sm:$0x1] %vm32, 0.0
  %53 = vst.msk [vmem:[#allocation2 + $0x9] sm:$0x1] %vm32, 0.0
  %54 = vst.msk [vmem:[#allocation2 + $0x19] sm:$0x1] %vm32, 0.0
  %55 = vst.msk [vmem:[#allocation2 + $0x29] sm:$0x1] %vm32, 0.0
  %56 = vst.msk [vmem:[#allocation2 + $0x39] sm:$0x1] %vm32, 0.0
  %57 = vst.msk [vmem:[#allocation2 + $0x49] sm:$0x1] %vm32, 0.0
  %58 = vst.msk [vmem:[#allocation2 + $0x59] sm:$0x1] %vm32, 0.0
  %59 = vst.msk [vmem:[#allocation2 + $0x69] sm:$0x1] %vm32, 0.0
  %60 = vst.msk [vmem:[#allocation2 + $0x79] sm:$0x1] %vm32, 0.0
  %61 = vst.msk [vmem:[#allocation2 + $0x89] sm:$0x1] %vm32, 0.0
  %62 = vst.msk [vmem:[#allocation2 + $0x99] sm:$0x1] %vm32, 0.0
  %63 = vst.msk [vmem:[#allocation2 + $0xa9] sm:$0x1] %vm32, 0.0
  %64 = vst.msk [vmem:[#allocation2 + $0xb9] sm:$0x1] %vm32, 0.0
  %65 = vst.msk [vmem:[#allocation2 + $0xc9] sm:$0x1] %vm32, 0.0
  %66 = vst.msk [vmem:[#allocation2 + $0xd9] sm:$0x1] %vm32, 0.0
  %67 = vst.msk [vmem:[#allocation2 + $0xe9] sm:$0x1] %vm32, 0.0
  %68 = vst.msk [vmem:[#allocation2 + $0xf9] sm:$0x1] %vm32, 0.0
  %69 = vst.msk [vmem:[#allocation2 + $0x109] sm:$0x1] %vm32, 0.0
  %70 = vst.msk [vmem:[#allocation2 + $0x119] sm:$0x1] %vm32, 0.0
  %71 = vst.msk [vmem:[#allocation2 + $0x129] sm:$0x1] %vm32, 0.0
  %72 = vst.msk [vmem:[#allocation2 + $0x139] sm:$0x1] %vm32, 0.0
  %73 = vst.msk [vmem:[#allocation3] sm:$0xff] %vm21, 0.0
  %74 = vst.msk [vmem:[#allocation3 + $0x8] sm:$0x3] %vm23, 0.0
  %75 = vst.msk [vmem:[#allocation3 + $0xa0] sm:$0xff] %vm21, 0.0
  %76 = vst.msk [vmem:[#allocation3 + $0xa8] sm:$0x3] %vm23, 0.0
  %s77 = scalar_lea.vmem [#allocation3], 144
  %78 = vst.msk [vmem:[%s77] sm:$0xff] %vm21, 0.0
  %79 = vst.msk [vmem:[%s77 + $0x8] sm:$0x3] %vm23, 0.0
  %80 = vst.msk [vmem:[%s77 + $0xa0] sm:$0xff] %vm21, 0.0
  %81 = vst.msk [vmem:[%s77 + $0xa8] sm:$0x3] %vm23, 0.0
  %82 = vst.msk [vmem:[#allocation3] sm:$0x1] %vm32, 0.0
  %83 = vst.msk [vmem:[#allocation3 + $0x10] sm:$0x1] %vm32, 0.0
  %84 = vst.msk [vmem:[#allocation3 + $0x20] sm:$0x1] %vm32, 0.0
  %85 = vst.msk [vmem:[#allocation3 + $0x30] sm:$0x1] %vm32, 0.0
  %86 = vst.msk [vmem:[#allocation3 + $0x40] sm:$0x1] %vm32, 0.0
  %87 = vst.msk [vmem:[#allocation3 + $0x50] sm:$0x1] %vm32, 0.0
  %88 = vst.msk [vmem:[#allocation3 + $0x60] sm:$0x1] %vm32, 0.0
  %89 = vst.msk [vmem:[#allocation3 + $0x70] sm:$0x1] %vm32, 0.0
  %90 = vst.msk [vmem:[#allocation3 + $0x80] sm:$0x1] %vm32, 0.0
  %91 = vst.msk [vmem:[#allocation3 + $0x90] sm:$0x1] %vm32, 0.0
  %92 = vst.msk [vmem:[#allocation3 + $0xa0] sm:$0x1] %vm32, 0.0
  %93 = vst.msk [vmem:[#allocation3 + $0xb0] sm:$0x1] %vm32, 0.0
  %94 = vst.msk [vmem:[#allocation3 + $0xc0] sm:$0x1] %vm32, 0.0
  %95 = vst.msk [vmem:[#allocation3 + $0xd0] sm:$0x1] %vm32, 0.0
  %96 = vst.msk [vmem:[#allocation3 + $0xe0] sm:$0x1] %vm32, 0.0
  %97 = vst.msk [vmem:[#allocation3 + $0xf0] sm:$0x1] %vm32, 0.0
  %98 = vst.msk [vmem:[#allocation3 + $0x100] sm:$0x1] %vm32, 0.0
  %99 = vst.msk [vmem:[#allocation3 + $0x110] sm:$0x1] %vm32, 0.0
  %100 = vst.msk [vmem:[#allocation3 + $0x120] sm:$0x1] %vm32, 0.0
  %101 = vst.msk [vmem:[#allocation3 + $0x130] sm:$0x1] %vm32, 0.0
  %102 = vst.msk [vmem:[#allocation3 + $0x9] sm:$0x1] %vm32, 0.0
  %103 = vst.msk [vmem:[#allocation3 + $0x19] sm:$0x1] %vm32, 0.0
  %104 = vst.msk [vmem:[#allocation3 + $0x29] sm:$0x1] %vm32, 0.0
  %105 = vst.msk [vmem:[#allocation3 + $0x39] sm:$0x1] %vm32, 0.0
  %106 = vst.msk [vmem:[#allocation3 + $0x49] sm:$0x1] %vm32, 0.0
  %107 = vst.msk [vmem:[#allocation3 + $0x59] sm:$0x1] %vm32, 0.0
  %108 = vst.msk [vmem:[#allocation3 + $0x69] sm:$0x1] %vm32, 0.0
  %109 = vst.msk [vmem:[#allocation3 + $0x79] sm:$0x1] %vm32, 0.0
  %110 = vst.msk [vmem:[#allocation3 + $0x89] sm:$0x1] %vm32, 0.0
  %111 = vst.msk [vmem:[#allocation3 + $0x99] sm:$0x1] %vm32, 0.0
  %112 = vst.msk [vmem:[#allocation3 + $0xa9] sm:$0x1] %vm32, 0.0
  %113 = vst.msk [vmem:[#allocation3 + $0xb9] sm:$0x1] %vm32, 0.0
  %114 = vst.msk [vmem:[#allocation3 + $0xc9] sm:$0x1] %vm32, 0.0
  %115 = vst.msk [vmem:[#allocation3 + $0xd9] sm:$0x1] %vm32, 0.0
  %116 = vst.msk [vmem:[#allocation3 + $0xe9] sm:$0x1] %vm32, 0.0
  %117 = vst.msk [vmem:[#allocation3 + $0xf9] sm:$0x1] %vm32, 0.0
  %118 = vst.msk [vmem:[#allocation3 + $0x109] sm:$0x1] %vm32, 0.0
  %119 = vst.msk [vmem:[#allocation3 + $0x119] sm:$0x1] %vm32, 0.0
  %120 = vst.msk [vmem:[#allocation3 + $0x129] sm:$0x1] %vm32, 0.0
  %121 = vst.msk [vmem:[#allocation3 + $0x139] sm:$0x1] %vm32, 0.0
  %v122 = vld [vmem:[%s0] sm:$0xff]
  %v123 = vld [vmem:[%s0 + $0x8] sm:$0x1]
  %v124 = vld [vmem:[%s0 + $0x10] sm:$0xff]
  %v125 = vld [vmem:[%s0 + $0x18] sm:$0x1]
  %v126 = vld [vmem:[%s0 + $0x20] sm:$0xff]
  %v127 = vld [vmem:[%s0 + $0x28] sm:$0x1]
  %v128 = vld [vmem:[%s0 + $0x30] sm:$0xff]
  %v129 = vld [vmem:[%s0 + $0x38] sm:$0x1]
  %v130 = vld [vmem:[%s0 + $0x40] sm:$0xff]
  %v131 = vld [vmem:[%s0 + $0x48] sm:$0x1]
  %v132 = vld [vmem:[%s0 + $0x50] sm:$0xff]
  %v133 = vld [vmem:[%s0 + $0x58] sm:$0x1]
  %v134 = vld [vmem:[%s0 + $0x60] sm:$0xff]
  %v135 = vld [vmem:[%s0 + $0x68] sm:$0x1]
  %v136 = vld [vmem:[%s0 + $0x70] sm:$0xff]
  %v137 = vld [vmem:[%s0 + $0x78] sm:$0x1]
  %v138 = vld [vmem:[%s0 + $0x80] sm:$0xff]
  %v139 = vld [vmem:[%s0 + $0x88] sm:$0x1]
  %v140 = vld [vmem:[%s0 + $0x90] sm:$0xff]
  %v141 = vld [vmem:[%s0 + $0x98] sm:$0x1]
  %v142 = vld [vmem:[%s0 + $0xa0] sm:$0xff]
  %v143 = vld [vmem:[%s0 + $0xa8] sm:$0x1]
  %v144 = vld [vmem:[%s0 + $0xb0] sm:$0xff]
  %v145 = vld [vmem:[%s0 + $0xb8] sm:$0x1]
  %v146 = vld [vmem:[%s0 + $0xc0] sm:$0xff]
  %v147 = vld [vmem:[%s0 + $0xc8] sm:$0x1]
  %v148 = vld [vmem:[%s0 + $0xd0] sm:$0xff]
  %v149 = vld [vmem:[%s0 + $0xd8] sm:$0x1]
  %v150 = vld [vmem:[%s0 + $0xe0] sm:$0xff]
  %v151 = vld [vmem:[%s0 + $0xe8] sm:$0x1]
  %v152 = vld [vmem:[%s0 + $0xf0] sm:$0xff]
  %v153 = vld [vmem:[%s0 + $0xf8] sm:$0x1]
  %v154 = vld [vmem:[%s0 + $0x100] sm:$0xff]
  %v155 = vld [vmem:[%s0 + $0x108] sm:$0x1]
  %v156 = vld [vmem:[%s0 + $0x110] sm:$0xff]
  %v157 = vld [vmem:[%s0 + $0x118] sm:$0x1]
  %s158 = scalar_lea.vmem %s0, 288
  %v159 = vld [vmem:[%s158] sm:$0xff]
  %v160 = vld [vmem:[%s158 + $0x10] sm:$0xff]
  %v161 = vld [vmem:[%s158 + $0x20] sm:$0xff]
  %v162 = vld [vmem:[%s158 + $0x30] sm:$0xff]
  %v163 = vld [vmem:[%s158 + $0x40] sm:$0xff]
  %v164 = vld [vmem:[%s158 + $0x50] sm:$0xff]
  %v165 = vld [vmem:[%s158 + $0x60] sm:$0xff]
  %v166 = vld [vmem:[%s158 + $0x70] sm:$0xff]
  %v167 = vld [vmem:[%s158 + $0x80] sm:$0xff]
  %v168 = vld [vmem:[%s158 + $0x90] sm:$0xff]
  %v169 = vld [vmem:[%s158 + $0xa0] sm:$0xff]
  %v170 = vld [vmem:[%s158 + $0xb0] sm:$0xff]
  %v171 = vld [vmem:[%s158 + $0xc0] sm:$0xff]
  %v172 = vld [vmem:[%s158 + $0xd0] sm:$0xff]
  %v173 = vld [vmem:[%s158 + $0xe0] sm:$0xff]
  %v174 = vld [vmem:[%s158 + $0xf0] sm:$0xff]
  %v175 = vld [vmem:[%s158 + $0x100] sm:$0xff]
  %v176 = vld [vmem:[%s158 + $0x110] sm:$0xff]
  %s177 = scalar_lea.vmem %s0, 576
  %v178 = vld [vmem:[%s177] sm:$0xff]
  %v179 = vld [vmem:[%s177 + $0x8] sm:$0x1]
  %v180 = vld [vmem:[%s177 + $0x10] sm:$0xff]
  %v181 = vld [vmem:[%s177 + $0x18] sm:$0x1]
  %v182 = vld [vmem:[%s177 + $0x20] sm:$0xff]
  %v183 = vld [vmem:[%s177 + $0x28] sm:$0x1]
  %v184 = vld [vmem:[%s177 + $0x30] sm:$0xff]
  %v185 = vld [vmem:[%s177 + $0x38] sm:$0x1]
  %v186 = vld [vmem:[%s177 + $0x40] sm:$0xff]
  %v187 = vld [vmem:[%s177 + $0x48] sm:$0x1]
  %v188 = vld [vmem:[%s177 + $0x50] sm:$0xff]
  %v189 = vld [vmem:[%s177 + $0x58] sm:$0x1]
  %v190 = vld [vmem:[%s177 + $0x60] sm:$0xff]
  %v191 = vld [vmem:[%s177 + $0x68] sm:$0x1]
  %v192 = vld [vmem:[%s177 + $0x70] sm:$0xff]
  %v193 = vld [vmem:[%s177 + $0x78] sm:$0x1]
  %v194 = vld [vmem:[%s177 + $0x90] sm:$0xff]
  %v195 = vld [vmem:[%s177 + $0x98] sm:$0x1]
  %v196 = vld [vmem:[%s177 + $0xa0] sm:$0xff]
  %v197 = vld [vmem:[%s177 + $0xa8] sm:$0x1]
  %v198 = vld [vmem:[%s177 + $0xb0] sm:$0xff]
  %v199 = vld [vmem:[%s177 + $0xb8] sm:$0x1]
  %v200 = vld [vmem:[%s177 + $0xc0] sm:$0xff]
  %v201 = vld [vmem:[%s177 + $0xc8] sm:$0x1]
  %v202 = vld [vmem:[%s177 + $0xd0] sm:$0xff]
  %v203 = vld [vmem:[%s177 + $0xd8] sm:$0x1]
  %v204 = vld [vmem:[%s177 + $0xe0] sm:$0xff]
  %v205 = vld [vmem:[%s177 + $0xe8] sm:$0x1]
  %v206 = vld [vmem:[%s177 + $0xf0] sm:$0xff]
  %v207 = vld [vmem:[%s177 + $0xf8] sm:$0x1]
  %v208 = vld [vmem:[%s177 + $0x100] sm:$0xff]
  %v209 = vld [vmem:[%s177 + $0x108] sm:$0x1]
  %s210 = scalar_lea.vmem %s0, 864
  %v211 = vld [vmem:[%s210] sm:$0xff]
  %v212 = vld [vmem:[%s210 + $0x10] sm:$0xff]
  %v213 = vld [vmem:[%s210 + $0x20] sm:$0xff]
  %v214 = vld [vmem:[%s210 + $0x30] sm:$0xff]
  %v215 = vld [vmem:[%s210 + $0x40] sm:$0xff]
  %v216 = vld [vmem:[%s210 + $0x50] sm:$0xff]
  %v217 = vld [vmem:[%s210 + $0x60] sm:$0xff]
  %v218 = vld [vmem:[%s210 + $0x70] sm:$0xff]
  %v219 = vld [vmem:[%s210 + $0x90] sm:$0xff]
  %v220 = vld [vmem:[%s210 + $0xa0] sm:$0xff]
  %v221 = vld [vmem:[%s210 + $0xb0] sm:$0xff]
  %v222 = vld [vmem:[%s210 + $0xc0] sm:$0xff]
  %v223 = vld [vmem:[%s210 + $0xd0] sm:$0xff]
  %v224 = vld [vmem:[%s210 + $0xe0] sm:$0xff]
  %v225 = vld [vmem:[%s210 + $0xf0] sm:$0xff]
  %v226 = vld [vmem:[%s210 + $0x100] sm:$0xff]
  %vm263 = vcmask 1046528
  %v264 = vrot.slane %v122, 1
  %v265 = vrot.slane %v123, 1
  %v266 = vsel %vm263, %v264, %v265
  %v267 = vrot.slane %v124, 1
  %v268 = vrot.slane %v125, 1
  %v269 = vsel %vm263, %v267, %v268
  %v270 = vrot.slane %v126, 1
  %v271 = vrot.slane %v127, 1
  %v272 = vsel %vm263, %v270, %v271
  %v273 = vrot.slane %v128, 1
  %v274 = vrot.slane %v129, 1
  %v275 = vsel %vm263, %v273, %v274
  %v276 = vrot.slane %v130, 1
  %v277 = vrot.slane %v131, 1
  %v278 = vsel %vm263, %v276, %v277
  %v279 = vrot.slane %v132, 1
  %v280 = vrot.slane %v133, 1
  %v281 = vsel %vm263, %v279, %v280
  %v282 = vrot.slane %v134, 1
  %v283 = vrot.slane %v135, 1
  %v284 = vsel %vm263, %v282, %v283
  %v285 = vrot.slane %v136, 1
  %v286 = vrot.slane %v137, 1
  %v287 = vsel %vm263, %v285, %v286
  %v288 = vrot.slane %v138, 1
  %v289 = vrot.slane %v139, 1
  %v290 = vsel %vm263, %v288, %v289
  %v291 = vrot.slane %v140, 1
  %v292 = vrot.slane %v141, 1
  %v293 = vsel %vm263, %v291, %v292
  %v294 = vrot.slane %v142, 1
  %v295 = vrot.slane %v143, 1
  %v296 = vsel %vm263, %v294, %v295
  %v297 = vrot.slane %v144, 1
  %v298 = vrot.slane %v145, 1
  %v299 = vsel %vm263, %v297, %v298
  %v300 = vrot.slane %v146, 1
  %v301 = vrot.slane %v147, 1
  %v302 = vsel %vm263, %v300, %v301
  %v303 = vrot.slane %v148, 1
  %v304 = vrot.slane %v149, 1
  %v305 = vsel %vm263, %v303, %v304
  %v306 = vrot.slane %v150, 1
  %v307 = vrot.slane %v151, 1
  %v308 = vsel %vm263, %v306, %v307
  %v309 = vrot.slane %v152, 1
  %v310 = vrot.slane %v153, 1
  %v311 = vsel %vm263, %v309, %v310
  %v312 = vrot.slane %v154, 1
  %v313 = vrot.slane %v155, 1
  %v314 = vsel %vm263, %v312, %v313
  %v315 = vrot.slane %v156, 1
  %v316 = vrot.slane %v157, 1
  %v317 = vsel %vm263, %v315, %v316
  %v336 = vmax.f32 %v122, %v266
  %v337 = vmax.f32 %v124, %v269
  %v338 = vmax.f32 %v126, %v272
  %v339 = vmax.f32 %v128, %v275
  %v340 = vmax.f32 %v130, %v278
  %v341 = vmax.f32 %v132, %v281
  %v342 = vmax.f32 %v134, %v284
  %v343 = vmax.f32 %v136, %v287
  %v344 = vmax.f32 %v138, %v290
  %v345 = vmax.f32 %v140, %v293
  %v346 = vmax.f32 %v142, %v296
  %v347 = vmax.f32 %v144, %v299
  %v348 = vmax.f32 %v146, %v302
  %v349 = vmax.f32 %v148, %v305
  %v350 = vmax.f32 %v150, %v308
  %v351 = vmax.f32 %v152, %v311
  %v352 = vmax.f32 %v154, %v314
  %v353 = vmax.f32 %v156, %v317
  %v386 = vrot.slane %v178, 1
  %v387 = vrot.slane %v179, 1
  %v388 = vsel %vm263, %v386, %v387
  %v389 = vrot.slane %v180, 1
  %v390 = vrot.slane %v181, 1
  %v391 = vsel %vm263, %v389, %v390
  %v392 = vrot.slane %v182, 1
  %v393 = vrot.slane %v183, 1
  %v394 = vsel %vm263, %v392, %v393
  %v395 = vrot.slane %v184, 1
  %v396 = vrot.slane %v185, 1
  %v397 = vsel %vm263, %v395, %v396
  %v398 = vrot.slane %v186, 1
  %v399 = vrot.slane %v187, 1
  %v400 = vsel %vm263, %v398, %v399
  %v401 = vrot.slane %v188, 1
  %v402 = vrot.slane %v189, 1
  %v403 = vsel %vm263, %v401, %v402
  %v404 = vrot.slane %v190, 1
  %v405 = vrot.slane %v191, 1
  %v406 = vsel %vm263, %v404, %v405
  %v407 = vrot.slane %v192, 1
  %v408 = vrot.slane %v193, 1
  %v409 = vsel %vm263, %v407, %v408
  %v410 = vrot.slane %v194, 1
  %v411 = vrot.slane %v195, 1
  %v412 = vsel %vm263, %v410, %v411
  %v413 = vrot.slane %v196, 1
  %v414 = vrot.slane %v197, 1
  %v415 = vsel %vm263, %v413, %v414
  %v416 = vrot.slane %v198, 1
  %v417 = vrot.slane %v199, 1
  %v418 = vsel %vm263, %v416, %v417
  %v419 = vrot.slane %v200, 1
  %v420 = vrot.slane %v201, 1
  %v421 = vsel %vm263, %v419, %v420
  %v422 = vrot.slane %v202, 1
  %v423 = vrot.slane %v203, 1
  %v424 = vsel %vm263, %v422, %v423
  %v425 = vrot.slane %v204, 1
  %v426 = vrot.slane %v205, 1
  %v427 = vsel %vm263, %v425, %v426
  %v428 = vrot.slane %v206, 1
  %v429 = vrot.slane %v207, 1
  %v430 = vsel %vm263, %v428, %v429
  %v431 = vrot.slane %v208, 1
  %v432 = vrot.slane %v209, 1
  %v433 = vsel %vm263, %v431, %v432
  %v450 = vmax.f32 %v178, %v388
  %v451 = vmax.f32 %v180, %v391
  %v452 = vmax.f32 %v182, %v394
  %v453 = vmax.f32 %v184, %v397
  %v454 = vmax.f32 %v186, %v400
  %v455 = vmax.f32 %v188, %v403
  %v456 = vmax.f32 %v190, %v406
  %v457 = vmax.f32 %v192, %v409
  %v458 = vmax.f32 %v194, %v412
  %v459 = vmax.f32 %v196, %v415
  %v460 = vmax.f32 %v198, %v418
  %v461 = vmax.f32 %v200, %v421
  %v462 = vmax.f32 %v202, %v424
  %v463 = vmax.f32 %v204, %v427
  %v464 = vmax.f32 %v206, %v430
  %v465 = vmax.f32 %v208, %v433
  %v466 = vmax.f32 %v336, %v337
  %v467 = vmax.f32 %v337, %v338
  %v468 = vmax.f32 %v338, %v339
  %v469 = vmax.f32 %v339, %v340
  %v470 = vmax.f32 %v340, %v341
  %v471 = vmax.f32 %v341, %v342
  %v472 = vmax.f32 %v342, %v343
  %v473 = vmax.f32 %v343, %v344
  %v474 = vmax.f32 %v345, %v346
  %v475 = vmax.f32 %v346, %v347
  %v476 = vmax.f32 %v347, %v348
  %v477 = vmax.f32 %v348, %v349
  %v478 = vmax.f32 %v349, %v350
  %v479 = vmax.f32 %v350, %v351
  %v480 = vmax.f32 %v351, %v352
  %v481 = vmax.f32 %v352, %v353
  %v482 = vmax.f32 %v159, %v160
  %v483 = vmax.f32 %v160, %v161
  %v484 = vmax.f32 %v161, %v162
  %v485 = vmax.f32 %v162, %v163
  %v486 = vmax.f32 %v163, %v164
  %v487 = vmax.f32 %v164, %v165
  %v488 = vmax.f32 %v165, %v166
  %v489 = vmax.f32 %v166, %v167
  %v490 = vmax.f32 %v168, %v169
  %v491 = vmax.f32 %v169, %v170
  %v492 = vmax.f32 %v170, %v171
  %v493 = vmax.f32 %v171, %v172
  %v494 = vmax.f32 %v172, %v173
  %v495 = vmax.f32 %v173, %v174
  %v496 = vmax.f32 %v174, %v175
  %v497 = vmax.f32 %v175, %v176
  %v498 = vmax.f32 %v466, %v482
  %v499 = vmax.f32 %v467, %v483
  %v500 = vmax.f32 %v468, %v484
  %v501 = vmax.f32 %v469, %v485
  %v502 = vmax.f32 %v470, %v486
  %v503 = vmax.f32 %v471, %v487
  %v504 = vmax.f32 %v472, %v488
  %v505 = vmax.f32 %v473, %v489
  %v506 = vmax.f32 %v474, %v490
  %v507 = vmax.f32 %v475, %v491
  %v508 = vmax.f32 %v476, %v492
  %v509 = vmax.f32 %v477, %v493
  %v510 = vmax.f32 %v478, %v494
  %v511 = vmax.f32 %v479, %v495
  %v512 = vmax.f32 %v480, %v496
  %v513 = vmax.f32 %v481, %v497
  %v514 = vmax.f32 %v450, %v211
  %v515 = vmax.f32 %v451, %v212
  %v516 = vmax.f32 %v452, %v213
  %v517 = vmax.f32 %v453, %v214
  %v518 = vmax.f32 %v454, %v215
  %v519 = vmax.f32 %v455, %v216
  %v520 = vmax.f32 %v456, %v217
  %v521 = vmax.f32 %v457, %v218
  %v522 = vmax.f32 %v458, %v219
  %v523 = vmax.f32 %v459, %v220
  %v524 = vmax.f32 %v460, %v221
  %v525 = vmax.f32 %v461, %v222
  %v526 = vmax.f32 %v462, %v223
  %v527 = vmax.f32 %v463, %v224
  %v528 = vmax.f32 %v464, %v225
  %v529 = vmax.f32 %v465, %v226
  %v530 = vmax.f32 %v498, %v514
  %v531 = vmax.f32 %v499, %v515
  %v532 = vmax.f32 %v500, %v516
  %v533 = vmax.f32 %v501, %v517
  %v534 = vmax.f32 %v502, %v518
  %v535 = vmax.f32 %v503, %v519
  %v536 = vmax.f32 %v504, %v520
  %v537 = vmax.f32 %v505, %v521
  %v538 = vmax.f32 %v506, %v522
  %v539 = vmax.f32 %v507, %v523
  %v540 = vmax.f32 %v508, %v524
  %v541 = vmax.f32 %v509, %v525
  %v542 = vmax.f32 %v510, %v526
  %v543 = vmax.f32 %v511, %v527
  %v544 = vmax.f32 %v512, %v528
  %v545 = vmax.f32 %v513, %v529
  %s546 = scalar_lea.vmem [#allocation2], 16
  %547 = vst.msk [vmem:[%s546 + $0x1] sm:$0xff] %vm21, %v530
  %548 = vst.msk [vmem:[%s546 + $0x11] sm:$0xff] %vm21, %v531
  %549 = vst.msk [vmem:[%s546 + $0x21] sm:$0xff] %vm21, %v532
  %550 = vst.msk [vmem:[%s546 + $0x31] sm:$0xff] %vm21, %v533
  %551 = vst.msk [vmem:[%s546 + $0x41] sm:$0xff] %vm21, %v534
  %552 = vst.msk [vmem:[%s546 + $0x51] sm:$0xff] %vm21, %v535
  %553 = vst.msk [vmem:[%s546 + $0x61] sm:$0xff] %vm21, %v536
  %554 = vst.msk [vmem:[%s546 + $0x71] sm:$0xff] %vm21, %v537
  %555 = vst.msk [vmem:[%s546 + $0xa1] sm:$0xff] %vm21, %v538
  %556 = vst.msk [vmem:[%s546 + $0xb1] sm:$0xff] %vm21, %v539
  %557 = vst.msk [vmem:[%s546 + $0xc1] sm:$0xff] %vm21, %v540
  %558 = vst.msk [vmem:[%s546 + $0xd1] sm:$0xff] %vm21, %v541
  %559 = vst.msk [vmem:[%s546 + $0xe1] sm:$0xff] %vm21, %v542
  %560 = vst.msk [vmem:[%s546 + $0xf1] sm:$0xff] %vm21, %v543
  %561 = vst.msk [vmem:[%s546 + $0x101] sm:$0xff] %vm21, %v544
  %562 = vst.msk [vmem:[%s546 + $0x111] sm:$0xff] %vm21, %v545
  %v563 = vld [vmem:[#allocation2] sm:$0xff]
  %v564 = vld [vmem:[#allocation2 + $0x10] sm:$0xff]
  %v565 = vld [vmem:[#allocation2 + $0x20] sm:$0xff]
  %v566 = vld [vmem:[#allocation2 + $0x30] sm:$0xff]
  %v567 = vld [vmem:[#allocation2 + $0x40] sm:$0xff]
  %v568 = vld [vmem:[#allocation2 + $0x50] sm:$0xff]
  %v569 = vld [vmem:[#allocation2 + $0x60] sm:$0xff]
  %v570 = vld [vmem:[#allocation2 + $0x70] sm:$0xff]
  %v571 = vld [vmem:[#allocation2 + $0xa0] sm:$0xff]
  %v572 = vld [vmem:[#allocation2 + $0xb0] sm:$0xff]
  %v573 = vld [vmem:[#allocation2 + $0xc0] sm:$0xff]
  %v574 = vld [vmem:[#allocation2 + $0xd0] sm:$0xff]
  %v575 = vld [vmem:[#allocation2 + $0xe0] sm:$0xff]
  %v576 = vld [vmem:[#allocation2 + $0xf0] sm:$0xff]
  %v577 = vld [vmem:[#allocation2 + $0x100] sm:$0xff]
  %v578 = vld [vmem:[#allocation2 + $0x110] sm:$0xff]
  %v579 = vpack.c.bf16 %v564, %v563
  %v580 = vpack.c.bf16 %v566, %v565
  %v581 = vpack.c.bf16 %v568, %v567
  %v582 = vpack.c.bf16 %v570, %v569
  %v583 = vpack.c.bf16 %v572, %v571
  %v584 = vpack.c.bf16 %v574, %v573
  %v585 = vpack.c.bf16 %v576, %v575
  %v586 = vpack.c.bf16 %v578, %v577
  %v587 = vld [vmem:[%s1] sm:$0xf]
  %v588 = vld [vmem:[#allocation2 + $0x1] sm:$0xff]
  %v589 = vld [vmem:[#allocation2 + $0x11] sm:$0xff]
  %v590 = vld [vmem:[#allocation2 + $0x21] sm:$0xff]
  %v591 = vld [vmem:[#allocation2 + $0x31] sm:$0xff]
  %v592 = vld [vmem:[#allocation2 + $0x41] sm:$0xff]
  %v593 = vld [vmem:[#allocation2 + $0x51] sm:$0xff]
  %v594 = vld [vmem:[#allocation2 + $0x61] sm:$0xff]
  %v595 = vld [vmem:[#allocation2 + $0x71] sm:$0xff]
  %v596 = vld [vmem:[#allocation2 + $0xa1] sm:$0xff]
  %v597 = vld [vmem:[#allocation2 + $0xb1] sm:$0xff]
  %v598 = vld [vmem:[#allocation2 + $0xc1] sm:$0xff]
  %v599 = vld [vmem:[#allocation2 + $0xd1] sm:$0xff]
  %v600 = vld [vmem:[#allocation2 + $0xe1] sm:$0xff]
  %v601 = vld [vmem:[#allocation2 + $0xf1] sm:$0xff]
  %v602 = vld [vmem:[#allocation2 + $0x101] sm:$0xff]
  %v603 = vld [vmem:[#allocation2 + $0x111] sm:$0xff]
  %v604 = vpack.c.bf16 %v589, %v588
  %v605 = vpack.c.bf16 %v591, %v590
  %v606 = vpack.c.bf16 %v593, %v592
  %v607 = vpack.c.bf16 %v595, %v594
  %v608 = vpack.c.bf16 %v597, %v596
  %v609 = vpack.c.bf16 %v599, %v598
  %v610 = vpack.c.bf16 %v601, %v600
  %v611 = vpack.c.bf16 %v603, %v602
  %s612 = scalar_lea.vmem %s1, 4
  %v613 = vld [vmem:[%s612] sm:$0xf]
  %v615 = vsel %vm21, %v604, 0
  %v618 = vsel %vm21, %v605, 0
  %v621 = vsel %vm21, %v606, 0
  %v624 = vsel %vm21, %v607, 0
  %v627 = vsel %vm21, %v608, 0
  %v630 = vsel %vm21, %v609, 0
  %v633 = vsel %vm21, %v610, 0
  %v636 = vsel %vm21, %v611, 0
  %vm638 = vcmask 1043456
  %v640 = vsel %vm638, %v613, 0
  %642 = vmatprep.subr.bf16.mxu0 0
  %643 = vmatpush1.bf16.msra.mxu0 0
  %644 = vmatprep.subr.bf16.mxu0 0
  %645 = vmatpush1.bf16.msra.mxu0 0
  %646 = vmatprep.subr.bf16.mxu0 0
  %647 = vmatpush1.bf16.msra.mxu0 0
  %648 = vmatprep.subr.bf16.mxu0 0
  %649 = vmatpush1.bf16.msra.mxu0 0
  %650 = vmatprep.subr.bf16.mxu0 0
  %651 = vmatpush1.bf16.msra.mxu0 0
  %652 = vmatprep.subr.bf16.mxu0 0
  %653 = vmatpush1.bf16.msra.mxu0 0
  %654 = vmatprep.subr.bf16.mxu0 0
  %655 = vmatpush1.bf16.msra.mxu0 0
  %656 = vmatprep.subr.bf16.mxu0 0
  %657 = vmatpush1.bf16.msra.mxu0 %v640
  %658 = vmatprep.subr.bf16.mxu0 0
  %659 = vmatpush2.bf16.msra.mxu0 0
  %660 = vmatprep.subr.bf16.mxu0 0
  %661 = vmatpush2.bf16.msra.mxu0 0
  %662 = vmatprep.subr.bf16.mxu0 0
  %663 = vmatpush2.bf16.msra.mxu0 0
  %664 = vmatprep.subr.bf16.mxu0 0
  %665 = vmatpush2.bf16.msra.mxu0 0
  %666 = vmatprep.subr.bf16.mxu0 0
  %667 = vmatpush2.bf16.msra.mxu0 0
  %668 = vmatprep.subr.bf16.mxu0 0
  %669 = vmatpush2.bf16.msra.mxu0 0
  %670 = vmatprep.subr.bf16.mxu0 0
  %671 = vmatpush2.bf16.msra.mxu0 0
  %672 = vmatprep.subr.bf16.mxu0 0
  %673 = vmatpush2.bf16.msra.mxu0 0
  %674 = vmatprep.mubr.bf16.mxu0 0
  %675 = vmatmul.mubr.bf16.gmra.mxu0 %v615
  %v676 = vpop.f32.mrf.mxu0
  %v677 = vadd.f32 0.0, %v676
  %v678 = vpop.f32.mrf.mxu0
  %v679 = vpop.f32.mrf.mxu0
  %v680 = vadd.f32 0.0, %v679
  %v681 = vpop.f32.mrf.mxu0
  %682 = vmatprep.mubr.bf16.mxu0 0
  %683 = vmatmul.mubr.bf16.gmra.mxu0 %v618
  %v684 = vpop.f32.mrf.mxu0
  %v685 = vadd.f32 0.0, %v684
  %v686 = vpop.f32.mrf.mxu0
  %v687 = vpop.f32.mrf.mxu0
  %v688 = vadd.f32 0.0, %v687
  %v689 = vpop.f32.mrf.mxu0
  %690 = vmatprep.mubr.bf16.mxu0 0
  %691 = vmatmul.mubr.bf16.gmra.mxu0 %v621
  %v692 = vpop.f32.mrf.mxu0
  %v693 = vadd.f32 0.0, %v692
  %v694 = vpop.f32.mrf.mxu0
  %v695 = vpop.f32.mrf.mxu0
  %v696 = vadd.f32 0.0, %v695
  %v697 = vpop.f32.mrf.mxu0
  %698 = vmatprep.mubr.bf16.mxu0 0
  %699 = vmatmul.mubr.bf16.gmra.mxu0 %v624
  %v700 = vpop.f32.mrf.mxu0
  %v701 = vadd.f32 0.0, %v700
  %v702 = vpop.f32.mrf.mxu0
  %v703 = vpop.f32.mrf.mxu0
  %v704 = vadd.f32 0.0, %v703
  %v705 = vpop.f32.mrf.mxu0
  %706 = vmatprep.mubr.bf16.mxu0 0
  %707 = vmatmul.mubr.bf16.gmra.mxu0 %v627
  %v708 = vpop.f32.mrf.mxu0
  %v709 = vadd.f32 0.0, %v708
  %v710 = vpop.f32.mrf.mxu0
  %v711 = vpop.f32.mrf.mxu0
  %v712 = vadd.f32 0.0, %v711
  %v713 = vpop.f32.mrf.mxu0
  %714 = vmatprep.mubr.bf16.mxu0 0
  %715 = vmatmul.mubr.bf16.gmra.mxu0 %v630
  %v716 = vpop.f32.mrf.mxu0
  %v717 = vadd.f32 0.0, %v716
  %v718 = vpop.f32.mrf.mxu0
  %v719 = vpop.f32.mrf.mxu0
  %v720 = vadd.f32 0.0, %v719
  %v721 = vpop.f32.mrf.mxu0
  %722 = vmatprep.mubr.bf16.mxu0 0
  %723 = vmatmul.mubr.bf16.gmra.mxu0 %v633
  %v724 = vpop.f32.mrf.mxu0
  %v725 = vadd.f32 0.0, %v724
  %v726 = vpop.f32.mrf.mxu0
  %v727 = vpop.f32.mrf.mxu0
  %v728 = vadd.f32 0.0, %v727
  %v729 = vpop.f32.mrf.mxu0
  %730 = vmatprep.mubr.bf16.mxu0 0
  %731 = vmatmul.mubr.bf16.gmra.mxu0 %v636
  %v732 = vpop.f32.mrf.mxu0
  %v733 = vadd.f32 0.0, %v732
  %v734 = vpop.f32.mrf.mxu0
  %v735 = vpop.f32.mrf.mxu0
  %v736 = vadd.f32 0.0, %v735
  %v737 = vpop.f32.mrf.mxu0
  %738 = vdwg.mxu0
  %v740 = vsel %vm21, %v579, 0
  %v743 = vsel %vm21, %v580, 0
  %v746 = vsel %vm21, %v581, 0
  %v749 = vsel %vm21, %v582, 0
  %v752 = vsel %vm21, %v583, 0
  %v755 = vsel %vm21, %v584, 0
  %v758 = vsel %vm21, %v585, 0
  %v761 = vsel %vm21, %v586, 0
  %v764 = vsel %vm638, %v587, 0
  %766 = vmatprep.subr.bf16.mxu0 0
  %767 = vmatpush1.bf16.msra.mxu0 0
  %768 = vmatprep.subr.bf16.mxu0 0
  %769 = vmatpush1.bf16.msra.mxu0 0
  %770 = vmatprep.subr.bf16.mxu0 0
  %771 = vmatpush1.bf16.msra.mxu0 0
  %772 = vmatprep.subr.bf16.mxu0 0
  %773 = vmatpush1.bf16.msra.mxu0 0
  %774 = vmatprep.subr.bf16.mxu0 0
  %775 = vmatpush1.bf16.msra.mxu0 0
  %776 = vmatprep.subr.bf16.mxu0 0
  %777 = vmatpush1.bf16.msra.mxu0 0
  %778 = vmatprep.subr.bf16.mxu0 0
  %779 = vmatpush1.bf16.msra.mxu0 0
  %780 = vmatprep.subr.bf16.mxu0 0
  %781 = vmatpush1.bf16.msra.mxu0 %v764
  %782 = vmatprep.subr.bf16.mxu0 0
  %783 = vmatpush2.bf16.msra.mxu0 0
  %784 = vmatprep.subr.bf16.mxu0 0
  %785 = vmatpush2.bf16.msra.mxu0 0
  %786 = vmatprep.subr.bf16.mxu0 0
  %787 = vmatpush2.bf16.msra.mxu0 0
  %788 = vmatprep.subr.bf16.mxu0 0
  %789 = vmatpush2.bf16.msra.mxu0 0
  %790 = vmatprep.subr.bf16.mxu0 0
  %791 = vmatpush2.bf16.msra.mxu0 0
  %792 = vmatprep.subr.bf16.mxu0 0
  %793 = vmatpush2.bf16.msra.mxu0 0
  %794 = vmatprep.subr.bf16.mxu0 0
  %795 = vmatpush2.bf16.msra.mxu0 0
  %796 = vmatprep.subr.bf16.mxu0 0
  %797 = vmatpush2.bf16.msra.mxu0 0
  %798 = vmatprep.mubr.bf16.mxu0 0
  %799 = vmatmul.mubr.bf16.gmra.mxu0 %v740
  %v800 = vpop.f32.mrf.mxu0
  %v801 = vadd.f32 %v677, %v800
  %v802 = vpop.f32.mrf.mxu0
  %v803 = vpop.f32.mrf.mxu0
  %v804 = vadd.f32 %v680, %v803
  %v805 = vpop.f32.mrf.mxu0
  %806 = vmatprep.mubr.bf16.mxu0 0
  %807 = vmatmul.mubr.bf16.gmra.mxu0 %v743
  %v808 = vpop.f32.mrf.mxu0
  %v809 = vadd.f32 %v685, %v808
  %v810 = vpop.f32.mrf.mxu0
  %v811 = vpop.f32.mrf.mxu0
  %v812 = vadd.f32 %v688, %v811
  %v813 = vpop.f32.mrf.mxu0
  %814 = vmatprep.mubr.bf16.mxu0 0
  %815 = vmatmul.mubr.bf16.gmra.mxu0 %v746
  %v816 = vpop.f32.mrf.mxu0
  %v817 = vadd.f32 %v693, %v816
  %v818 = vpop.f32.mrf.mxu0
  %v819 = vpop.f32.mrf.mxu0
  %v820 = vadd.f32 %v696, %v819
  %v821 = vpop.f32.mrf.mxu0
  %822 = vmatprep.mubr.bf16.mxu0 0
  %823 = vmatmul.mubr.bf16.gmra.mxu0 %v749
  %v824 = vpop.f32.mrf.mxu0
  %v825 = vadd.f32 %v701, %v824
  %v826 = vpop.f32.mrf.mxu0
  %v827 = vpop.f32.mrf.mxu0
  %v828 = vadd.f32 %v704, %v827
  %v829 = vpop.f32.mrf.mxu0
  %830 = vmatprep.mubr.bf16.mxu0 0
  %831 = vmatmul.mubr.bf16.gmra.mxu0 %v752
  %v832 = vpop.f32.mrf.mxu0
  %v833 = vadd.f32 %v709, %v832
  %v834 = vpop.f32.mrf.mxu0
  %v835 = vpop.f32.mrf.mxu0
  %v836 = vadd.f32 %v712, %v835
  %v837 = vpop.f32.mrf.mxu0
  %838 = vmatprep.mubr.bf16.mxu0 0
  %839 = vmatmul.mubr.bf16.gmra.mxu0 %v755
  %v840 = vpop.f32.mrf.mxu0
  %v841 = vadd.f32 %v717, %v840
  %v842 = vpop.f32.mrf.mxu0
  %v843 = vpop.f32.mrf.mxu0
  %v844 = vadd.f32 %v720, %v843
  %v845 = vpop.f32.mrf.mxu0
  %846 = vmatprep.mubr.bf16.mxu0 0
  %847 = vmatmul.mubr.bf16.gmra.mxu0 %v758
  %v848 = vpop.f32.mrf.mxu0
  %v849 = vadd.f32 %v725, %v848
  %v850 = vpop.f32.mrf.mxu0
  %v851 = vpop.f32.mrf.mxu0
  %v852 = vadd.f32 %v728, %v851
  %v853 = vpop.f32.mrf.mxu0
  %854 = vmatprep.mubr.bf16.mxu0 0
  %855 = vmatmul.mubr.bf16.gmra.mxu0 %v761
  %v856 = vpop.f32.mrf.mxu0
  %v857 = vadd.f32 %v733, %v856
  %v858 = vpop.f32.mrf.mxu0
  %v859 = vpop.f32.mrf.mxu0
  %v860 = vadd.f32 %v736, %v859
  %v861 = vpop.f32.mrf.mxu0
  %862 = vdwg.mxu0
  %v863 = vld [vmem:[#allocation2 + $0x2] sm:$0xff]
  %v864 = vld [vmem:[#allocation2 + $0x12] sm:$0xff]
  %v865 = vld [vmem:[#allocation2 + $0x22] sm:$0xff]
  %v866 = vld [vmem:[#allocation2 + $0x32] sm:$0xff]
  %v867 = vld [vmem:[#allocation2 + $0x42] sm:$0xff]
  %v868 = vld [vmem:[#allocation2 + $0x52] sm:$0xff]
  %v869 = vld [vmem:[#allocation2 + $0x62] sm:$0xff]
  %v870 = vld [vmem:[#allocation2 + $0x72] sm:$0xff]
  %v871 = vld [vmem:[#allocation2 + $0xa2] sm:$0xff]
  %v872 = vld [vmem:[#allocation2 + $0xb2] sm:$0xff]
  %v873 = vld [vmem:[#allocation2 + $0xc2] sm:$0xff]
  %v874 = vld [vmem:[#allocation2 + $0xd2] sm:$0xff]
  %v875 = vld [vmem:[#allocation2 + $0xe2] sm:$0xff]
  %v876 = vld [vmem:[#allocation2 + $0xf2] sm:$0xff]
  %v877 = vld [vmem:[#allocation2 + $0x102] sm:$0xff]
  %v878 = vld [vmem:[#allocation2 + $0x112] sm:$0xff]
  %v879 = vpack.c.bf16 %v864, %v863
  %v880 = vpack.c.bf16 %v866, %v865
  %v881 = vpack.c.bf16 %v868, %v867
  %v882 = vpack.c.bf16 %v870, %v869
  %v883 = vpack.c.bf16 %v872, %v871
  %v884 = vpack.c.bf16 %v874, %v873
  %v885 = vpack.c.bf16 %v876, %v875
  %v886 = vpack.c.bf16 %v878, %v877
  %s887 = scalar_lea.vmem %s1, 8
  %v888 = vld [vmem:[%s887] sm:$0xf]
  %v890 = vsel %vm21, %v879, 0
  %v893 = vsel %vm21, %v880, 0
  %v896 = vsel %vm21, %v881, 0
  %v899 = vsel %vm21, %v882, 0
  %v902 = vsel %vm21, %v883, 0
  %v905 = vsel %vm21, %v884, 0
  %v908 = vsel %vm21, %v885, 0
  %v911 = vsel %vm21, %v886, 0
  %v914 = vsel %vm638, %v888, 0
  %916 = vmatprep.subr.bf16.mxu0 0
  %917 = vmatpush1.bf16.msra.mxu0 0
  %918 = vmatprep.subr.bf16.mxu0 0
  %919 = vmatpush1.bf16.msra.mxu0 0
  %920 = vmatprep.subr.bf16.mxu0 0
  %921 = vmatpush1.bf16.msra.mxu0 0
  %922 = vmatprep.subr.bf16.mxu0 0
  %923 = vmatpush1.bf16.msra.mxu0 0
  %924 = vmatprep.subr.bf16.mxu0 0
  %925 = vmatpush1.bf16.msra.mxu0 0
  %926 = vmatprep.subr.bf16.mxu0 0
  %927 = vmatpush1.bf16.msra.mxu0 0
  %928 = vmatprep.subr.bf16.mxu0 0
  %929 = vmatpush1.bf16.msra.mxu0 0
  %930 = vmatprep.subr.bf16.mxu0 0
  %931 = vmatpush1.bf16.msra.mxu0 %v914
  %932 = vmatprep.subr.bf16.mxu0 0
  %933 = vmatpush2.bf16.msra.mxu0 0
  %934 = vmatprep.subr.bf16.mxu0 0
  %935 = vmatpush2.bf16.msra.mxu0 0
  %936 = vmatprep.subr.bf16.mxu0 0
  %937 = vmatpush2.bf16.msra.mxu0 0
  %938 = vmatprep.subr.bf16.mxu0 0
  %939 = vmatpush2.bf16.msra.mxu0 0
  %940 = vmatprep.subr.bf16.mxu0 0
  %941 = vmatpush2.bf16.msra.mxu0 0
  %942 = vmatprep.subr.bf16.mxu0 0
  %943 = vmatpush2.bf16.msra.mxu0 0
  %944 = vmatprep.subr.bf16.mxu0 0
  %945 = vmatpush2.bf16.msra.mxu0 0
  %946 = vmatprep.subr.bf16.mxu0 0
  %947 = vmatpush2.bf16.msra.mxu0 0
  %948 = vmatprep.mubr.bf16.mxu0 0
  %949 = vmatmul.mubr.bf16.gmra.mxu0 %v890
  %v950 = vpop.f32.mrf.mxu0
  %v951 = vadd.f32 0.0, %v950
  %v952 = vpop.f32.mrf.mxu0
  %v953 = vpop.f32.mrf.mxu0
  %v954 = vadd.f32 0.0, %v953
  %v955 = vpop.f32.mrf.mxu0
  %956 = vmatprep.mubr.bf16.mxu0 0
  %957 = vmatmul.mubr.bf16.gmra.mxu0 %v893
  %v958 = vpop.f32.mrf.mxu0
  %v959 = vadd.f32 0.0, %v958
  %v960 = vpop.f32.mrf.mxu0
  %v961 = vpop.f32.mrf.mxu0
  %v962 = vadd.f32 0.0, %v961
  %v963 = vpop.f32.mrf.mxu0
  %964 = vmatprep.mubr.bf16.mxu0 0
  %965 = vmatmul.mubr.bf16.gmra.mxu0 %v896
  %v966 = vpop.f32.mrf.mxu0
  %v967 = vadd.f32 0.0, %v966
  %v968 = vpop.f32.mrf.mxu0
  %v969 = vpop.f32.mrf.mxu0
  %v970 = vadd.f32 0.0, %v969
  %v971 = vpop.f32.mrf.mxu0
  %972 = vmatprep.mubr.bf16.mxu0 0
  %973 = vmatmul.mubr.bf16.gmra.mxu0 %v899
  %v974 = vpop.f32.mrf.mxu0
  %v975 = vadd.f32 0.0, %v974
  %v976 = vpop.f32.mrf.mxu0
  %v977 = vpop.f32.mrf.mxu0
  %v978 = vadd.f32 0.0, %v977
  %v979 = vpop.f32.mrf.mxu0
  %980 = vmatprep.mubr.bf16.mxu0 0
  %981 = vmatmul.mubr.bf16.gmra.mxu0 %v902
  %v982 = vpop.f32.mrf.mxu0
  %v983 = vadd.f32 0.0, %v982
  %v984 = vpop.f32.mrf.mxu0
  %v985 = vpop.f32.mrf.mxu0
  %v986 = vadd.f32 0.0, %v985
  %v987 = vpop.f32.mrf.mxu0
  %988 = vmatprep.mubr.bf16.mxu0 0
  %989 = vmatmul.mubr.bf16.gmra.mxu0 %v905
  %v990 = vpop.f32.mrf.mxu0
  %v991 = vadd.f32 0.0, %v990
  %v992 = vpop.f32.mrf.mxu0
  %v993 = vpop.f32.mrf.mxu0
  %v994 = vadd.f32 0.0, %v993
  %v995 = vpop.f32.mrf.mxu0
  %996 = vmatprep.mubr.bf16.mxu0 0
  %997 = vmatmul.mubr.bf16.gmra.mxu0 %v908
  %v998 = vpop.f32.mrf.mxu0
  %v999 = vadd.f32 0.0, %v998
  %v1000 = vpop.f32.mrf.mxu0
  %v1001 = vpop.f32.mrf.mxu0
  %v1002 = vadd.f32 0.0, %v1001
  %v1003 = vpop.f32.mrf.mxu0
  %1004 = vmatprep.mubr.bf16.mxu0 0
  %1005 = vmatmul.mubr.bf16.gmra.mxu0 %v911
  %v1006 = vpop.f32.mrf.mxu0
  %v1007 = vadd.f32 0.0, %v1006
  %v1008 = vpop.f32.mrf.mxu0
  %v1009 = vpop.f32.mrf.mxu0
  %v1010 = vadd.f32 0.0, %v1009
  %v1011 = vpop.f32.mrf.mxu0
  %1012 = vdwg.mxu0
  %v1013 = vadd.f32 %v801, %v951
  %v1014 = vadd.f32 %v804, %v954
  %v1015 = vadd.f32 %v809, %v959
  %v1016 = vadd.f32 %v812, %v962
  %v1017 = vadd.f32 %v817, %v967
  %v1018 = vadd.f32 %v820, %v970
  %v1019 = vadd.f32 %v825, %v975
  %v1020 = vadd.f32 %v828, %v978
  %v1021 = vadd.f32 %v833, %v983
  %v1022 = vadd.f32 %v836, %v986
  %v1023 = vadd.f32 %v841, %v991
  %v1024 = vadd.f32 %v844, %v994
  %v1025 = vadd.f32 %v849, %v999
  %v1026 = vadd.f32 %v852, %v1002
  %v1027 = vadd.f32 %v857, %v1007
  %v1028 = vadd.f32 %v860, %v1010
  %v1029 = vld [vmem:[%s546] sm:$0xff]
  %v1030 = vld [vmem:[%s546 + $0x10] sm:$0xff]
  %v1031 = vld [vmem:[%s546 + $0x20] sm:$0xff]
  %v1032 = vld [vmem:[%s546 + $0x30] sm:$0xff]
  %v1033 = vld [vmem:[%s546 + $0x40] sm:$0xff]
  %v1034 = vld [vmem:[%s546 + $0x50] sm:$0xff]
  %v1035 = vld [vmem:[%s546 + $0x60] sm:$0xff]
  %v1036 = vld [vmem:[%s546 + $0x70] sm:$0xff]
  %v1037 = vld [vmem:[%s546 + $0xa0] sm:$0xff]
  %v1038 = vld [vmem:[%s546 + $0xb0] sm:$0xff]
  %v1039 = vld [vmem:[%s546 + $0xc0] sm:$0xff]
  %v1040 = vld [vmem:[%s546 + $0xd0] sm:$0xff]
  %v1041 = vld [vmem:[%s546 + $0xe0] sm:$0xff]
  %v1042 = vld [vmem:[%s546 + $0xf0] sm:$0xff]
  %v1043 = vld [vmem:[%s546 + $0x100] sm:$0xff]
  %v1044 = vld [vmem:[%s546 + $0x110] sm:$0xff]
  %v1045 = vpack.c.bf16 %v1030, %v1029
  %v1046 = vpack.c.bf16 %v1032, %v1031
  %v1047 = vpack.c.bf16 %v1034, %v1033
  %v1048 = vpack.c.bf16 %v1036, %v1035
  %v1049 = vpack.c.bf16 %v1038, %v1037
  %v1050 = vpack.c.bf16 %v1040, %v1039
  %v1051 = vpack.c.bf16 %v1042, %v1041
  %v1052 = vpack.c.bf16 %v1044, %v1043
  %s1053 = scalar_lea.vmem %s1, 12
  %v1054 = vld [vmem:[%s1053] sm:$0xf]
  %v1056 = vsel %vm21, %v1045, 0
  %v1059 = vsel %vm21, %v1046, 0
  %v1062 = vsel %vm21, %v1047, 0
  %v1065 = vsel %vm21, %v1048, 0
  %v1068 = vsel %vm21, %v1049, 0
  %v1071 = vsel %vm21, %v1050, 0
  %v1074 = vsel %vm21, %v1051, 0
  %v1077 = vsel %vm21, %v1052, 0
  %v1080 = vsel %vm638, %v1054, 0
  %1082 = vmatprep.subr.bf16.mxu0 0
  %1083 = vmatpush1.bf16.msra.mxu0 0
  %1084 = vmatprep.subr.bf16.mxu0 0
  %1085 = vmatpush1.bf16.msra.mxu0 0
  %1086 = vmatprep.subr.bf16.mxu0 0
  %1087 = vmatpush1.bf16.msra.mxu0 0
  %1088 = vmatprep.subr.bf16.mxu0 0
  %1089 = vmatpush1.bf16.msra.mxu0 0
  %1090 = vmatprep.subr.bf16.mxu0 0
  %1091 = vmatpush1.bf16.msra.mxu0 0
  %1092 = vmatprep.subr.bf16.mxu0 0
  %1093 = vmatpush1.bf16.msra.mxu0 0
  %1094 = vmatprep.subr.bf16.mxu0 0
  %1095 = vmatpush1.bf16.msra.mxu0 0
  %1096 = vmatprep.subr.bf16.mxu0 0
  %1097 = vmatpush1.bf16.msra.mxu0 %v1080
  %1098 = vmatprep.subr.bf16.mxu0 0
  %1099 = vmatpush2.bf16.msra.mxu0 0
  %1100 = vmatprep.subr.bf16.mxu0 0
  %1101 = vmatpush2.bf16.msra.mxu0 0
  %1102 = vmatprep.subr.bf16.mxu0 0
  %1103 = vmatpush2.bf16.msra.mxu0 0
  %1104 = vmatprep.subr.bf16.mxu0 0
  %1105 = vmatpush2.bf16.msra.mxu0 0
  %1106 = vmatprep.subr.bf16.mxu0 0
  %1107 = vmatpush2.bf16.msra.mxu0 0
  %1108 = vmatprep.subr.bf16.mxu0 0
  %1109 = vmatpush2.bf16.msra.mxu0 0
  %1110 = vmatprep.subr.bf16.mxu0 0
  %1111 = vmatpush2.bf16.msra.mxu0 0
  %1112 = vmatprep.subr.bf16.mxu0 0
  %1113 = vmatpush2.bf16.msra.mxu0 0
  %1114 = vmatprep.mubr.bf16.mxu0 0
  %1115 = vmatmul.mubr.bf16.gmra.mxu0 %v1056
  %v1116 = vpop.f32.mrf.mxu0
  %v1117 = vadd.f32 0.0, %v1116
  %v1118 = vpop.f32.mrf.mxu0
  %v1119 = vpop.f32.mrf.mxu0
  %v1120 = vadd.f32 0.0, %v1119
  %v1121 = vpop.f32.mrf.mxu0
  %1122 = vmatprep.mubr.bf16.mxu0 0
  %1123 = vmatmul.mubr.bf16.gmra.mxu0 %v1059
  %v1124 = vpop.f32.mrf.mxu0
  %v1125 = vadd.f32 0.0, %v1124
  %v1126 = vpop.f32.mrf.mxu0
  %v1127 = vpop.f32.mrf.mxu0
  %v1128 = vadd.f32 0.0, %v1127
  %v1129 = vpop.f32.mrf.mxu0
  %1130 = vmatprep.mubr.bf16.mxu0 0
  %1131 = vmatmul.mubr.bf16.gmra.mxu0 %v1062
  %v1132 = vpop.f32.mrf.mxu0
  %v1133 = vadd.f32 0.0, %v1132
  %v1134 = vpop.f32.mrf.mxu0
  %v1135 = vpop.f32.mrf.mxu0
  %v1136 = vadd.f32 0.0, %v1135
  %v1137 = vpop.f32.mrf.mxu0
  %1138 = vmatprep.mubr.bf16.mxu0 0
  %1139 = vmatmul.mubr.bf16.gmra.mxu0 %v1065
  %v1140 = vpop.f32.mrf.mxu0
  %v1141 = vadd.f32 0.0, %v1140
  %v1142 = vpop.f32.mrf.mxu0
  %v1143 = vpop.f32.mrf.mxu0
  %v1144 = vadd.f32 0.0, %v1143
  %v1145 = vpop.f32.mrf.mxu0
  %1146 = vmatprep.mubr.bf16.mxu0 0
  %1147 = vmatmul.mubr.bf16.gmra.mxu0 %v1068
  %v1148 = vpop.f32.mrf.mxu0
  %v1149 = vadd.f32 0.0, %v1148
  %v1150 = vpop.f32.mrf.mxu0
  %v1151 = vpop.f32.mrf.mxu0
  %v1152 = vadd.f32 0.0, %v1151
  %v1153 = vpop.f32.mrf.mxu0
  %1154 = vmatprep.mubr.bf16.mxu0 0
  %1155 = vmatmul.mubr.bf16.gmra.mxu0 %v1071
  %v1156 = vpop.f32.mrf.mxu0
  %v1157 = vadd.f32 0.0, %v1156
  %v1158 = vpop.f32.mrf.mxu0
  %v1159 = vpop.f32.mrf.mxu0
  %v1160 = vadd.f32 0.0, %v1159
  %v1161 = vpop.f32.mrf.mxu0
  %1162 = vmatprep.mubr.bf16.mxu0 0
  %1163 = vmatmul.mubr.bf16.gmra.mxu0 %v1074
  %v1164 = vpop.f32.mrf.mxu0
  %v1165 = vadd.f32 0.0, %v1164
  %v1166 = vpop.f32.mrf.mxu0
  %v1167 = vpop.f32.mrf.mxu0
  %v1168 = vadd.f32 0.0, %v1167
  %v1169 = vpop.f32.mrf.mxu0
  %1170 = vmatprep.mubr.bf16.mxu0 0
  %1171 = vmatmul.mubr.bf16.gmra.mxu0 %v1077
  %v1172 = vpop.f32.mrf.mxu0
  %v1173 = vadd.f32 0.0, %v1172
  %v1174 = vpop.f32.mrf.mxu0
  %v1175 = vpop.f32.mrf.mxu0
  %v1176 = vadd.f32 0.0, %v1175
  %v1177 = vpop.f32.mrf.mxu0
  %1178 = vdwg.mxu0
  %v1179 = vadd.f32 %v1013, %v1117
  %v1180 = vadd.f32 %v1014, %v1120
  %v1181 = vadd.f32 %v1015, %v1125
  %v1182 = vadd.f32 %v1016, %v1128
  %v1183 = vadd.f32 %v1017, %v1133
  %v1184 = vadd.f32 %v1018, %v1136
  %v1185 = vadd.f32 %v1019, %v1141
  %v1186 = vadd.f32 %v1020, %v1144
  %v1187 = vadd.f32 %v1021, %v1149
  %v1188 = vadd.f32 %v1022, %v1152
  %v1189 = vadd.f32 %v1023, %v1157
  %v1190 = vadd.f32 %v1024, %v1160
  %v1191 = vadd.f32 %v1025, %v1165
  %v1192 = vadd.f32 %v1026, %v1168
  %v1193 = vadd.f32 %v1027, %v1173
  %v1194 = vadd.f32 %v1028, %v1176
  %v1195 = vld [vmem:[%s546 + $0x1] sm:$0xff]
  %v1196 = vld [vmem:[%s546 + $0x11] sm:$0xff]
  %v1197 = vld [vmem:[%s546 + $0x21] sm:$0xff]
  %v1198 = vld [vmem:[%s546 + $0x31] sm:$0xff]
  %v1199 = vld [vmem:[%s546 + $0x41] sm:$0xff]
  %v1200 = vld [vmem:[%s546 + $0x51] sm:$0xff]
  %v1201 = vld [vmem:[%s546 + $0x61] sm:$0xff]
  %v1202 = vld [vmem:[%s546 + $0x71] sm:$0xff]
  %v1203 = vld [vmem:[%s546 + $0xa1] sm:$0xff]
  %v1204 = vld [vmem:[%s546 + $0xb1] sm:$0xff]
  %v1205 = vld [vmem:[%s546 + $0xc1] sm:$0xff]
  %v1206 = vld [vmem:[%s546 + $0xd1] sm:$0xff]
  %v1207 = vld [vmem:[%s546 + $0xe1] sm:$0xff]
  %v1208 = vld [vmem:[%s546 + $0xf1] sm:$0xff]
  %v1209 = vld [vmem:[%s546 + $0x101] sm:$0xff]
  %v1210 = vld [vmem:[%s546 + $0x111] sm:$0xff]
  %v1211 = vpack.c.bf16 %v1196, %v1195
  %v1212 = vpack.c.bf16 %v1198, %v1197
  %v1213 = vpack.c.bf16 %v1200, %v1199
  %v1214 = vpack.c.bf16 %v1202, %v1201
  %v1215 = vpack.c.bf16 %v1204, %v1203
  %v1216 = vpack.c.bf16 %v1206, %v1205
  %v1217 = vpack.c.bf16 %v1208, %v1207
  %v1218 = vpack.c.bf16 %v1210, %v1209
  %s1219 = scalar_lea.vmem %s1, 16
  %v1220 = vld [vmem:[%s1219] sm:$0xf]
  %v1222 = vsel %vm21, %v1211, 0
  %v1225 = vsel %vm21, %v1212, 0
  %v1228 = vsel %vm21, %v1213, 0
  %v1231 = vsel %vm21, %v1214, 0
  %v1234 = vsel %vm21, %v1215, 0
  %v1237 = vsel %vm21, %v1216, 0
  %v1240 = vsel %vm21, %v1217, 0
  %v1243 = vsel %vm21, %v1218, 0
  %v1246 = vsel %vm638, %v1220, 0
  %1248 = vmatprep.subr.bf16.mxu0 0
  %1249 = vmatpush1.bf16.msra.mxu0 0
  %1250 = vmatprep.subr.bf16.mxu0 0
  %1251 = vmatpush1.bf16.msra.mxu0 0
  %1252 = vmatprep.subr.bf16.mxu0 0
  %1253 = vmatpush1.bf16.msra.mxu0 0
  %1254 = vmatprep.subr.bf16.mxu0 0
  %1255 = vmatpush1.bf16.msra.mxu0 0
  %1256 = vmatprep.subr.bf16.mxu0 0
  %1257 = vmatpush1.bf16.msra.mxu0 0
  %1258 = vmatprep.subr.bf16.mxu0 0
  %1259 = vmatpush1.bf16.msra.mxu0 0
  %1260 = vmatprep.subr.bf16.mxu0 0
  %1261 = vmatpush1.bf16.msra.mxu0 0
  %1262 = vmatprep.subr.bf16.mxu0 0
  %1263 = vmatpush1.bf16.msra.mxu0 %v1246
  %1264 = vmatprep.subr.bf16.mxu0 0
  %1265 = vmatpush2.bf16.msra.mxu0 0
  %1266 = vmatprep.subr.bf16.mxu0 0
  %1267 = vmatpush2.bf16.msra.mxu0 0
  %1268 = vmatprep.subr.bf16.mxu0 0
  %1269 = vmatpush2.bf16.msra.mxu0 0
  %1270 = vmatprep.subr.bf16.mxu0 0
  %1271 = vmatpush2.bf16.msra.mxu0 0
  %1272 = vmatprep.subr.bf16.mxu0 0
  %1273 = vmatpush2.bf16.msra.mxu0 0
  %1274 = vmatprep.subr.bf16.mxu0 0
  %1275 = vmatpush2.bf16.msra.mxu0 0
  %1276 = vmatprep.subr.bf16.mxu0 0
  %1277 = vmatpush2.bf16.msra.mxu0 0
  %1278 = vmatprep.subr.bf16.mxu0 0
  %1279 = vmatpush2.bf16.msra.mxu0 0
  %1280 = vmatprep.mubr.bf16.mxu0 0
  %1281 = vmatmul.mubr.bf16.gmra.mxu0 %v1222
  %v1282 = vpop.f32.mrf.mxu0
  %v1283 = vadd.f32 0.0, %v1282
  %v1284 = vpop.f32.mrf.mxu0
  %v1285 = vpop.f32.mrf.mxu0
  %v1286 = vadd.f32 0.0, %v1285
  %v1287 = vpop.f32.mrf.mxu0
  %1288 = vmatprep.mubr.bf16.mxu0 0
  %1289 = vmatmul.mubr.bf16.gmra.mxu0 %v1225
  %v1290 = vpop.f32.mrf.mxu0
  %v1291 = vadd.f32 0.0, %v1290
  %v1292 = vpop.f32.mrf.mxu0
  %v1293 = vpop.f32.mrf.mxu0
  %v1294 = vadd.f32 0.0, %v1293
  %v1295 = vpop.f32.mrf.mxu0
  %1296 = vmatprep.mubr.bf16.mxu0 0
  %1297 = vmatmul.mubr.bf16.gmra.mxu0 %v1228
  %v1298 = vpop.f32.mrf.mxu0
  %v1299 = vadd.f32 0.0, %v1298
  %v1300 = vpop.f32.mrf.mxu0
  %v1301 = vpop.f32.mrf.mxu0
  %v1302 = vadd.f32 0.0, %v1301
  %v1303 = vpop.f32.mrf.mxu0
  %1304 = vmatprep.mubr.bf16.mxu0 0
  %1305 = vmatmul.mubr.bf16.gmra.mxu0 %v1231
  %v1306 = vpop.f32.mrf.mxu0
  %v1307 = vadd.f32 0.0, %v1306
  %v1308 = vpop.f32.mrf.mxu0
  %v1309 = vpop.f32.mrf.mxu0
  %v1310 = vadd.f32 0.0, %v1309
  %v1311 = vpop.f32.mrf.mxu0
  %1312 = vmatprep.mubr.bf16.mxu0 0
  %1313 = vmatmul.mubr.bf16.gmra.mxu0 %v1234
  %v1314 = vpop.f32.mrf.mxu0
  %v1315 = vadd.f32 0.0, %v1314
  %v1316 = vpop.f32.mrf.mxu0
  %v1317 = vpop.f32.mrf.mxu0
  %v1318 = vadd.f32 0.0, %v1317
  %v1319 = vpop.f32.mrf.mxu0
  %1320 = vmatprep.mubr.bf16.mxu0 0
  %1321 = vmatmul.mubr.bf16.gmra.mxu0 %v1237
  %v1322 = vpop.f32.mrf.mxu0
  %v1323 = vadd.f32 0.0, %v1322
  %v1324 = vpop.f32.mrf.mxu0
  %v1325 = vpop.f32.mrf.mxu0
  %v1326 = vadd.f32 0.0, %v1325
  %v1327 = vpop.f32.mrf.mxu0
  %1328 = vmatprep.mubr.bf16.mxu0 0
  %1329 = vmatmul.mubr.bf16.gmra.mxu0 %v1240
  %v1330 = vpop.f32.mrf.mxu0
  %v1331 = vadd.f32 0.0, %v1330
  %v1332 = vpop.f32.mrf.mxu0
  %v1333 = vpop.f32.mrf.mxu0
  %v1334 = vadd.f32 0.0, %v1333
  %v1335 = vpop.f32.mrf.mxu0
  %1336 = vmatprep.mubr.bf16.mxu0 0
  %1337 = vmatmul.mubr.bf16.gmra.mxu0 %v1243
  %v1338 = vpop.f32.mrf.mxu0
  %v1339 = vadd.f32 0.0, %v1338
  %v1340 = vpop.f32.mrf.mxu0
  %v1341 = vpop.f32.mrf.mxu0
  %v1342 = vadd.f32 0.0, %v1341
  %v1343 = vpop.f32.mrf.mxu0
  %1344 = vdwg.mxu0
  %v1345 = vadd.f32 %v1179, %v1283
  %v1346 = vadd.f32 %v1180, %v1286
  %v1347 = vadd.f32 %v1181, %v1291
  %v1348 = vadd.f32 %v1182, %v1294
  %v1349 = vadd.f32 %v1183, %v1299
  %v1350 = vadd.f32 %v1184, %v1302
  %v1351 = vadd.f32 %v1185, %v1307
  %v1352 = vadd.f32 %v1186, %v1310
  %v1353 = vadd.f32 %v1187, %v1315
  %v1354 = vadd.f32 %v1188, %v1318
  %v1355 = vadd.f32 %v1189, %v1323
  %v1356 = vadd.f32 %v1190, %v1326
  %v1357 = vadd.f32 %v1191, %v1331
  %v1358 = vadd.f32 %v1192, %v1334
  %v1359 = vadd.f32 %v1193, %v1339
  %v1360 = vadd.f32 %v1194, %v1342
  %v1361 = vld [vmem:[%s546 + $0x2] sm:$0xff]
  %v1362 = vld [vmem:[%s546 + $0x12] sm:$0xff]
  %v1363 = vld [vmem:[%s546 + $0x22] sm:$0xff]
  %v1364 = vld [vmem:[%s546 + $0x32] sm:$0xff]
  %v1365 = vld [vmem:[%s546 + $0x42] sm:$0xff]
  %v1366 = vld [vmem:[%s546 + $0x52] sm:$0xff]
  %v1367 = vld [vmem:[%s546 + $0x62] sm:$0xff]
  %v1368 = vld [vmem:[%s546 + $0x72] sm:$0xff]
  %v1369 = vld [vmem:[%s546 + $0xa2] sm:$0xff]
  %v1370 = vld [vmem:[%s546 + $0xb2] sm:$0xff]
  %v1371 = vld [vmem:[%s546 + $0xc2] sm:$0xff]
  %v1372 = vld [vmem:[%s546 + $0xd2] sm:$0xff]
  %v1373 = vld [vmem:[%s546 + $0xe2] sm:$0xff]
  %v1374 = vld [vmem:[%s546 + $0xf2] sm:$0xff]
  %v1375 = vld [vmem:[%s546 + $0x102] sm:$0xff]
  %v1376 = vld [vmem:[%s546 + $0x112] sm:$0xff]
  %v1377 = vpack.c.bf16 %v1362, %v1361
  %v1378 = vpack.c.bf16 %v1364, %v1363
  %v1379 = vpack.c.bf16 %v1366, %v1365
  %v1380 = vpack.c.bf16 %v1368, %v1367
  %v1381 = vpack.c.bf16 %v1370, %v1369
  %v1382 = vpack.c.bf16 %v1372, %v1371
  %v1383 = vpack.c.bf16 %v1374, %v1373
  %v1384 = vpack.c.bf16 %v1376, %v1375
  %s1385 = scalar_lea.vmem %s1, 20
  %v1386 = vld [vmem:[%s1385] sm:$0xf]
  %v1388 = vsel %vm21, %v1377, 0
  %v1391 = vsel %vm21, %v1378, 0
  %v1394 = vsel %vm21, %v1379, 0
  %v1397 = vsel %vm21, %v1380, 0
  %v1400 = vsel %vm21, %v1381, 0
  %v1403 = vsel %vm21, %v1382, 0
  %v1406 = vsel %vm21, %v1383, 0
  %v1409 = vsel %vm21, %v1384, 0
  %v1412 = vsel %vm638, %v1386, 0
  %1414 = vmatprep.subr.bf16.mxu0 0
  %1415 = vmatpush1.bf16.msra.mxu0 0
  %1416 = vmatprep.subr.bf16.mxu0 0
  %1417 = vmatpush1.bf16.msra.mxu0 0
  %1418 = vmatprep.subr.bf16.mxu0 0
  %1419 = vmatpush1.bf16.msra.mxu0 0
  %1420 = vmatprep.subr.bf16.mxu0 0
  %1421 = vmatpush1.bf16.msra.mxu0 0
  %1422 = vmatprep.subr.bf16.mxu0 0
  %1423 = vmatpush1.bf16.msra.mxu0 0
  %1424 = vmatprep.subr.bf16.mxu0 0
  %1425 = vmatpush1.bf16.msra.mxu0 0
  %1426 = vmatprep.subr.bf16.mxu0 0
  %1427 = vmatpush1.bf16.msra.mxu0 0
  %1428 = vmatprep.subr.bf16.mxu0 0
  %1429 = vmatpush1.bf16.msra.mxu0 %v1412
  %1430 = vmatprep.subr.bf16.mxu0 0
  %1431 = vmatpush2.bf16.msra.mxu0 0
  %1432 = vmatprep.subr.bf16.mxu0 0
  %1433 = vmatpush2.bf16.msra.mxu0 0
  %1434 = vmatprep.subr.bf16.mxu0 0
  %1435 = vmatpush2.bf16.msra.mxu0 0
  %1436 = vmatprep.subr.bf16.mxu0 0
  %1437 = vmatpush2.bf16.msra.mxu0 0
  %1438 = vmatprep.subr.bf16.mxu0 0
  %1439 = vmatpush2.bf16.msra.mxu0 0
  %1440 = vmatprep.subr.bf16.mxu0 0
  %1441 = vmatpush2.bf16.msra.mxu0 0
  %1442 = vmatprep.subr.bf16.mxu0 0
  %1443 = vmatpush2.bf16.msra.mxu0 0
  %1444 = vmatprep.subr.bf16.mxu0 0
  %1445 = vmatpush2.bf16.msra.mxu0 0
  %1446 = vmatprep.mubr.bf16.mxu0 0
  %1447 = vmatmul.mubr.bf16.gmra.mxu0 %v1388
  %v1448 = vpop.f32.mrf.mxu0
  %v1449 = vadd.f32 0.0, %v1448
  %v1450 = vpop.f32.mrf.mxu0
  %v1451 = vpop.f32.mrf.mxu0
  %v1452 = vadd.f32 0.0, %v1451
  %v1453 = vpop.f32.mrf.mxu0
  %1454 = vmatprep.mubr.bf16.mxu0 0
  %1455 = vmatmul.mubr.bf16.gmra.mxu0 %v1391
  %v1456 = vpop.f32.mrf.mxu0
  %v1457 = vadd.f32 0.0, %v1456
  %v1458 = vpop.f32.mrf.mxu0
  %v1459 = vpop.f32.mrf.mxu0
  %v1460 = vadd.f32 0.0, %v1459
  %v1461 = vpop.f32.mrf.mxu0
  %1462 = vmatprep.mubr.bf16.mxu0 0
  %1463 = vmatmul.mubr.bf16.gmra.mxu0 %v1394
  %v1464 = vpop.f32.mrf.mxu0
  %v1465 = vadd.f32 0.0, %v1464
  %v1466 = vpop.f32.mrf.mxu0
  %v1467 = vpop.f32.mrf.mxu0
  %v1468 = vadd.f32 0.0, %v1467
  %v1469 = vpop.f32.mrf.mxu0
  %1470 = vmatprep.mubr.bf16.mxu0 0
  %1471 = vmatmul.mubr.bf16.gmra.mxu0 %v1397
  %v1472 = vpop.f32.mrf.mxu0
  %v1473 = vadd.f32 0.0, %v1472
  %v1474 = vpop.f32.mrf.mxu0
  %v1475 = vpop.f32.mrf.mxu0
  %v1476 = vadd.f32 0.0, %v1475
  %v1477 = vpop.f32.mrf.mxu0
  %1478 = vmatprep.mubr.bf16.mxu0 0
  %1479 = vmatmul.mubr.bf16.gmra.mxu0 %v1400
  %v1480 = vpop.f32.mrf.mxu0
  %v1481 = vadd.f32 0.0, %v1480
  %v1482 = vpop.f32.mrf.mxu0
  %v1483 = vpop.f32.mrf.mxu0
  %v1484 = vadd.f32 0.0, %v1483
  %v1485 = vpop.f32.mrf.mxu0
  %1486 = vmatprep.mubr.bf16.mxu0 0
  %1487 = vmatmul.mubr.bf16.gmra.mxu0 %v1403
  %v1488 = vpop.f32.mrf.mxu0
  %v1489 = vadd.f32 0.0, %v1488
  %v1490 = vpop.f32.mrf.mxu0
  %v1491 = vpop.f32.mrf.mxu0
  %v1492 = vadd.f32 0.0, %v1491
  %v1493 = vpop.f32.mrf.mxu0
  %1494 = vmatprep.mubr.bf16.mxu0 0
  %1495 = vmatmul.mubr.bf16.gmra.mxu0 %v1406
  %v1496 = vpop.f32.mrf.mxu0
  %v1497 = vadd.f32 0.0, %v1496
  %v1498 = vpop.f32.mrf.mxu0
  %v1499 = vpop.f32.mrf.mxu0
  %v1500 = vadd.f32 0.0, %v1499
  %v1501 = vpop.f32.mrf.mxu0
  %1502 = vmatprep.mubr.bf16.mxu0 0
  %1503 = vmatmul.mubr.bf16.gmra.mxu0 %v1409
  %v1504 = vpop.f32.mrf.mxu0
  %v1505 = vadd.f32 0.0, %v1504
  %v1506 = vpop.f32.mrf.mxu0
  %v1507 = vpop.f32.mrf.mxu0
  %v1508 = vadd.f32 0.0, %v1507
  %v1509 = vpop.f32.mrf.mxu0
  %1510 = vdwg.mxu0
  %v1511 = vadd.f32 %v1345, %v1449
  %v1512 = vadd.f32 %v1346, %v1452
  %v1513 = vadd.f32 %v1347, %v1457
  %v1514 = vadd.f32 %v1348, %v1460
  %v1515 = vadd.f32 %v1349, %v1465
  %v1516 = vadd.f32 %v1350, %v1468
  %v1517 = vadd.f32 %v1351, %v1473
  %v1518 = vadd.f32 %v1352, %v1476
  %v1519 = vadd.f32 %v1353, %v1481
  %v1520 = vadd.f32 %v1354, %v1484
  %v1521 = vadd.f32 %v1355, %v1489
  %v1522 = vadd.f32 %v1356, %v1492
  %v1523 = vadd.f32 %v1357, %v1497
  %v1524 = vadd.f32 %v1358, %v1500
  %v1525 = vadd.f32 %v1359, %v1505
  %v1526 = vadd.f32 %v1360, %v1508
  %s1527 = scalar_lea.vmem [#allocation2], 32
  %v1528 = vld [vmem:[%s1527] sm:$0xff]
  %v1529 = vld [vmem:[%s1527 + $0x10] sm:$0xff]
  %v1530 = vld [vmem:[%s1527 + $0x20] sm:$0xff]
  %v1531 = vld [vmem:[%s1527 + $0x30] sm:$0xff]
  %v1532 = vld [vmem:[%s1527 + $0x40] sm:$0xff]
  %v1533 = vld [vmem:[%s1527 + $0x50] sm:$0xff]
  %v1534 = vld [vmem:[%s1527 + $0x60] sm:$0xff]
  %v1535 = vld [vmem:[%s1527 + $0x70] sm:$0xff]
  %v1536 = vld [vmem:[%s1527 + $0xa0] sm:$0xff]
  %v1537 = vld [vmem:[%s1527 + $0xb0] sm:$0xff]
  %v1538 = vld [vmem:[%s1527 + $0xc0] sm:$0xff]
  %v1539 = vld [vmem:[%s1527 + $0xd0] sm:$0xff]
  %v1540 = vld [vmem:[%s1527 + $0xe0] sm:$0xff]
  %v1541 = vld [vmem:[%s1527 + $0xf0] sm:$0xff]
  %v1542 = vld [vmem:[%s1527 + $0x100] sm:$0xff]
  %v1543 = vld [vmem:[%s1527 + $0x110] sm:$0xff]
  %v1544 = vpack.c.bf16 %v1529, %v1528
  %v1545 = vpack.c.bf16 %v1531, %v1530
  %v1546 = vpack.c.bf16 %v1533, %v1532
  %v1547 = vpack.c.bf16 %v1535, %v1534
  %v1548 = vpack.c.bf16 %v1537, %v1536
  %v1549 = vpack.c.bf16 %v1539, %v1538
  %v1550 = vpack.c.bf16 %v1541, %v1540
  %v1551 = vpack.c.bf16 %v1543, %v1542
  %s1552 = scalar_lea.vmem %s1, 24
  %v1553 = vld [vmem:[%s1552] sm:$0xf]
  %v1555 = vsel %vm21, %v1544, 0
  %v1558 = vsel %vm21, %v1545, 0
  %v1561 = vsel %vm21, %v1546, 0
  %v1564 = vsel %vm21, %v1547, 0
  %v1567 = vsel %vm21, %v1548, 0
  %v1570 = vsel %vm21, %v1549, 0
  %v1573 = vsel %vm21, %v1550, 0
  %v1576 = vsel %vm21, %v1551, 0
  %v1579 = vsel %vm638, %v1553, 0
  %1581 = vmatprep.subr.bf16.mxu0 0
  %1582 = vmatpush1.bf16.msra.mxu0 0
  %1583 = vmatprep.subr.bf16.mxu0 0
  %1584 = vmatpush1.bf16.msra.mxu0 0
  %1585 = vmatprep.subr.bf16.mxu0 0
  %1586 = vmatpush1.bf16.msra.mxu0 0
  %1587 = vmatprep.subr.bf16.mxu0 0
  %1588 = vmatpush1.bf16.msra.mxu0 0
  %1589 = vmatprep.subr.bf16.mxu0 0
  %1590 = vmatpush1.bf16.msra.mxu0 0
  %1591 = vmatprep.subr.bf16.mxu0 0
  %1592 = vmatpush1.bf16.msra.mxu0 0
  %1593 = vmatprep.subr.bf16.mxu0 0
  %1594 = vmatpush1.bf16.msra.mxu0 0
  %1595 = vmatprep.subr.bf16.mxu0 0
  %1596 = vmatpush1.bf16.msra.mxu0 %v1579
  %1597 = vmatprep.subr.bf16.mxu0 0
  %1598 = vmatpush2.bf16.msra.mxu0 0
  %1599 = vmatprep.subr.bf16.mxu0 0
  %1600 = vmatpush2.bf16.msra.mxu0 0
  %1601 = vmatprep.subr.bf16.mxu0 0
  %1602 = vmatpush2.bf16.msra.mxu0 0
  %1603 = vmatprep.subr.bf16.mxu0 0
  %1604 = vmatpush2.bf16.msra.mxu0 0
  %1605 = vmatprep.subr.bf16.mxu0 0
  %1606 = vmatpush2.bf16.msra.mxu0 0
  %1607 = vmatprep.subr.bf16.mxu0 0
  %1608 = vmatpush2.bf16.msra.mxu0 0
  %1609 = vmatprep.subr.bf16.mxu0 0
  %1610 = vmatpush2.bf16.msra.mxu0 0
  %1611 = vmatprep.subr.bf16.mxu0 0
  %1612 = vmatpush2.bf16.msra.mxu0 0
  %1613 = vmatprep.mubr.bf16.mxu0 0
  %1614 = vmatmul.mubr.bf16.gmra.mxu0 %v1555
  %v1615 = vpop.f32.mrf.mxu0
  %v1616 = vadd.f32 0.0, %v1615
  %v1617 = vpop.f32.mrf.mxu0
  %v1618 = vpop.f32.mrf.mxu0
  %v1619 = vadd.f32 0.0, %v1618
  %v1620 = vpop.f32.mrf.mxu0
  %1621 = vmatprep.mubr.bf16.mxu0 0
  %1622 = vmatmul.mubr.bf16.gmra.mxu0 %v1558
  %v1623 = vpop.f32.mrf.mxu0
  %v1624 = vadd.f32 0.0, %v1623
  %v1625 = vpop.f32.mrf.mxu0
  %v1626 = vpop.f32.mrf.mxu0
  %v1627 = vadd.f32 0.0, %v1626
  %v1628 = vpop.f32.mrf.mxu0
  %1629 = vmatprep.mubr.bf16.mxu0 0
  %1630 = vmatmul.mubr.bf16.gmra.mxu0 %v1561
  %v1631 = vpop.f32.mrf.mxu0
  %v1632 = vadd.f32 0.0, %v1631
  %v1633 = vpop.f32.mrf.mxu0
  %v1634 = vpop.f32.mrf.mxu0
  %v1635 = vadd.f32 0.0, %v1634
  %v1636 = vpop.f32.mrf.mxu0
  %1637 = vmatprep.mubr.bf16.mxu0 0
  %1638 = vmatmul.mubr.bf16.gmra.mxu0 %v1564
  %v1639 = vpop.f32.mrf.mxu0
  %v1640 = vadd.f32 0.0, %v1639
  %v1641 = vpop.f32.mrf.mxu0
  %v1642 = vpop.f32.mrf.mxu0
  %v1643 = vadd.f32 0.0, %v1642
  %v1644 = vpop.f32.mrf.mxu0
  %1645 = vmatprep.mubr.bf16.mxu0 0
  %1646 = vmatmul.mubr.bf16.gmra.mxu0 %v1567
  %v1647 = vpop.f32.mrf.mxu0
  %v1648 = vadd.f32 0.0, %v1647
  %v1649 = vpop.f32.mrf.mxu0
  %v1650 = vpop.f32.mrf.mxu0
  %v1651 = vadd.f32 0.0, %v1650
  %v1652 = vpop.f32.mrf.mxu0
  %1653 = vmatprep.mubr.bf16.mxu0 0
  %1654 = vmatmul.mubr.bf16.gmra.mxu0 %v1570
  %v1655 = vpop.f32.mrf.mxu0
  %v1656 = vadd.f32 0.0, %v1655
  %v1657 = vpop.f32.mrf.mxu0
  %v1658 = vpop.f32.mrf.mxu0
  %v1659 = vadd.f32 0.0, %v1658
  %v1660 = vpop.f32.mrf.mxu0
  %1661 = vmatprep.mubr.bf16.mxu0 0
  %1662 = vmatmul.mubr.bf16.gmra.mxu0 %v1573
  %v1663 = vpop.f32.mrf.mxu0
  %v1664 = vadd.f32 0.0, %v1663
  %v1665 = vpop.f32.mrf.mxu0
  %v1666 = vpop.f32.mrf.mxu0
  %v1667 = vadd.f32 0.0, %v1666
  %v1668 = vpop.f32.mrf.mxu0
  %1669 = vmatprep.mubr.bf16.mxu0 0
  %1670 = vmatmul.mubr.bf16.gmra.mxu0 %v1576
  %v1671 = vpop.f32.mrf.mxu0
  %v1672 = vadd.f32 0.0, %v1671
  %v1673 = vpop.f32.mrf.mxu0
  %v1674 = vpop.f32.mrf.mxu0
  %v1675 = vadd.f32 0.0, %v1674
  %v1676 = vpop.f32.mrf.mxu0
  %1677 = vdwg.mxu0
  %v1678 = vadd.f32 %v1511, %v1616
  %v1679 = vadd.f32 %v1512, %v1619
  %v1680 = vadd.f32 %v1513, %v1624
  %v1681 = vadd.f32 %v1514, %v1627
  %v1682 = vadd.f32 %v1515, %v1632
  %v1683 = vadd.f32 %v1516, %v1635
  %v1684 = vadd.f32 %v1517, %v1640
  %v1685 = vadd.f32 %v1518, %v1643
  %v1686 = vadd.f32 %v1519, %v1648
  %v1687 = vadd.f32 %v1520, %v1651
  %v1688 = vadd.f32 %v1521, %v1656
  %v1689 = vadd.f32 %v1522, %v1659
  %v1690 = vadd.f32 %v1523, %v1664
  %v1691 = vadd.f32 %v1524, %v1667
  %v1692 = vadd.f32 %v1525, %v1672
  %v1693 = vadd.f32 %v1526, %v1675
  %v1694 = vld [vmem:[%s1527 + $0x1] sm:$0xff]
  %v1695 = vld [vmem:[%s1527 + $0x11] sm:$0xff]
  %v1696 = vld [vmem:[%s1527 + $0x21] sm:$0xff]
  %v1697 = vld [vmem:[%s1527 + $0x31] sm:$0xff]
  %v1698 = vld [vmem:[%s1527 + $0x41] sm:$0xff]
  %v1699 = vld [vmem:[%s1527 + $0x51] sm:$0xff]
  %v1700 = vld [vmem:[%s1527 + $0x61] sm:$0xff]
  %v1701 = vld [vmem:[%s1527 + $0x71] sm:$0xff]
  %v1702 = vld [vmem:[%s1527 + $0xa1] sm:$0xff]
  %v1703 = vld [vmem:[%s1527 + $0xb1] sm:$0xff]
  %v1704 = vld [vmem:[%s1527 + $0xc1] sm:$0xff]
  %v1705 = vld [vmem:[%s1527 + $0xd1] sm:$0xff]
  %v1706 = vld [vmem:[%s1527 + $0xe1] sm:$0xff]
  %v1707 = vld [vmem:[%s1527 + $0xf1] sm:$0xff]
  %v1708 = vld [vmem:[%s1527 + $0x101] sm:$0xff]
  %v1709 = vld [vmem:[%s1527 + $0x111] sm:$0xff]
  %v1710 = vpack.c.bf16 %v1695, %v1694
  %v1711 = vpack.c.bf16 %v1697, %v1696
  %v1712 = vpack.c.bf16 %v1699, %v1698
  %v1713 = vpack.c.bf16 %v1701, %v1700
  %v1714 = vpack.c.bf16 %v1703, %v1702
  %v1715 = vpack.c.bf16 %v1705, %v1704
  %v1716 = vpack.c.bf16 %v1707, %v1706
  %v1717 = vpack.c.bf16 %v1709, %v1708
  %s1718 = scalar_lea.vmem %s1, 28
  %v1719 = vld [vmem:[%s1718] sm:$0xf]
  %v1721 = vsel %vm21, %v1710, 0
  %v1724 = vsel %vm21, %v1711, 0
  %v1727 = vsel %vm21, %v1712, 0
  %v1730 = vsel %vm21, %v1713, 0
  %v1733 = vsel %vm21, %v1714, 0
  %v1736 = vsel %vm21, %v1715, 0
  %v1739 = vsel %vm21, %v1716, 0
  %v1742 = vsel %vm21, %v1717, 0
  %v1745 = vsel %vm638, %v1719, 0
  %1747 = vmatprep.subr.bf16.mxu0 0
  %1748 = vmatpush1.bf16.msra.mxu0 0
  %1749 = vmatprep.subr.bf16.mxu0 0
  %1750 = vmatpush1.bf16.msra.mxu0 0
  %1751 = vmatprep.subr.bf16.mxu0 0
  %1752 = vmatpush1.bf16.msra.mxu0 0
  %1753 = vmatprep.subr.bf16.mxu0 0
  %1754 = vmatpush1.bf16.msra.mxu0 0
  %1755 = vmatprep.subr.bf16.mxu0 0
  %1756 = vmatpush1.bf16.msra.mxu0 0
  %1757 = vmatprep.subr.bf16.mxu0 0
  %1758 = vmatpush1.bf16.msra.mxu0 0
  %1759 = vmatprep.subr.bf16.mxu0 0
  %1760 = vmatpush1.bf16.msra.mxu0 0
  %1761 = vmatprep.subr.bf16.mxu0 0
  %1762 = vmatpush1.bf16.msra.mxu0 %v1745
  %1763 = vmatprep.subr.bf16.mxu0 0
  %1764 = vmatpush2.bf16.msra.mxu0 0
  %1765 = vmatprep.subr.bf16.mxu0 0
  %1766 = vmatpush2.bf16.msra.mxu0 0
  %1767 = vmatprep.subr.bf16.mxu0 0
  %1768 = vmatpush2.bf16.msra.mxu0 0
  %1769 = vmatprep.subr.bf16.mxu0 0
  %1770 = vmatpush2.bf16.msra.mxu0 0
  %1771 = vmatprep.subr.bf16.mxu0 0
  %1772 = vmatpush2.bf16.msra.mxu0 0
  %1773 = vmatprep.subr.bf16.mxu0 0
  %1774 = vmatpush2.bf16.msra.mxu0 0
  %1775 = vmatprep.subr.bf16.mxu0 0
  %1776 = vmatpush2.bf16.msra.mxu0 0
  %1777 = vmatprep.subr.bf16.mxu0 0
  %1778 = vmatpush2.bf16.msra.mxu0 0
  %1779 = vmatprep.mubr.bf16.mxu0 0
  %1780 = vmatmul.mubr.bf16.gmra.mxu0 %v1721
  %v1781 = vpop.f32.mrf.mxu0
  %v1782 = vadd.f32 0.0, %v1781
  %v1783 = vpop.f32.mrf.mxu0
  %v1784 = vpop.f32.mrf.mxu0
  %v1785 = vadd.f32 0.0, %v1784
  %v1786 = vpop.f32.mrf.mxu0
  %1787 = vmatprep.mubr.bf16.mxu0 0
  %1788 = vmatmul.mubr.bf16.gmra.mxu0 %v1724
  %v1789 = vpop.f32.mrf.mxu0
  %v1790 = vadd.f32 0.0, %v1789
  %v1791 = vpop.f32.mrf.mxu0
  %v1792 = vpop.f32.mrf.mxu0
  %v1793 = vadd.f32 0.0, %v1792
  %v1794 = vpop.f32.mrf.mxu0
  %1795 = vmatprep.mubr.bf16.mxu0 0
  %1796 = vmatmul.mubr.bf16.gmra.mxu0 %v1727
  %v1797 = vpop.f32.mrf.mxu0
  %v1798 = vadd.f32 0.0, %v1797
  %v1799 = vpop.f32.mrf.mxu0
  %v1800 = vpop.f32.mrf.mxu0
  %v1801 = vadd.f32 0.0, %v1800
  %v1802 = vpop.f32.mrf.mxu0
  %1803 = vmatprep.mubr.bf16.mxu0 0
  %1804 = vmatmul.mubr.bf16.gmra.mxu0 %v1730
  %v1805 = vpop.f32.mrf.mxu0
  %v1806 = vadd.f32 0.0, %v1805
  %v1807 = vpop.f32.mrf.mxu0
  %v1808 = vpop.f32.mrf.mxu0
  %v1809 = vadd.f32 0.0, %v1808
  %v1810 = vpop.f32.mrf.mxu0
  %1811 = vmatprep.mubr.bf16.mxu0 0
  %1812 = vmatmul.mubr.bf16.gmra.mxu0 %v1733
  %v1813 = vpop.f32.mrf.mxu0
  %v1814 = vadd.f32 0.0, %v1813
  %v1815 = vpop.f32.mrf.mxu0
  %v1816 = vpop.f32.mrf.mxu0
  %v1817 = vadd.f32 0.0, %v1816
  %v1818 = vpop.f32.mrf.mxu0
  %1819 = vmatprep.mubr.bf16.mxu0 0
  %1820 = vmatmul.mubr.bf16.gmra.mxu0 %v1736
  %v1821 = vpop.f32.mrf.mxu0
  %v1822 = vadd.f32 0.0, %v1821
  %v1823 = vpop.f32.mrf.mxu0
  %v1824 = vpop.f32.mrf.mxu0
  %v1825 = vadd.f32 0.0, %v1824
  %v1826 = vpop.f32.mrf.mxu0
  %1827 = vmatprep.mubr.bf16.mxu0 0
  %1828 = vmatmul.mubr.bf16.gmra.mxu0 %v1739
  %v1829 = vpop.f32.mrf.mxu0
  %v1830 = vadd.f32 0.0, %v1829
  %v1831 = vpop.f32.mrf.mxu0
  %v1832 = vpop.f32.mrf.mxu0
  %v1833 = vadd.f32 0.0, %v1832
  %v1834 = vpop.f32.mrf.mxu0
  %1835 = vmatprep.mubr.bf16.mxu0 0
  %1836 = vmatmul.mubr.bf16.gmra.mxu0 %v1742
  %v1837 = vpop.f32.mrf.mxu0
  %v1838 = vadd.f32 0.0, %v1837
  %v1839 = vpop.f32.mrf.mxu0
  %v1840 = vpop.f32.mrf.mxu0
  %v1841 = vadd.f32 0.0, %v1840
  %v1842 = vpop.f32.mrf.mxu0
  %1843 = vdwg.mxu0
  %v1844 = vadd.f32 %v1678, %v1782
  %v1845 = vadd.f32 %v1679, %v1785
  %v1846 = vadd.f32 %v1680, %v1790
  %v1847 = vadd.f32 %v1681, %v1793
  %v1848 = vadd.f32 %v1682, %v1798
  %v1849 = vadd.f32 %v1683, %v1801
  %v1850 = vadd.f32 %v1684, %v1806
  %v1851 = vadd.f32 %v1685, %v1809
  %v1852 = vadd.f32 %v1686, %v1814
  %v1853 = vadd.f32 %v1687, %v1817
  %v1854 = vadd.f32 %v1688, %v1822
  %v1855 = vadd.f32 %v1689, %v1825
  %v1856 = vadd.f32 %v1690, %v1830
  %v1857 = vadd.f32 %v1691, %v1833
  %v1858 = vadd.f32 %v1692, %v1838
  %v1859 = vadd.f32 %v1693, %v1841
  %v1860 = vld [vmem:[%s1527 + $0x2] sm:$0xff]
  %v1861 = vld [vmem:[%s1527 + $0x12] sm:$0xff]
  %v1862 = vld [vmem:[%s1527 + $0x22] sm:$0xff]
  %v1863 = vld [vmem:[%s1527 + $0x32] sm:$0xff]
  %v1864 = vld [vmem:[%s1527 + $0x42] sm:$0xff]
  %v1865 = vld [vmem:[%s1527 + $0x52] sm:$0xff]
  %v1866 = vld [vmem:[%s1527 + $0x62] sm:$0xff]
  %v1867 = vld [vmem:[%s1527 + $0x72] sm:$0xff]
  %v1868 = vld [vmem:[%s1527 + $0xa2] sm:$0xff]
  %v1869 = vld [vmem:[%s1527 + $0xb2] sm:$0xff]
  %v1870 = vld [vmem:[%s1527 + $0xc2] sm:$0xff]
  %v1871 = vld [vmem:[%s1527 + $0xd2] sm:$0xff]
  %v1872 = vld [vmem:[%s1527 + $0xe2] sm:$0xff]
  %v1873 = vld [vmem:[%s1527 + $0xf2] sm:$0xff]
  %v1874 = vld [vmem:[%s1527 + $0x102] sm:$0xff]
  %v1875 = vld [vmem:[%s1527 + $0x112] sm:$0xff]
  %v1876 = vpack.c.bf16 %v1861, %v1860
  %v1877 = vpack.c.bf16 %v1863, %v1862
  %v1878 = vpack.c.bf16 %v1865, %v1864
  %v1879 = vpack.c.bf16 %v1867, %v1866
  %v1880 = vpack.c.bf16 %v1869, %v1868
  %v1881 = vpack.c.bf16 %v1871, %v1870
  %v1882 = vpack.c.bf16 %v1873, %v1872
  %v1883 = vpack.c.bf16 %v1875, %v1874
  %s1884 = scalar_lea.vmem %s1, 32
  %v1885 = vld [vmem:[%s1884] sm:$0xf]
  %v1887 = vsel %vm21, %v1876, 0
  %v1890 = vsel %vm21, %v1877, 0
  %v1893 = vsel %vm21, %v1878, 0
  %v1896 = vsel %vm21, %v1879, 0
  %v1899 = vsel %vm21, %v1880, 0
  %v1902 = vsel %vm21, %v1881, 0
  %v1905 = vsel %vm21, %v1882, 0
  %v1908 = vsel %vm21, %v1883, 0
  %v1911 = vsel %vm638, %v1885, 0
  %1913 = vmatprep.subr.bf16.mxu0 0
  %1914 = vmatpush1.bf16.msra.mxu0 0
  %1915 = vmatprep.subr.bf16.mxu0 0
  %1916 = vmatpush1.bf16.msra.mxu0 0
  %1917 = vmatprep.subr.bf16.mxu0 0
  %1918 = vmatpush1.bf16.msra.mxu0 0
  %1919 = vmatprep.subr.bf16.mxu0 0
  %1920 = vmatpush1.bf16.msra.mxu0 0
  %1921 = vmatprep.subr.bf16.mxu0 0
  %1922 = vmatpush1.bf16.msra.mxu0 0
  %1923 = vmatprep.subr.bf16.mxu0 0
  %1924 = vmatpush1.bf16.msra.mxu0 0
  %1925 = vmatprep.subr.bf16.mxu0 0
  %1926 = vmatpush1.bf16.msra.mxu0 0
  %1927 = vmatprep.subr.bf16.mxu0 0
  %1928 = vmatpush1.bf16.msra.mxu0 %v1911
  %1929 = vmatprep.subr.bf16.mxu0 0
  %1930 = vmatpush2.bf16.msra.mxu0 0
  %1931 = vmatprep.subr.bf16.mxu0 0
  %1932 = vmatpush2.bf16.msra.mxu0 0
  %1933 = vmatprep.subr.bf16.mxu0 0
  %1934 = vmatpush2.bf16.msra.mxu0 0
  %1935 = vmatprep.subr.bf16.mxu0 0
  %1936 = vmatpush2.bf16.msra.mxu0 0
  %1937 = vmatprep.subr.bf16.mxu0 0
  %1938 = vmatpush2.bf16.msra.mxu0 0
  %1939 = vmatprep.subr.bf16.mxu0 0
  %1940 = vmatpush2.bf16.msra.mxu0 0
  %1941 = vmatprep.subr.bf16.mxu0 0
  %1942 = vmatpush2.bf16.msra.mxu0 0
  %1943 = vmatprep.subr.bf16.mxu0 0
  %1944 = vmatpush2.bf16.msra.mxu0 0
  %1945 = vmatprep.mubr.bf16.mxu0 0
  %1946 = vmatmul.mubr.bf16.gmra.mxu0 %v1887
  %v1947 = vpop.f32.mrf.mxu0
  %v1948 = vadd.f32 0.0, %v1947
  %v1949 = vpop.f32.mrf.mxu0
  %v1950 = vpop.f32.mrf.mxu0
  %v1951 = vadd.f32 0.0, %v1950
  %v1952 = vpop.f32.mrf.mxu0
  %1953 = vmatprep.mubr.bf16.mxu0 0
  %1954 = vmatmul.mubr.bf16.gmra.mxu0 %v1890
  %v1955 = vpop.f32.mrf.mxu0
  %v1956 = vadd.f32 0.0, %v1955
  %v1957 = vpop.f32.mrf.mxu0
  %v1958 = vpop.f32.mrf.mxu0
  %v1959 = vadd.f32 0.0, %v1958
  %v1960 = vpop.f32.mrf.mxu0
  %1961 = vmatprep.mubr.bf16.mxu0 0
  %1962 = vmatmul.mubr.bf16.gmra.mxu0 %v1893
  %v1963 = vpop.f32.mrf.mxu0
  %v1964 = vadd.f32 0.0, %v1963
  %v1965 = vpop.f32.mrf.mxu0
  %v1966 = vpop.f32.mrf.mxu0
  %v1967 = vadd.f32 0.0, %v1966
  %v1968 = vpop.f32.mrf.mxu0
  %1969 = vmatprep.mubr.bf16.mxu0 0
  %1970 = vmatmul.mubr.bf16.gmra.mxu0 %v1896
  %v1971 = vpop.f32.mrf.mxu0
  %v1972 = vadd.f32 0.0, %v1971
  %v1973 = vpop.f32.mrf.mxu0
  %v1974 = vpop.f32.mrf.mxu0
  %v1975 = vadd.f32 0.0, %v1974
  %v1976 = vpop.f32.mrf.mxu0
  %1977 = vmatprep.mubr.bf16.mxu0 0
  %1978 = vmatmul.mubr.bf16.gmra.mxu0 %v1899
  %v1979 = vpop.f32.mrf.mxu0
  %v1980 = vadd.f32 0.0, %v1979
  %v1981 = vpop.f32.mrf.mxu0
  %v1982 = vpop.f32.mrf.mxu0
  %v1983 = vadd.f32 0.0, %v1982
  %v1984 = vpop.f32.mrf.mxu0
  %1985 = vmatprep.mubr.bf16.mxu0 0
  %1986 = vmatmul.mubr.bf16.gmra.mxu0 %v1902
  %v1987 = vpop.f32.mrf.mxu0
  %v1988 = vadd.f32 0.0, %v1987
  %v1989 = vpop.f32.mrf.mxu0
  %v1990 = vpop.f32.mrf.mxu0
  %v1991 = vadd.f32 0.0, %v1990
  %v1992 = vpop.f32.mrf.mxu0
  %1993 = vmatprep.mubr.bf16.mxu0 0
  %1994 = vmatmul.mubr.bf16.gmra.mxu0 %v1905
  %v1995 = vpop.f32.mrf.mxu0
  %v1996 = vadd.f32 0.0, %v1995
  %v1997 = vpop.f32.mrf.mxu0
  %v1998 = vpop.f32.mrf.mxu0
  %v1999 = vadd.f32 0.0, %v1998
  %v2000 = vpop.f32.mrf.mxu0
  %2001 = vmatprep.mubr.bf16.mxu0 0
  %2002 = vmatmul.mubr.bf16.gmra.mxu0 %v1908
  %v2003 = vpop.f32.mrf.mxu0
  %v2004 = vadd.f32 0.0, %v2003
  %v2005 = vpop.f32.mrf.mxu0
  %v2006 = vpop.f32.mrf.mxu0
  %v2007 = vadd.f32 0.0, %v2006
  %v2008 = vpop.f32.mrf.mxu0
  %2009 = vdwg.mxu0
  %v2010 = vadd.f32 %v1844, %v1948
  %v2011 = vadd.f32 %v1845, %v1951
  %v2012 = vadd.f32 %v1846, %v1956
  %v2013 = vadd.f32 %v1847, %v1959
  %v2014 = vadd.f32 %v1848, %v1964
  %v2015 = vadd.f32 %v1849, %v1967
  %v2016 = vadd.f32 %v1850, %v1972
  %v2017 = vadd.f32 %v1851, %v1975
  %v2018 = vadd.f32 %v1852, %v1980
  %v2019 = vadd.f32 %v1853, %v1983
  %v2020 = vadd.f32 %v1854, %v1988
  %v2021 = vadd.f32 %v1855, %v1991
  %v2022 = vadd.f32 %v1856, %v1996
  %v2023 = vadd.f32 %v1857, %v1999
  %v2024 = vadd.f32 %v1858, %v2004
  %v2025 = vadd.f32 %v1859, %v2007
  %v2026 = vld [vmem:[%s2] sm:$0x1]
  %v2028 = vlaneseq
  %v2029 = vshrl.u32 %v2028, 7
  %v2030 = vsub.s32 0, %v2029
  %v2031 = vrot.slane %v2026, %v2030
  %v2033 = vadd.f32 %v2010, %v2031
  %v2034 = vadd.f32 %v2011, %v2031
  %v2035 = vadd.f32 %v2012, %v2031
  %v2036 = vadd.f32 %v2013, %v2031
  %v2037 = vadd.f32 %v2014, %v2031
  %v2038 = vadd.f32 %v2015, %v2031
  %v2039 = vadd.f32 %v2016, %v2031
  %v2040 = vadd.f32 %v2017, %v2031
  %v2041 = vadd.f32 %v2018, %v2031
  %v2042 = vadd.f32 %v2019, %v2031
  %v2043 = vadd.f32 %v2020, %v2031
  %v2044 = vadd.f32 %v2021, %v2031
  %v2045 = vadd.f32 %v2022, %v2031
  %v2046 = vadd.f32 %v2023, %v2031
  %v2047 = vadd.f32 %v2024, %v2031
  %v2048 = vadd.f32 %v2025, %v2031
  %v2049 = vmax.f32 %v2033, 0.0
  %v2050 = vmax.f32 %v2034, 0.0
  %v2051 = vmax.f32 %v2035, 0.0
  %v2052 = vmax.f32 %v2036, 0.0
  %v2053 = vmax.f32 %v2037, 0.0
  %v2054 = vmax.f32 %v2038, 0.0
  %v2055 = vmax.f32 %v2039, 0.0
  %v2056 = vmax.f32 %v2040, 0.0
  %v2057 = vmax.f32 %v2041, 0.0
  %v2058 = vmax.f32 %v2042, 0.0
  %v2059 = vmax.f32 %v2043, 0.0
  %v2060 = vmax.f32 %v2044, 0.0
  %v2061 = vmax.f32 %v2045, 0.0
  %v2062 = vmax.f32 %v2046, 0.0
  %v2063 = vmax.f32 %v2047, 0.0
  %v2064 = vmax.f32 %v2048, 0.0
  %s2065 = scalar_lea.vmem [#allocation3], 16
  %2066 = vst.msk [vmem:[%s2065 + $0x1] sm:$0xff] %vm21, %v2049
  %2067 = vst.msk [vmem:[%s2065 + $0x11] sm:$0xff] %vm21, %v2050
  %2068 = vst.msk [vmem:[%s2065 + $0x21] sm:$0xff] %vm21, %v2051
  %2069 = vst.msk [vmem:[%s2065 + $0x31] sm:$0xff] %vm21, %v2052
  %2070 = vst.msk [vmem:[%s2065 + $0x41] sm:$0xff] %vm21, %v2053
  %2071 = vst.msk [vmem:[%s2065 + $0x51] sm:$0xff] %vm21, %v2054
  %2072 = vst.msk [vmem:[%s2065 + $0x61] sm:$0xff] %vm21, %v2055
  %2073 = vst.msk [vmem:[%s2065 + $0x71] sm:$0xff] %vm21, %v2056
  %2074 = vst.msk [vmem:[%s2065 + $0xa1] sm:$0xff] %vm21, %v2057
  %2075 = vst.msk [vmem:[%s2065 + $0xb1] sm:$0xff] %vm21, %v2058
  %2076 = vst.msk [vmem:[%s2065 + $0xc1] sm:$0xff] %vm21, %v2059
  %2077 = vst.msk [vmem:[%s2065 + $0xd1] sm:$0xff] %vm21, %v2060
  %2078 = vst.msk [vmem:[%s2065 + $0xe1] sm:$0xff] %vm21, %v2061
  %2079 = vst.msk [vmem:[%s2065 + $0xf1] sm:$0xff] %vm21, %v2062
  %2080 = vst.msk [vmem:[%s2065 + $0x101] sm:$0xff] %vm21, %v2063
  %2081 = vst.msk [vmem:[%s2065 + $0x111] sm:$0xff] %vm21, %v2064
  %v2082 = vld [vmem:[#allocation3] sm:$0xff]
  %v2083 = vld [vmem:[#allocation3 + $0x10] sm:$0xff]
  %v2084 = vld [vmem:[#allocation3 + $0x20] sm:$0xff]
  %v2085 = vld [vmem:[#allocation3 + $0x30] sm:$0xff]
  %v2086 = vld [vmem:[#allocation3 + $0x40] sm:$0xff]
  %v2087 = vld [vmem:[#allocation3 + $0x50] sm:$0xff]
  %v2088 = vld [vmem:[#allocation3 + $0x60] sm:$0xff]
  %v2089 = vld [vmem:[#allocation3 + $0x70] sm:$0xff]
  %v2090 = vld [vmem:[#allocation3 + $0xa0] sm:$0xff]
  %v2091 = vld [vmem:[#allocation3 + $0xb0] sm:$0xff]
  %v2092 = vld [vmem:[#allocation3 + $0xc0] sm:$0xff]
  %v2093 = vld [vmem:[#allocation3 + $0xd0] sm:$0xff]
  %v2094 = vld [vmem:[#allocation3 + $0xe0] sm:$0xff]
  %v2095 = vld [vmem:[#allocation3 + $0xf0] sm:$0xff]
  %v2096 = vld [vmem:[#allocation3 + $0x100] sm:$0xff]
  %v2097 = vld [vmem:[#allocation3 + $0x110] sm:$0xff]
  %v2098 = vpack.c.bf16 %v2083, %v2082
  %v2099 = vpack.c.bf16 %v2085, %v2084
  %v2100 = vpack.c.bf16 %v2087, %v2086
  %v2101 = vpack.c.bf16 %v2089, %v2088
  %v2102 = vpack.c.bf16 %v2091, %v2090
  %v2103 = vpack.c.bf16 %v2093, %v2092
  %v2104 = vpack.c.bf16 %v2095, %v2094
  %v2105 = vpack.c.bf16 %v2097, %v2096
  %v2106 = vld [vmem:[%s3] sm:$0xf]
  %v2107 = vld [vmem:[#allocation3 + $0x1] sm:$0xff]
  %v2108 = vld [vmem:[#allocation3 + $0x11] sm:$0xff]
  %v2109 = vld [vmem:[#allocation3 + $0x21] sm:$0xff]
  %v2110 = vld [vmem:[#allocation3 + $0x31] sm:$0xff]
  %v2111 = vld [vmem:[#allocation3 + $0x41] sm:$0xff]
  %v2112 = vld [vmem:[#allocation3 + $0x51] sm:$0xff]
  %v2113 = vld [vmem:[#allocation3 + $0x61] sm:$0xff]
  %v2114 = vld [vmem:[#allocation3 + $0x71] sm:$0xff]
  %v2115 = vld [vmem:[#allocation3 + $0xa1] sm:$0xff]
  %v2116 = vld [vmem:[#allocation3 + $0xb1] sm:$0xff]
  %v2117 = vld [vmem:[#allocation3 + $0xc1] sm:$0xff]
  %v2118 = vld [vmem:[#allocation3 + $0xd1] sm:$0xff]
  %v2119 = vld [vmem:[#allocation3 + $0xe1] sm:$0xff]
  %v2120 = vld [vmem:[#allocation3 + $0xf1] sm:$0xff]
  %v2121 = vld [vmem:[#allocation3 + $0x101] sm:$0xff]
  %v2122 = vld [vmem:[#allocation3 + $0x111] sm:$0xff]
  %v2123 = vpack.c.bf16 %v2108, %v2107
  %v2124 = vpack.c.bf16 %v2110, %v2109
  %v2125 = vpack.c.bf16 %v2112, %v2111
  %v2126 = vpack.c.bf16 %v2114, %v2113
  %v2127 = vpack.c.bf16 %v2116, %v2115
  %v2128 = vpack.c.bf16 %v2118, %v2117
  %v2129 = vpack.c.bf16 %v2120, %v2119
  %v2130 = vpack.c.bf16 %v2122, %v2121
  %s2131 = scalar_lea.vmem %s3, 4
  %v2132 = vld [vmem:[%s2131] sm:$0xf]
  %v2134 = vsel %vm21, %v2123, 0
  %v2137 = vsel %vm21, %v2124, 0
  %v2140 = vsel %vm21, %v2125, 0
  %v2143 = vsel %vm21, %v2126, 0
  %v2146 = vsel %vm21, %v2127, 0
  %v2149 = vsel %vm21, %v2128, 0
  %v2152 = vsel %vm21, %v2129, 0
  %v2155 = vsel %vm21, %v2130, 0
  %v2158 = vsel %vm638, %v2132, 0
  %2160 = vmatprep.subr.bf16.mxu0 0
  %2161 = vmatpush1.bf16.msra.mxu0 0
  %2162 = vmatprep.subr.bf16.mxu0 0
  %2163 = vmatpush1.bf16.msra.mxu0 0
  %2164 = vmatprep.subr.bf16.mxu0 0
  %2165 = vmatpush1.bf16.msra.mxu0 0
  %2166 = vmatprep.subr.bf16.mxu0 0
  %2167 = vmatpush1.bf16.msra.mxu0 0
  %2168 = vmatprep.subr.bf16.mxu0 0
  %2169 = vmatpush1.bf16.msra.mxu0 0
  %2170 = vmatprep.subr.bf16.mxu0 0
  %2171 = vmatpush1.bf16.msra.mxu0 0
  %2172 = vmatprep.subr.bf16.mxu0 0
  %2173 = vmatpush1.bf16.msra.mxu0 0
  %2174 = vmatprep.subr.bf16.mxu0 0
  %2175 = vmatpush1.bf16.msra.mxu0 %v2158
  %2176 = vmatprep.subr.bf16.mxu0 0
  %2177 = vmatpush2.bf16.msra.mxu0 0
  %2178 = vmatprep.subr.bf16.mxu0 0
  %2179 = vmatpush2.bf16.msra.mxu0 0
  %2180 = vmatprep.subr.bf16.mxu0 0
  %2181 = vmatpush2.bf16.msra.mxu0 0
  %2182 = vmatprep.subr.bf16.mxu0 0
  %2183 = vmatpush2.bf16.msra.mxu0 0
  %2184 = vmatprep.subr.bf16.mxu0 0
  %2185 = vmatpush2.bf16.msra.mxu0 0
  %2186 = vmatprep.subr.bf16.mxu0 0
  %2187 = vmatpush2.bf16.msra.mxu0 0
  %2188 = vmatprep.subr.bf16.mxu0 0
  %2189 = vmatpush2.bf16.msra.mxu0 0
  %2190 = vmatprep.subr.bf16.mxu0 0
  %2191 = vmatpush2.bf16.msra.mxu0 0
  %2192 = vmatprep.mubr.bf16.mxu0 0
  %2193 = vmatmul.mubr.bf16.gmra.mxu0 %v2134
  %v2194 = vpop.f32.mrf.mxu0
  %v2195 = vadd.f32 0.0, %v2194
  %v2196 = vpop.f32.mrf.mxu0
  %v2197 = vpop.f32.mrf.mxu0
  %v2198 = vadd.f32 0.0, %v2197
  %v2199 = vpop.f32.mrf.mxu0
  %2200 = vmatprep.mubr.bf16.mxu0 0
  %2201 = vmatmul.mubr.bf16.gmra.mxu0 %v2137
  %v2202 = vpop.f32.mrf.mxu0
  %v2203 = vadd.f32 0.0, %v2202
  %v2204 = vpop.f32.mrf.mxu0
  %v2205 = vpop.f32.mrf.mxu0
  %v2206 = vadd.f32 0.0, %v2205
  %v2207 = vpop.f32.mrf.mxu0
  %2208 = vmatprep.mubr.bf16.mxu0 0
  %2209 = vmatmul.mubr.bf16.gmra.mxu0 %v2140
  %v2210 = vpop.f32.mrf.mxu0
  %v2211 = vadd.f32 0.0, %v2210
  %v2212 = vpop.f32.mrf.mxu0
  %v2213 = vpop.f32.mrf.mxu0
  %v2214 = vadd.f32 0.0, %v2213
  %v2215 = vpop.f32.mrf.mxu0
  %2216 = vmatprep.mubr.bf16.mxu0 0
  %2217 = vmatmul.mubr.bf16.gmra.mxu0 %v2143
  %v2218 = vpop.f32.mrf.mxu0
  %v2219 = vadd.f32 0.0, %v2218
  %v2220 = vpop.f32.mrf.mxu0
  %v2221 = vpop.f32.mrf.mxu0
  %v2222 = vadd.f32 0.0, %v2221
  %v2223 = vpop.f32.mrf.mxu0
  %2224 = vmatprep.mubr.bf16.mxu0 0
  %2225 = vmatmul.mubr.bf16.gmra.mxu0 %v2146
  %v2226 = vpop.f32.mrf.mxu0
  %v2227 = vadd.f32 0.0, %v2226
  %v2228 = vpop.f32.mrf.mxu0
  %v2229 = vpop.f32.mrf.mxu0
  %v2230 = vadd.f32 0.0, %v2229
  %v2231 = vpop.f32.mrf.mxu0
  %2232 = vmatprep.mubr.bf16.mxu0 0
  %2233 = vmatmul.mubr.bf16.gmra.mxu0 %v2149
  %v2234 = vpop.f32.mrf.mxu0
  %v2235 = vadd.f32 0.0, %v2234
  %v2236 = vpop.f32.mrf.mxu0
  %v2237 = vpop.f32.mrf.mxu0
  %v2238 = vadd.f32 0.0, %v2237
  %v2239 = vpop.f32.mrf.mxu0
  %2240 = vmatprep.mubr.bf16.mxu0 0
  %2241 = vmatmul.mubr.bf16.gmra.mxu0 %v2152
  %v2242 = vpop.f32.mrf.mxu0
  %v2243 = vadd.f32 0.0, %v2242
  %v2244 = vpop.f32.mrf.mxu0
  %v2245 = vpop.f32.mrf.mxu0
  %v2246 = vadd.f32 0.0, %v2245
  %v2247 = vpop.f32.mrf.mxu0
  %2248 = vmatprep.mubr.bf16.mxu0 0
  %2249 = vmatmul.mubr.bf16.gmra.mxu0 %v2155
  %v2250 = vpop.f32.mrf.mxu0
  %v2251 = vadd.f32 0.0, %v2250
  %v2252 = vpop.f32.mrf.mxu0
  %v2253 = vpop.f32.mrf.mxu0
  %v2254 = vadd.f32 0.0, %v2253
  %v2255 = vpop.f32.mrf.mxu0
  %2256 = vdwg.mxu0
  %v2258 = vsel %vm21, %v2098, 0
  %v2261 = vsel %vm21, %v2099, 0
  %v2264 = vsel %vm21, %v2100, 0
  %v2267 = vsel %vm21, %v2101, 0
  %v2270 = vsel %vm21, %v2102, 0
  %v2273 = vsel %vm21, %v2103, 0
  %v2276 = vsel %vm21, %v2104, 0
  %v2279 = vsel %vm21, %v2105, 0
  %v2282 = vsel %vm638, %v2106, 0
  %2284 = vmatprep.subr.bf16.mxu0 0
  %2285 = vmatpush1.bf16.msra.mxu0 0
  %2286 = vmatprep.subr.bf16.mxu0 0
  %2287 = vmatpush1.bf16.msra.mxu0 0
  %2288 = vmatprep.subr.bf16.mxu0 0
  %2289 = vmatpush1.bf16.msra.mxu0 0
  %2290 = vmatprep.subr.bf16.mxu0 0
  %2291 = vmatpush1.bf16.msra.mxu0 0
  %2292 = vmatprep.subr.bf16.mxu0 0
  %2293 = vmatpush1.bf16.msra.mxu0 0
  %2294 = vmatprep.subr.bf16.mxu0 0
  %2295 = vmatpush1.bf16.msra.mxu0 0
  %2296 = vmatprep.subr.bf16.mxu0 0
  %2297 = vmatpush1.bf16.msra.mxu0 0
  %2298 = vmatprep.subr.bf16.mxu0 0
  %2299 = vmatpush1.bf16.msra.mxu0 %v2282
  %2300 = vmatprep.subr.bf16.mxu0 0
  %2301 = vmatpush2.bf16.msra.mxu0 0
  %2302 = vmatprep.subr.bf16.mxu0 0
  %2303 = vmatpush2.bf16.msra.mxu0 0
  %2304 = vmatprep.subr.bf16.mxu0 0
  %2305 = vmatpush2.bf16.msra.mxu0 0
  %2306 = vmatprep.subr.bf16.mxu0 0
  %2307 = vmatpush2.bf16.msra.mxu0 0
  %2308 = vmatprep.subr.bf16.mxu0 0
  %2309 = vmatpush2.bf16.msra.mxu0 0
  %2310 = vmatprep.subr.bf16.mxu0 0
  %2311 = vmatpush2.bf16.msra.mxu0 0
  %2312 = vmatprep.subr.bf16.mxu0 0
  %2313 = vmatpush2.bf16.msra.mxu0 0
  %2314 = vmatprep.subr.bf16.mxu0 0
  %2315 = vmatpush2.bf16.msra.mxu0 0
  %2316 = vmatprep.mubr.bf16.mxu0 0
  %2317 = vmatmul.mubr.bf16.gmra.mxu0 %v2258
  %v2318 = vpop.f32.mrf.mxu0
  %v2319 = vadd.f32 %v2195, %v2318
  %v2320 = vpop.f32.mrf.mxu0
  %v2321 = vpop.f32.mrf.mxu0
  %v2322 = vadd.f32 %v2198, %v2321
  %v2323 = vpop.f32.mrf.mxu0
  %2324 = vmatprep.mubr.bf16.mxu0 0
  %2325 = vmatmul.mubr.bf16.gmra.mxu0 %v2261
  %v2326 = vpop.f32.mrf.mxu0
  %v2327 = vadd.f32 %v2203, %v2326
  %v2328 = vpop.f32.mrf.mxu0
  %v2329 = vpop.f32.mrf.mxu0
  %v2330 = vadd.f32 %v2206, %v2329
  %v2331 = vpop.f32.mrf.mxu0
  %2332 = vmatprep.mubr.bf16.mxu0 0
  %2333 = vmatmul.mubr.bf16.gmra.mxu0 %v2264
  %v2334 = vpop.f32.mrf.mxu0
  %v2335 = vadd.f32 %v2211, %v2334
  %v2336 = vpop.f32.mrf.mxu0
  %v2337 = vpop.f32.mrf.mxu0
  %v2338 = vadd.f32 %v2214, %v2337
  %v2339 = vpop.f32.mrf.mxu0
  %2340 = vmatprep.mubr.bf16.mxu0 0
  %2341 = vmatmul.mubr.bf16.gmra.mxu0 %v2267
  %v2342 = vpop.f32.mrf.mxu0
  %v2343 = vadd.f32 %v2219, %v2342
  %v2344 = vpop.f32.mrf.mxu0
  %v2345 = vpop.f32.mrf.mxu0
  %v2346 = vadd.f32 %v2222, %v2345
  %v2347 = vpop.f32.mrf.mxu0
  %2348 = vmatprep.mubr.bf16.mxu0 0
  %2349 = vmatmul.mubr.bf16.gmra.mxu0 %v2270
  %v2350 = vpop.f32.mrf.mxu0
  %v2351 = vadd.f32 %v2227, %v2350
  %v2352 = vpop.f32.mrf.mxu0
  %v2353 = vpop.f32.mrf.mxu0
  %v2354 = vadd.f32 %v2230, %v2353
  %v2355 = vpop.f32.mrf.mxu0
  %2356 = vmatprep.mubr.bf16.mxu0 0
  %2357 = vmatmul.mubr.bf16.gmra.mxu0 %v2273
  %v2358 = vpop.f32.mrf.mxu0
  %v2359 = vadd.f32 %v2235, %v2358
  %v2360 = vpop.f32.mrf.mxu0
  %v2361 = vpop.f32.mrf.mxu0
  %v2362 = vadd.f32 %v2238, %v2361
  %v2363 = vpop.f32.mrf.mxu0
  %2364 = vmatprep.mubr.bf16.mxu0 0
  %2365 = vmatmul.mubr.bf16.gmra.mxu0 %v2276
  %v2366 = vpop.f32.mrf.mxu0
  %v2367 = vadd.f32 %v2243, %v2366
  %v2368 = vpop.f32.mrf.mxu0
  %v2369 = vpop.f32.mrf.mxu0
  %v2370 = vadd.f32 %v2246, %v2369
  %v2371 = vpop.f32.mrf.mxu0
  %2372 = vmatprep.mubr.bf16.mxu0 0
  %2373 = vmatmul.mubr.bf16.gmra.mxu0 %v2279
  %v2374 = vpop.f32.mrf.mxu0
  %v2375 = vadd.f32 %v2251, %v2374
  %v2376 = vpop.f32.mrf.mxu0
  %v2377 = vpop.f32.mrf.mxu0
  %v2378 = vadd.f32 %v2254, %v2377
  %v2379 = vpop.f32.mrf.mxu0
  %2380 = vdwg.mxu0
  %v2381 = vld [vmem:[#allocation3 + $0x2] sm:$0xff]
  %v2382 = vld [vmem:[#allocation3 + $0x12] sm:$0xff]
  %v2383 = vld [vmem:[#allocation3 + $0x22] sm:$0xff]
  %v2384 = vld [vmem:[#allocation3 + $0x32] sm:$0xff]
  %v2385 = vld [vmem:[#allocation3 + $0x42] sm:$0xff]
  %v2386 = vld [vmem:[#allocation3 + $0x52] sm:$0xff]
  %v2387 = vld [vmem:[#allocation3 + $0x62] sm:$0xff]
  %v2388 = vld [vmem:[#allocation3 + $0x72] sm:$0xff]
  %v2389 = vld [vmem:[#allocation3 + $0xa2] sm:$0xff]
  %v2390 = vld [vmem:[#allocation3 + $0xb2] sm:$0xff]
  %v2391 = vld [vmem:[#allocation3 + $0xc2] sm:$0xff]
  %v2392 = vld [vmem:[#allocation3 + $0xd2] sm:$0xff]
  %v2393 = vld [vmem:[#allocation3 + $0xe2] sm:$0xff]
  %v2394 = vld [vmem:[#allocation3 + $0xf2] sm:$0xff]
  %v2395 = vld [vmem:[#allocation3 + $0x102] sm:$0xff]
  %v2396 = vld [vmem:[#allocation3 + $0x112] sm:$0xff]
  %v2397 = vpack.c.bf16 %v2382, %v2381
  %v2398 = vpack.c.bf16 %v2384, %v2383
  %v2399 = vpack.c.bf16 %v2386, %v2385
  %v2400 = vpack.c.bf16 %v2388, %v2387
  %v2401 = vpack.c.bf16 %v2390, %v2389
  %v2402 = vpack.c.bf16 %v2392, %v2391
  %v2403 = vpack.c.bf16 %v2394, %v2393
  %v2404 = vpack.c.bf16 %v2396, %v2395
  %s2405 = scalar_lea.vmem %s3, 8
  %v2406 = vld [vmem:[%s2405] sm:$0xf]
  %v2408 = vsel %vm21, %v2397, 0
  %v2411 = vsel %vm21, %v2398, 0
  %v2414 = vsel %vm21, %v2399, 0
  %v2417 = vsel %vm21, %v2400, 0
  %v2420 = vsel %vm21, %v2401, 0
  %v2423 = vsel %vm21, %v2402, 0
  %v2426 = vsel %vm21, %v2403, 0
  %v2429 = vsel %vm21, %v2404, 0
  %v2432 = vsel %vm638, %v2406, 0
  %2434 = vmatprep.subr.bf16.mxu0 0
  %2435 = vmatpush1.bf16.msra.mxu0 0
  %2436 = vmatprep.subr.bf16.mxu0 0
  %2437 = vmatpush1.bf16.msra.mxu0 0
  %2438 = vmatprep.subr.bf16.mxu0 0
  %2439 = vmatpush1.bf16.msra.mxu0 0
  %2440 = vmatprep.subr.bf16.mxu0 0
  %2441 = vmatpush1.bf16.msra.mxu0 0
  %2442 = vmatprep.subr.bf16.mxu0 0
  %2443 = vmatpush1.bf16.msra.mxu0 0
  %2444 = vmatprep.subr.bf16.mxu0 0
  %2445 = vmatpush1.bf16.msra.mxu0 0
  %2446 = vmatprep.subr.bf16.mxu0 0
  %2447 = vmatpush1.bf16.msra.mxu0 0
  %2448 = vmatprep.subr.bf16.mxu0 0
  %2449 = vmatpush1.bf16.msra.mxu0 %v2432
  %2450 = vmatprep.subr.bf16.mxu0 0
  %2451 = vmatpush2.bf16.msra.mxu0 0
  %2452 = vmatprep.subr.bf16.mxu0 0
  %2453 = vmatpush2.bf16.msra.mxu0 0
  %2454 = vmatprep.subr.bf16.mxu0 0
  %2455 = vmatpush2.bf16.msra.mxu0 0
  %2456 = vmatprep.subr.bf16.mxu0 0
  %2457 = vmatpush2.bf16.msra.mxu0 0
  %2458 = vmatprep.subr.bf16.mxu0 0
  %2459 = vmatpush2.bf16.msra.mxu0 0
  %2460 = vmatprep.subr.bf16.mxu0 0
  %2461 = vmatpush2.bf16.msra.mxu0 0
  %2462 = vmatprep.subr.bf16.mxu0 0
  %2463 = vmatpush2.bf16.msra.mxu0 0
  %2464 = vmatprep.subr.bf16.mxu0 0
  %2465 = vmatpush2.bf16.msra.mxu0 0
  %2466 = vmatprep.mubr.bf16.mxu0 0
  %2467 = vmatmul.mubr.bf16.gmra.mxu0 %v2408
  %v2468 = vpop.f32.mrf.mxu0
  %v2469 = vadd.f32 0.0, %v2468
  %v2470 = vpop.f32.mrf.mxu0
  %v2471 = vpop.f32.mrf.mxu0
  %v2472 = vadd.f32 0.0, %v2471
  %v2473 = vpop.f32.mrf.mxu0
  %2474 = vmatprep.mubr.bf16.mxu0 0
  %2475 = vmatmul.mubr.bf16.gmra.mxu0 %v2411
  %v2476 = vpop.f32.mrf.mxu0
  %v2477 = vadd.f32 0.0, %v2476
  %v2478 = vpop.f32.mrf.mxu0
  %v2479 = vpop.f32.mrf.mxu0
  %v2480 = vadd.f32 0.0, %v2479
  %v2481 = vpop.f32.mrf.mxu0
  %2482 = vmatprep.mubr.bf16.mxu0 0
  %2483 = vmatmul.mubr.bf16.gmra.mxu0 %v2414
  %v2484 = vpop.f32.mrf.mxu0
  %v2485 = vadd.f32 0.0, %v2484
  %v2486 = vpop.f32.mrf.mxu0
  %v2487 = vpop.f32.mrf.mxu0
  %v2488 = vadd.f32 0.0, %v2487
  %v2489 = vpop.f32.mrf.mxu0
  %2490 = vmatprep.mubr.bf16.mxu0 0
  %2491 = vmatmul.mubr.bf16.gmra.mxu0 %v2417
  %v2492 = vpop.f32.mrf.mxu0
  %v2493 = vadd.f32 0.0, %v2492
  %v2494 = vpop.f32.mrf.mxu0
  %v2495 = vpop.f32.mrf.mxu0
  %v2496 = vadd.f32 0.0, %v2495
  %v2497 = vpop.f32.mrf.mxu0
  %2498 = vmatprep.mubr.bf16.mxu0 0
  %2499 = vmatmul.mubr.bf16.gmra.mxu0 %v2420
  %v2500 = vpop.f32.mrf.mxu0
  %v2501 = vadd.f32 0.0, %v2500
  %v2502 = vpop.f32.mrf.mxu0
  %v2503 = vpop.f32.mrf.mxu0
  %v2504 = vadd.f32 0.0, %v2503
  %v2505 = vpop.f32.mrf.mxu0
  %2506 = vmatprep.mubr.bf16.mxu0 0
  %2507 = vmatmul.mubr.bf16.gmra.mxu0 %v2423
  %v2508 = vpop.f32.mrf.mxu0
  %v2509 = vadd.f32 0.0, %v2508
  %v2510 = vpop.f32.mrf.mxu0
  %v2511 = vpop.f32.mrf.mxu0
  %v2512 = vadd.f32 0.0, %v2511
  %v2513 = vpop.f32.mrf.mxu0
  %2514 = vmatprep.mubr.bf16.mxu0 0
  %2515 = vmatmul.mubr.bf16.gmra.mxu0 %v2426
  %v2516 = vpop.f32.mrf.mxu0
  %v2517 = vadd.f32 0.0, %v2516
  %v2518 = vpop.f32.mrf.mxu0
  %v2519 = vpop.f32.mrf.mxu0
  %v2520 = vadd.f32 0.0, %v2519
  %v2521 = vpop.f32.mrf.mxu0
  %2522 = vmatprep.mubr.bf16.mxu0 0
  %2523 = vmatmul.mubr.bf16.gmra.mxu0 %v2429
  %v2524 = vpop.f32.mrf.mxu0
  %v2525 = vadd.f32 0.0, %v2524
  %v2526 = vpop.f32.mrf.mxu0
  %v2527 = vpop.f32.mrf.mxu0
  %v2528 = vadd.f32 0.0, %v2527
  %v2529 = vpop.f32.mrf.mxu0
  %2530 = vdwg.mxu0
  %v2531 = vadd.f32 %v2319, %v2469
  %v2532 = vadd.f32 %v2322, %v2472
  %v2533 = vadd.f32 %v2327, %v2477
  %v2534 = vadd.f32 %v2330, %v2480
  %v2535 = vadd.f32 %v2335, %v2485
  %v2536 = vadd.f32 %v2338, %v2488
  %v2537 = vadd.f32 %v2343, %v2493
  %v2538 = vadd.f32 %v2346, %v2496
  %v2539 = vadd.f32 %v2351, %v2501
  %v2540 = vadd.f32 %v2354, %v2504
  %v2541 = vadd.f32 %v2359, %v2509
  %v2542 = vadd.f32 %v2362, %v2512
  %v2543 = vadd.f32 %v2367, %v2517
  %v2544 = vadd.f32 %v2370, %v2520
  %v2545 = vadd.f32 %v2375, %v2525
  %v2546 = vadd.f32 %v2378, %v2528
  %v2547 = vld [vmem:[%s2065] sm:$0xff]
  %v2548 = vld [vmem:[%s2065 + $0x10] sm:$0xff]
  %v2549 = vld [vmem:[%s2065 + $0x20] sm:$0xff]
  %v2550 = vld [vmem:[%s2065 + $0x30] sm:$0xff]
  %v2551 = vld [vmem:[%s2065 + $0x40] sm:$0xff]
  %v2552 = vld [vmem:[%s2065 + $0x50] sm:$0xff]
  %v2553 = vld [vmem:[%s2065 + $0x60] sm:$0xff]
  %v2554 = vld [vmem:[%s2065 + $0x70] sm:$0xff]
  %v2555 = vld [vmem:[%s2065 + $0xa0] sm:$0xff]
  %v2556 = vld [vmem:[%s2065 + $0xb0] sm:$0xff]
  %v2557 = vld [vmem:[%s2065 + $0xc0] sm:$0xff]
  %v2558 = vld [vmem:[%s2065 + $0xd0] sm:$0xff]
  %v2559 = vld [vmem:[%s2065 + $0xe0] sm:$0xff]
  %v2560 = vld [vmem:[%s2065 + $0xf0] sm:$0xff]
  %v2561 = vld [vmem:[%s2065 + $0x100] sm:$0xff]
  %v2562 = vld [vmem:[%s2065 + $0x110] sm:$0xff]
  %v2563 = vpack.c.bf16 %v2548, %v2547
  %v2564 = vpack.c.bf16 %v2550, %v2549
  %v2565 = vpack.c.bf16 %v2552, %v2551
  %v2566 = vpack.c.bf16 %v2554, %v2553
  %v2567 = vpack.c.bf16 %v2556, %v2555
  %v2568 = vpack.c.bf16 %v2558, %v2557
  %v2569 = vpack.c.bf16 %v2560, %v2559
  %v2570 = vpack.c.bf16 %v2562, %v2561
  %s2571 = scalar_lea.vmem %s3, 12
  %v2572 = vld [vmem:[%s2571] sm:$0xf]
  %v2574 = vsel %vm21, %v2563, 0
  %v2577 = vsel %vm21, %v2564, 0
  %v2580 = vsel %vm21, %v2565, 0
  %v2583 = vsel %vm21, %v2566, 0
  %v2586 = vsel %vm21, %v2567, 0
  %v2589 = vsel %vm21, %v2568, 0
  %v2592 = vsel %vm21, %v2569, 0
  %v2595 = vsel %vm21, %v2570, 0
  %v2598 = vsel %vm638, %v2572, 0
  %2600 = vmatprep.subr.bf16.mxu0 0
  %2601 = vmatpush1.bf16.msra.mxu0 0
  %2602 = vmatprep.subr.bf16.mxu0 0
  %2603 = vmatpush1.bf16.msra.mxu0 0
  %2604 = vmatprep.subr.bf16.mxu0 0
  %2605 = vmatpush1.bf16.msra.mxu0 0
  %2606 = vmatprep.subr.bf16.mxu0 0
  %2607 = vmatpush1.bf16.msra.mxu0 0
  %2608 = vmatprep.subr.bf16.mxu0 0
  %2609 = vmatpush1.bf16.msra.mxu0 0
  %2610 = vmatprep.subr.bf16.mxu0 0
  %2611 = vmatpush1.bf16.msra.mxu0 0
  %2612 = vmatprep.subr.bf16.mxu0 0
  %2613 = vmatpush1.bf16.msra.mxu0 0
  %2614 = vmatprep.subr.bf16.mxu0 0
  %2615 = vmatpush1.bf16.msra.mxu0 %v2598
  %2616 = vmatprep.subr.bf16.mxu0 0
  %2617 = vmatpush2.bf16.msra.mxu0 0
  %2618 = vmatprep.subr.bf16.mxu0 0
  %2619 = vmatpush2.bf16.msra.mxu0 0
  %2620 = vmatprep.subr.bf16.mxu0 0
  %2621 = vmatpush2.bf16.msra.mxu0 0
  %2622 = vmatprep.subr.bf16.mxu0 0
  %2623 = vmatpush2.bf16.msra.mxu0 0
  %2624 = vmatprep.subr.bf16.mxu0 0
  %2625 = vmatpush2.bf16.msra.mxu0 0
  %2626 = vmatprep.subr.bf16.mxu0 0
  %2627 = vmatpush2.bf16.msra.mxu0 0
  %2628 = vmatprep.subr.bf16.mxu0 0
  %2629 = vmatpush2.bf16.msra.mxu0 0
  %2630 = vmatprep.subr.bf16.mxu0 0
  %2631 = vmatpush2.bf16.msra.mxu0 0
  %2632 = vmatprep.mubr.bf16.mxu0 0
  %2633 = vmatmul.mubr.bf16.gmra.mxu0 %v2574
  %v2634 = vpop.f32.mrf.mxu0
  %v2635 = vadd.f32 0.0, %v2634
  %v2636 = vpop.f32.mrf.mxu0
  %v2637 = vpop.f32.mrf.mxu0
  %v2638 = vadd.f32 0.0, %v2637
  %v2639 = vpop.f32.mrf.mxu0
  %2640 = vmatprep.mubr.bf16.mxu0 0
  %2641 = vmatmul.mubr.bf16.gmra.mxu0 %v2577
  %v2642 = vpop.f32.mrf.mxu0
  %v2643 = vadd.f32 0.0, %v2642
  %v2644 = vpop.f32.mrf.mxu0
  %v2645 = vpop.f32.mrf.mxu0
  %v2646 = vadd.f32 0.0, %v2645
  %v2647 = vpop.f32.mrf.mxu0
  %2648 = vmatprep.mubr.bf16.mxu0 0
  %2649 = vmatmul.mubr.bf16.gmra.mxu0 %v2580
  %v2650 = vpop.f32.mrf.mxu0
  %v2651 = vadd.f32 0.0, %v2650
  %v2652 = vpop.f32.mrf.mxu0
  %v2653 = vpop.f32.mrf.mxu0
  %v2654 = vadd.f32 0.0, %v2653
  %v2655 = vpop.f32.mrf.mxu0
  %2656 = vmatprep.mubr.bf16.mxu0 0
  %2657 = vmatmul.mubr.bf16.gmra.mxu0 %v2583
  %v2658 = vpop.f32.mrf.mxu0
  %v2659 = vadd.f32 0.0, %v2658
  %v2660 = vpop.f32.mrf.mxu0
  %v2661 = vpop.f32.mrf.mxu0
  %v2662 = vadd.f32 0.0, %v2661
  %v2663 = vpop.f32.mrf.mxu0
  %2664 = vmatprep.mubr.bf16.mxu0 0
  %2665 = vmatmul.mubr.bf16.gmra.mxu0 %v2586
  %v2666 = vpop.f32.mrf.mxu0
  %v2667 = vadd.f32 0.0, %v2666
  %v2668 = vpop.f32.mrf.mxu0
  %v2669 = vpop.f32.mrf.mxu0
  %v2670 = vadd.f32 0.0, %v2669
  %v2671 = vpop.f32.mrf.mxu0
  %2672 = vmatprep.mubr.bf16.mxu0 0
  %2673 = vmatmul.mubr.bf16.gmra.mxu0 %v2589
  %v2674 = vpop.f32.mrf.mxu0
  %v2675 = vadd.f32 0.0, %v2674
  %v2676 = vpop.f32.mrf.mxu0
  %v2677 = vpop.f32.mrf.mxu0
  %v2678 = vadd.f32 0.0, %v2677
  %v2679 = vpop.f32.mrf.mxu0
  %2680 = vmatprep.mubr.bf16.mxu0 0
  %2681 = vmatmul.mubr.bf16.gmra.mxu0 %v2592
  %v2682 = vpop.f32.mrf.mxu0
  %v2683 = vadd.f32 0.0, %v2682
  %v2684 = vpop.f32.mrf.mxu0
  %v2685 = vpop.f32.mrf.mxu0
  %v2686 = vadd.f32 0.0, %v2685
  %v2687 = vpop.f32.mrf.mxu0
  %2688 = vmatprep.mubr.bf16.mxu0 0
  %2689 = vmatmul.mubr.bf16.gmra.mxu0 %v2595
  %v2690 = vpop.f32.mrf.mxu0
  %v2691 = vadd.f32 0.0, %v2690
  %v2692 = vpop.f32.mrf.mxu0
  %v2693 = vpop.f32.mrf.mxu0
  %v2694 = vadd.f32 0.0, %v2693
  %v2695 = vpop.f32.mrf.mxu0
  %2696 = vdwg.mxu0
  %v2697 = vadd.f32 %v2531, %v2635
  %v2698 = vadd.f32 %v2532, %v2638
  %v2699 = vadd.f32 %v2533, %v2643
  %v2700 = vadd.f32 %v2534, %v2646
  %v2701 = vadd.f32 %v2535, %v2651
  %v2702 = vadd.f32 %v2536, %v2654
  %v2703 = vadd.f32 %v2537, %v2659
  %v2704 = vadd.f32 %v2538, %v2662
  %v2705 = vadd.f32 %v2539, %v2667
  %v2706 = vadd.f32 %v2540, %v2670
  %v2707 = vadd.f32 %v2541, %v2675
  %v2708 = vadd.f32 %v2542, %v2678
  %v2709 = vadd.f32 %v2543, %v2683
  %v2710 = vadd.f32 %v2544, %v2686
  %v2711 = vadd.f32 %v2545, %v2691
  %v2712 = vadd.f32 %v2546, %v2694
  %v2713 = vld [vmem:[%s2065 + $0x1] sm:$0xff]
  %v2714 = vld [vmem:[%s2065 + $0x11] sm:$0xff]
  %v2715 = vld [vmem:[%s2065 + $0x21] sm:$0xff]
  %v2716 = vld [vmem:[%s2065 + $0x31] sm:$0xff]
  %v2717 = vld [vmem:[%s2065 + $0x41] sm:$0xff]
  %v2718 = vld [vmem:[%s2065 + $0x51] sm:$0xff]
  %v2719 = vld [vmem:[%s2065 + $0x61] sm:$0xff]
  %v2720 = vld [vmem:[%s2065 + $0x71] sm:$0xff]
  %v2721 = vld [vmem:[%s2065 + $0xa1] sm:$0xff]
  %v2722 = vld [vmem:[%s2065 + $0xb1] sm:$0xff]
  %v2723 = vld [vmem:[%s2065 + $0xc1] sm:$0xff]
  %v2724 = vld [vmem:[%s2065 + $0xd1] sm:$0xff]
  %v2725 = vld [vmem:[%s2065 + $0xe1] sm:$0xff]
  %v2726 = vld [vmem:[%s2065 + $0xf1] sm:$0xff]
  %v2727 = vld [vmem:[%s2065 + $0x101] sm:$0xff]
  %v2728 = vld [vmem:[%s2065 + $0x111] sm:$0xff]
  %v2729 = vpack.c.bf16 %v2714, %v2713
  %v2730 = vpack.c.bf16 %v2716, %v2715
  %v2731 = vpack.c.bf16 %v2718, %v2717
  %v2732 = vpack.c.bf16 %v2720, %v2719
  %v2733 = vpack.c.bf16 %v2722, %v2721
  %v2734 = vpack.c.bf16 %v2724, %v2723
  %v2735 = vpack.c.bf16 %v2726, %v2725
  %v2736 = vpack.c.bf16 %v2728, %v2727
  %s2737 = scalar_lea.vmem %s3, 16
  %v2738 = vld [vmem:[%s2737] sm:$0xf]
  %v2740 = vsel %vm21, %v2729, 0
  %v2743 = vsel %vm21, %v2730, 0
  %v2746 = vsel %vm21, %v2731, 0
  %v2749 = vsel %vm21, %v2732, 0
  %v2752 = vsel %vm21, %v2733, 0
  %v2755 = vsel %vm21, %v2734, 0
  %v2758 = vsel %vm21, %v2735, 0
  %v2761 = vsel %vm21, %v2736, 0
  %v2764 = vsel %vm638, %v2738, 0
  %2766 = vmatprep.subr.bf16.mxu0 0
  %2767 = vmatpush1.bf16.msra.mxu0 0
  %2768 = vmatprep.subr.bf16.mxu0 0
  %2769 = vmatpush1.bf16.msra.mxu0 0
  %2770 = vmatprep.subr.bf16.mxu0 0
  %2771 = vmatpush1.bf16.msra.mxu0 0
  %2772 = vmatprep.subr.bf16.mxu0 0
  %2773 = vmatpush1.bf16.msra.mxu0 0
  %2774 = vmatprep.subr.bf16.mxu0 0
  %2775 = vmatpush1.bf16.msra.mxu0 0
  %2776 = vmatprep.subr.bf16.mxu0 0
  %2777 = vmatpush1.bf16.msra.mxu0 0
  %2778 = vmatprep.subr.bf16.mxu0 0
  %2779 = vmatpush1.bf16.msra.mxu0 0
  %2780 = vmatprep.subr.bf16.mxu0 0
  %2781 = vmatpush1.bf16.msra.mxu0 %v2764
  %2782 = vmatprep.subr.bf16.mxu0 0
  %2783 = vmatpush2.bf16.msra.mxu0 0
  %2784 = vmatprep.subr.bf16.mxu0 0
  %2785 = vmatpush2.bf16.msra.mxu0 0
  %2786 = vmatprep.subr.bf16.mxu0 0
  %2787 = vmatpush2.bf16.msra.mxu0 0
  %2788 = vmatprep.subr.bf16.mxu0 0
  %2789 = vmatpush2.bf16.msra.mxu0 0
  %2790 = vmatprep.subr.bf16.mxu0 0
  %2791 = vmatpush2.bf16.msra.mxu0 0
  %2792 = vmatprep.subr.bf16.mxu0 0
  %2793 = vmatpush2.bf16.msra.mxu0 0
  %2794 = vmatprep.subr.bf16.mxu0 0
  %2795 = vmatpush2.bf16.msra.mxu0 0
  %2796 = vmatprep.subr.bf16.mxu0 0
  %2797 = vmatpush2.bf16.msra.mxu0 0
  %2798 = vmatprep.mubr.bf16.mxu0 0
  %2799 = vmatmul.mubr.bf16.gmra.mxu0 %v2740
  %v2800 = vpop.f32.mrf.mxu0
  %v2801 = vadd.f32 0.0, %v2800
  %v2802 = vpop.f32.mrf.mxu0
  %v2803 = vpop.f32.mrf.mxu0
  %v2804 = vadd.f32 0.0, %v2803
  %v2805 = vpop.f32.mrf.mxu0
  %2806 = vmatprep.mubr.bf16.mxu0 0
  %2807 = vmatmul.mubr.bf16.gmra.mxu0 %v2743
  %v2808 = vpop.f32.mrf.mxu0
  %v2809 = vadd.f32 0.0, %v2808
  %v2810 = vpop.f32.mrf.mxu0
  %v2811 = vpop.f32.mrf.mxu0
  %v2812 = vadd.f32 0.0, %v2811
  %v2813 = vpop.f32.mrf.mxu0
  %2814 = vmatprep.mubr.bf16.mxu0 0
  %2815 = vmatmul.mubr.bf16.gmra.mxu0 %v2746
  %v2816 = vpop.f32.mrf.mxu0
  %v2817 = vadd.f32 0.0, %v2816
  %v2818 = vpop.f32.mrf.mxu0
  %v2819 = vpop.f32.mrf.mxu0
  %v2820 = vadd.f32 0.0, %v2819
  %v2821 = vpop.f32.mrf.mxu0
  %2822 = vmatprep.mubr.bf16.mxu0 0
  %2823 = vmatmul.mubr.bf16.gmra.mxu0 %v2749
  %v2824 = vpop.f32.mrf.mxu0
  %v2825 = vadd.f32 0.0, %v2824
  %v2826 = vpop.f32.mrf.mxu0
  %v2827 = vpop.f32.mrf.mxu0
  %v2828 = vadd.f32 0.0, %v2827
  %v2829 = vpop.f32.mrf.mxu0
  %2830 = vmatprep.mubr.bf16.mxu0 0
  %2831 = vmatmul.mubr.bf16.gmra.mxu0 %v2752
  %v2832 = vpop.f32.mrf.mxu0
  %v2833 = vadd.f32 0.0, %v2832
  %v2834 = vpop.f32.mrf.mxu0
  %v2835 = vpop.f32.mrf.mxu0
  %v2836 = vadd.f32 0.0, %v2835
  %v2837 = vpop.f32.mrf.mxu0
  %2838 = vmatprep.mubr.bf16.mxu0 0
  %2839 = vmatmul.mubr.bf16.gmra.mxu0 %v2755
  %v2840 = vpop.f32.mrf.mxu0
  %v2841 = vadd.f32 0.0, %v2840
  %v2842 = vpop.f32.mrf.mxu0
  %v2843 = vpop.f32.mrf.mxu0
  %v2844 = vadd.f32 0.0, %v2843
  %v2845 = vpop.f32.mrf.mxu0
  %2846 = vmatprep.mubr.bf16.mxu0 0
  %2847 = vmatmul.mubr.bf16.gmra.mxu0 %v2758
  %v2848 = vpop.f32.mrf.mxu0
  %v2849 = vadd.f32 0.0, %v2848
  %v2850 = vpop.f32.mrf.mxu0
  %v2851 = vpop.f32.mrf.mxu0
  %v2852 = vadd.f32 0.0, %v2851
  %v2853 = vpop.f32.mrf.mxu0
  %2854 = vmatprep.mubr.bf16.mxu0 0
  %2855 = vmatmul.mubr.bf16.gmra.mxu0 %v2761
  %v2856 = vpop.f32.mrf.mxu0
  %v2857 = vadd.f32 0.0, %v2856
  %v2858 = vpop.f32.mrf.mxu0
  %v2859 = vpop.f32.mrf.mxu0
  %v2860 = vadd.f32 0.0, %v2859
  %v2861 = vpop.f32.mrf.mxu0
  %2862 = vdwg.mxu0
  %v2863 = vadd.f32 %v2697, %v2801
  %v2864 = vadd.f32 %v2698, %v2804
  %v2865 = vadd.f32 %v2699, %v2809
  %v2866 = vadd.f32 %v2700, %v2812
  %v2867 = vadd.f32 %v2701, %v2817
  %v2868 = vadd.f32 %v2702, %v2820
  %v2869 = vadd.f32 %v2703, %v2825
  %v2870 = vadd.f32 %v2704, %v2828
  %v2871 = vadd.f32 %v2705, %v2833
  %v2872 = vadd.f32 %v2706, %v2836
  %v2873 = vadd.f32 %v2707, %v2841
  %v2874 = vadd.f32 %v2708, %v2844
  %v2875 = vadd.f32 %v2709, %v2849
  %v2876 = vadd.f32 %v2710, %v2852
  %v2877 = vadd.f32 %v2711, %v2857
  %v2878 = vadd.f32 %v2712, %v2860
  %v2879 = vld [vmem:[%s2065 + $0x2] sm:$0xff]
  %v2880 = vld [vmem:[%s2065 + $0x12] sm:$0xff]
  %v2881 = vld [vmem:[%s2065 + $0x22] sm:$0xff]
  %v2882 = vld [vmem:[%s2065 + $0x32] sm:$0xff]
  %v2883 = vld [vmem:[%s2065 + $0x42] sm:$0xff]
  %v2884 = vld [vmem:[%s2065 + $0x52] sm:$0xff]
  %v2885 = vld [vmem:[%s2065 + $0x62] sm:$0xff]
  %v2886 = vld [vmem:[%s2065 + $0x72] sm:$0xff]
  %v2887 = vld [vmem:[%s2065 + $0xa2] sm:$0xff]
  %v2888 = vld [vmem:[%s2065 + $0xb2] sm:$0xff]
  %v2889 = vld [vmem:[%s2065 + $0xc2] sm:$0xff]
  %v2890 = vld [vmem:[%s2065 + $0xd2] sm:$0xff]
  %v2891 = vld [vmem:[%s2065 + $0xe2] sm:$0xff]
  %v2892 = vld [vmem:[%s2065 + $0xf2] sm:$0xff]
  %v2893 = vld [vmem:[%s2065 + $0x102] sm:$0xff]
  %v2894 = vld [vmem:[%s2065 + $0x112] sm:$0xff]
  %v2895 = vpack.c.bf16 %v2880, %v2879
  %v2896 = vpack.c.bf16 %v2882, %v2881
  %v2897 = vpack.c.bf16 %v2884, %v2883
  %v2898 = vpack.c.bf16 %v2886, %v2885
  %v2899 = vpack.c.bf16 %v2888, %v2887
  %v2900 = vpack.c.bf16 %v2890, %v2889
  %v2901 = vpack.c.bf16 %v2892, %v2891
  %v2902 = vpack.c.bf16 %v2894, %v2893
  %s2903 = scalar_lea.vmem %s3, 20
  %v2904 = vld [vmem:[%s2903] sm:$0xf]
  %v2906 = vsel %vm21, %v2895, 0
  %v2909 = vsel %vm21, %v2896, 0
  %v2912 = vsel %vm21, %v2897, 0
  %v2915 = vsel %vm21, %v2898, 0
  %v2918 = vsel %vm21, %v2899, 0
  %v2921 = vsel %vm21, %v2900, 0
  %v2924 = vsel %vm21, %v2901, 0
  %v2927 = vsel %vm21, %v2902, 0
  %v2930 = vsel %vm638, %v2904, 0
  %2932 = vmatprep.subr.bf16.mxu0 0
  %2933 = vmatpush1.bf16.msra.mxu0 0
  %2934 = vmatprep.subr.bf16.mxu0 0
  %2935 = vmatpush1.bf16.msra.mxu0 0
  %2936 = vmatprep.subr.bf16.mxu0 0
  %2937 = vmatpush1.bf16.msra.mxu0 0
  %2938 = vmatprep.subr.bf16.mxu0 0
  %2939 = vmatpush1.bf16.msra.mxu0 0
  %2940 = vmatprep.subr.bf16.mxu0 0
  %2941 = vmatpush1.bf16.msra.mxu0 0
  %2942 = vmatprep.subr.bf16.mxu0 0
  %2943 = vmatpush1.bf16.msra.mxu0 0
  %2944 = vmatprep.subr.bf16.mxu0 0
  %2945 = vmatpush1.bf16.msra.mxu0 0
  %2946 = vmatprep.subr.bf16.mxu0 0
  %2947 = vmatpush1.bf16.msra.mxu0 %v2930
  %2948 = vmatprep.subr.bf16.mxu0 0
  %2949 = vmatpush2.bf16.msra.mxu0 0
  %2950 = vmatprep.subr.bf16.mxu0 0
  %2951 = vmatpush2.bf16.msra.mxu0 0
  %2952 = vmatprep.subr.bf16.mxu0 0
  %2953 = vmatpush2.bf16.msra.mxu0 0
  %2954 = vmatprep.subr.bf16.mxu0 0
  %2955 = vmatpush2.bf16.msra.mxu0 0
  %2956 = vmatprep.subr.bf16.mxu0 0
  %2957 = vmatpush2.bf16.msra.mxu0 0
  %2958 = vmatprep.subr.bf16.mxu0 0
  %2959 = vmatpush2.bf16.msra.mxu0 0
  %2960 = vmatprep.subr.bf16.mxu0 0
  %2961 = vmatpush2.bf16.msra.mxu0 0
  %2962 = vmatprep.subr.bf16.mxu0 0
  %2963 = vmatpush2.bf16.msra.mxu0 0
  %2964 = vmatprep.mubr.bf16.mxu0 0
  %2965 = vmatmul.mubr.bf16.gmra.mxu0 %v2906
  %v2966 = vpop.f32.mrf.mxu0
  %v2967 = vadd.f32 0.0, %v2966
  %v2968 = vpop.f32.mrf.mxu0
  %v2969 = vpop.f32.mrf.mxu0
  %v2970 = vadd.f32 0.0, %v2969
  %v2971 = vpop.f32.mrf.mxu0
  %2972 = vmatprep.mubr.bf16.mxu0 0
  %2973 = vmatmul.mubr.bf16.gmra.mxu0 %v2909
  %v2974 = vpop.f32.mrf.mxu0
  %v2975 = vadd.f32 0.0, %v2974
  %v2976 = vpop.f32.mrf.mxu0
  %v2977 = vpop.f32.mrf.mxu0
  %v2978 = vadd.f32 0.0, %v2977
  %v2979 = vpop.f32.mrf.mxu0
  %2980 = vmatprep.mubr.bf16.mxu0 0
  %2981 = vmatmul.mubr.bf16.gmra.mxu0 %v2912
  %v2982 = vpop.f32.mrf.mxu0
  %v2983 = vadd.f32 0.0, %v2982
  %v2984 = vpop.f32.mrf.mxu0
  %v2985 = vpop.f32.mrf.mxu0
  %v2986 = vadd.f32 0.0, %v2985
  %v2987 = vpop.f32.mrf.mxu0
  %2988 = vmatprep.mubr.bf16.mxu0 0
  %2989 = vmatmul.mubr.bf16.gmra.mxu0 %v2915
  %v2990 = vpop.f32.mrf.mxu0
  %v2991 = vadd.f32 0.0, %v2990
  %v2992 = vpop.f32.mrf.mxu0
  %v2993 = vpop.f32.mrf.mxu0
  %v2994 = vadd.f32 0.0, %v2993
  %v2995 = vpop.f32.mrf.mxu0
  %2996 = vmatprep.mubr.bf16.mxu0 0
  %2997 = vmatmul.mubr.bf16.gmra.mxu0 %v2918
  %v2998 = vpop.f32.mrf.mxu0
  %v2999 = vadd.f32 0.0, %v2998
  %v3000 = vpop.f32.mrf.mxu0
  %v3001 = vpop.f32.mrf.mxu0
  %v3002 = vadd.f32 0.0, %v3001
  %v3003 = vpop.f32.mrf.mxu0
  %3004 = vmatprep.mubr.bf16.mxu0 0
  %3005 = vmatmul.mubr.bf16.gmra.mxu0 %v2921
  %v3006 = vpop.f32.mrf.mxu0
  %v3007 = vadd.f32 0.0, %v3006
  %v3008 = vpop.f32.mrf.mxu0
  %v3009 = vpop.f32.mrf.mxu0
  %v3010 = vadd.f32 0.0, %v3009
  %v3011 = vpop.f32.mrf.mxu0
  %3012 = vmatprep.mubr.bf16.mxu0 0
  %3013 = vmatmul.mubr.bf16.gmra.mxu0 %v2924
  %v3014 = vpop.f32.mrf.mxu0
  %v3015 = vadd.f32 0.0, %v3014
  %v3016 = vpop.f32.mrf.mxu0
  %v3017 = vpop.f32.mrf.mxu0
  %v3018 = vadd.f32 0.0, %v3017
  %v3019 = vpop.f32.mrf.mxu0
  %3020 = vmatprep.mubr.bf16.mxu0 0
  %3021 = vmatmul.mubr.bf16.gmra.mxu0 %v2927
  %v3022 = vpop.f32.mrf.mxu0
  %v3023 = vadd.f32 0.0, %v3022
  %v3024 = vpop.f32.mrf.mxu0
  %v3025 = vpop.f32.mrf.mxu0
  %v3026 = vadd.f32 0.0, %v3025
  %v3027 = vpop.f32.mrf.mxu0
  %3028 = vdwg.mxu0
  %v3029 = vadd.f32 %v2863, %v2967
  %v3030 = vadd.f32 %v2864, %v2970
  %v3031 = vadd.f32 %v2865, %v2975
  %v3032 = vadd.f32 %v2866, %v2978
  %v3033 = vadd.f32 %v2867, %v2983
  %v3034 = vadd.f32 %v2868, %v2986
  %v3035 = vadd.f32 %v2869, %v2991
  %v3036 = vadd.f32 %v2870, %v2994
  %v3037 = vadd.f32 %v2871, %v2999
  %v3038 = vadd.f32 %v2872, %v3002
  %v3039 = vadd.f32 %v2873, %v3007
  %v3040 = vadd.f32 %v2874, %v3010
  %v3041 = vadd.f32 %v2875, %v3015
  %v3042 = vadd.f32 %v2876, %v3018
  %v3043 = vadd.f32 %v2877, %v3023
  %v3044 = vadd.f32 %v2878, %v3026
  %s3045 = scalar_lea.vmem [#allocation3], 32
  %v3046 = vld [vmem:[%s3045] sm:$0xff]
  %v3047 = vld [vmem:[%s3045 + $0x10] sm:$0xff]
  %v3048 = vld [vmem:[%s3045 + $0x20] sm:$0xff]
  %v3049 = vld [vmem:[%s3045 + $0x30] sm:$0xff]
  %v3050 = vld [vmem:[%s3045 + $0x40] sm:$0xff]
  %v3051 = vld [vmem:[%s3045 + $0x50] sm:$0xff]
  %v3052 = vld [vmem:[%s3045 + $0x60] sm:$0xff]
  %v3053 = vld [vmem:[%s3045 + $0x70] sm:$0xff]
  %v3054 = vld [vmem:[%s3045 + $0xa0] sm:$0xff]
  %v3055 = vld [vmem:[%s3045 + $0xb0] sm:$0xff]
  %v3056 = vld [vmem:[%s3045 + $0xc0] sm:$0xff]
  %v3057 = vld [vmem:[%s3045 + $0xd0] sm:$0xff]
  %v3058 = vld [vmem:[%s3045 + $0xe0] sm:$0xff]
  %v3059 = vld [vmem:[%s3045 + $0xf0] sm:$0xff]
  %v3060 = vld [vmem:[%s3045 + $0x100] sm:$0xff]
  %v3061 = vld [vmem:[%s3045 + $0x110] sm:$0xff]
  %v3062 = vpack.c.bf16 %v3047, %v3046
  %v3063 = vpack.c.bf16 %v3049, %v3048
  %v3064 = vpack.c.bf16 %v3051, %v3050
  %v3065 = vpack.c.bf16 %v3053, %v3052
  %v3066 = vpack.c.bf16 %v3055, %v3054
  %v3067 = vpack.c.bf16 %v3057, %v3056
  %v3068 = vpack.c.bf16 %v3059, %v3058
  %v3069 = vpack.c.bf16 %v3061, %v3060
  %s3070 = scalar_lea.vmem %s3, 24
  %v3071 = vld [vmem:[%s3070] sm:$0xf]
  %v3073 = vsel %vm21, %v3062, 0
  %v3076 = vsel %vm21, %v3063, 0
  %v3079 = vsel %vm21, %v3064, 0
  %v3082 = vsel %vm21, %v3065, 0
  %v3085 = vsel %vm21, %v3066, 0
  %v3088 = vsel %vm21, %v3067, 0
  %v3091 = vsel %vm21, %v3068, 0
  %v3094 = vsel %vm21, %v3069, 0
  %v3097 = vsel %vm638, %v3071, 0
  %3099 = vmatprep.subr.bf16.mxu0 0
  %3100 = vmatpush1.bf16.msra.mxu0 0
  %3101 = vmatprep.subr.bf16.mxu0 0
  %3102 = vmatpush1.bf16.msra.mxu0 0
  %3103 = vmatprep.subr.bf16.mxu0 0
  %3104 = vmatpush1.bf16.msra.mxu0 0
  %3105 = vmatprep.subr.bf16.mxu0 0
  %3106 = vmatpush1.bf16.msra.mxu0 0
  %3107 = vmatprep.subr.bf16.mxu0 0
  %3108 = vmatpush1.bf16.msra.mxu0 0
  %3109 = vmatprep.subr.bf16.mxu0 0
  %3110 = vmatpush1.bf16.msra.mxu0 0
  %3111 = vmatprep.subr.bf16.mxu0 0
  %3112 = vmatpush1.bf16.msra.mxu0 0
  %3113 = vmatprep.subr.bf16.mxu0 0
  %3114 = vmatpush1.bf16.msra.mxu0 %v3097
  %3115 = vmatprep.subr.bf16.mxu0 0
  %3116 = vmatpush2.bf16.msra.mxu0 0
  %3117 = vmatprep.subr.bf16.mxu0 0
  %3118 = vmatpush2.bf16.msra.mxu0 0
  %3119 = vmatprep.subr.bf16.mxu0 0
  %3120 = vmatpush2.bf16.msra.mxu0 0
  %3121 = vmatprep.subr.bf16.mxu0 0
  %3122 = vmatpush2.bf16.msra.mxu0 0
  %3123 = vmatprep.subr.bf16.mxu0 0
  %3124 = vmatpush2.bf16.msra.mxu0 0
  %3125 = vmatprep.subr.bf16.mxu0 0
  %3126 = vmatpush2.bf16.msra.mxu0 0
  %3127 = vmatprep.subr.bf16.mxu0 0
  %3128 = vmatpush2.bf16.msra.mxu0 0
  %3129 = vmatprep.subr.bf16.mxu0 0
  %3130 = vmatpush2.bf16.msra.mxu0 0
  %3131 = vmatprep.mubr.bf16.mxu0 0
  %3132 = vmatmul.mubr.bf16.gmra.mxu0 %v3073
  %v3133 = vpop.f32.mrf.mxu0
  %v3134 = vadd.f32 0.0, %v3133
  %v3135 = vpop.f32.mrf.mxu0
  %v3136 = vpop.f32.mrf.mxu0
  %v3137 = vadd.f32 0.0, %v3136
  %v3138 = vpop.f32.mrf.mxu0
  %3139 = vmatprep.mubr.bf16.mxu0 0
  %3140 = vmatmul.mubr.bf16.gmra.mxu0 %v3076
  %v3141 = vpop.f32.mrf.mxu0
  %v3142 = vadd.f32 0.0, %v3141
  %v3143 = vpop.f32.mrf.mxu0
  %v3144 = vpop.f32.mrf.mxu0
  %v3145 = vadd.f32 0.0, %v3144
  %v3146 = vpop.f32.mrf.mxu0
  %3147 = vmatprep.mubr.bf16.mxu0 0
  %3148 = vmatmul.mubr.bf16.gmra.mxu0 %v3079
  %v3149 = vpop.f32.mrf.mxu0
  %v3150 = vadd.f32 0.0, %v3149
  %v3151 = vpop.f32.mrf.mxu0
  %v3152 = vpop.f32.mrf.mxu0
  %v3153 = vadd.f32 0.0, %v3152
  %v3154 = vpop.f32.mrf.mxu0
  %3155 = vmatprep.mubr.bf16.mxu0 0
  %3156 = vmatmul.mubr.bf16.gmra.mxu0 %v3082
  %v3157 = vpop.f32.mrf.mxu0
  %v3158 = vadd.f32 0.0, %v3157
  %v3159 = vpop.f32.mrf.mxu0
  %v3160 = vpop.f32.mrf.mxu0
  %v3161 = vadd.f32 0.0, %v3160
  %v3162 = vpop.f32.mrf.mxu0
  %3163 = vmatprep.mubr.bf16.mxu0 0
  %3164 = vmatmul.mubr.bf16.gmra.mxu0 %v3085
  %v3165 = vpop.f32.mrf.mxu0
  %v3166 = vadd.f32 0.0, %v3165
  %v3167 = vpop.f32.mrf.mxu0
  %v3168 = vpop.f32.mrf.mxu0
  %v3169 = vadd.f32 0.0, %v3168
  %v3170 = vpop.f32.mrf.mxu0
  %3171 = vmatprep.mubr.bf16.mxu0 0
  %3172 = vmatmul.mubr.bf16.gmra.mxu0 %v3088
  %v3173 = vpop.f32.mrf.mxu0
  %v3174 = vadd.f32 0.0, %v3173
  %v3175 = vpop.f32.mrf.mxu0
  %v3176 = vpop.f32.mrf.mxu0
  %v3177 = vadd.f32 0.0, %v3176
  %v3178 = vpop.f32.mrf.mxu0
  %3179 = vmatprep.mubr.bf16.mxu0 0
  %3180 = vmatmul.mubr.bf16.gmra.mxu0 %v3091
  %v3181 = vpop.f32.mrf.mxu0
  %v3182 = vadd.f32 0.0, %v3181
  %v3183 = vpop.f32.mrf.mxu0
  %v3184 = vpop.f32.mrf.mxu0
  %v3185 = vadd.f32 0.0, %v3184
  %v3186 = vpop.f32.mrf.mxu0
  %3187 = vmatprep.mubr.bf16.mxu0 0
  %3188 = vmatmul.mubr.bf16.gmra.mxu0 %v3094
  %v3189 = vpop.f32.mrf.mxu0
  %v3190 = vadd.f32 0.0, %v3189
  %v3191 = vpop.f32.mrf.mxu0
  %v3192 = vpop.f32.mrf.mxu0
  %v3193 = vadd.f32 0.0, %v3192
  %v3194 = vpop.f32.mrf.mxu0
  %3195 = vdwg.mxu0
  %v3196 = vadd.f32 %v3029, %v3134
  %v3197 = vadd.f32 %v3030, %v3137
  %v3198 = vadd.f32 %v3031, %v3142
  %v3199 = vadd.f32 %v3032, %v3145
  %v3200 = vadd.f32 %v3033, %v3150
  %v3201 = vadd.f32 %v3034, %v3153
  %v3202 = vadd.f32 %v3035, %v3158
  %v3203 = vadd.f32 %v3036, %v3161
  %v3204 = vadd.f32 %v3037, %v3166
  %v3205 = vadd.f32 %v3038, %v3169
  %v3206 = vadd.f32 %v3039, %v3174
  %v3207 = vadd.f32 %v3040, %v3177
  %v3208 = vadd.f32 %v3041, %v3182
  %v3209 = vadd.f32 %v3042, %v3185
  %v3210 = vadd.f32 %v3043, %v3190
  %v3211 = vadd.f32 %v3044, %v3193
  %v3212 = vld [vmem:[%s3045 + $0x1] sm:$0xff]
  %v3213 = vld [vmem:[%s3045 + $0x11] sm:$0xff]
  %v3214 = vld [vmem:[%s3045 + $0x21] sm:$0xff]
  %v3215 = vld [vmem:[%s3045 + $0x31] sm:$0xff]
  %v3216 = vld [vmem:[%s3045 + $0x41] sm:$0xff]
  %v3217 = vld [vmem:[%s3045 + $0x51] sm:$0xff]
  %v3218 = vld [vmem:[%s3045 + $0x61] sm:$0xff]
  %v3219 = vld [vmem:[%s3045 + $0x71] sm:$0xff]
  %v3220 = vld [vmem:[%s3045 + $0xa1] sm:$0xff]
  %v3221 = vld [vmem:[%s3045 + $0xb1] sm:$0xff]
  %v3222 = vld [vmem:[%s3045 + $0xc1] sm:$0xff]
  %v3223 = vld [vmem:[%s3045 + $0xd1] sm:$0xff]
  %v3224 = vld [vmem:[%s3045 + $0xe1] sm:$0xff]
  %v3225 = vld [vmem:[%s3045 + $0xf1] sm:$0xff]
  %v3226 = vld [vmem:[%s3045 + $0x101] sm:$0xff]
  %v3227 = vld [vmem:[%s3045 + $0x111] sm:$0xff]
  %v3228 = vpack.c.bf16 %v3213, %v3212
  %v3229 = vpack.c.bf16 %v3215, %v3214
  %v3230 = vpack.c.bf16 %v3217, %v3216
  %v3231 = vpack.c.bf16 %v3219, %v3218
  %v3232 = vpack.c.bf16 %v3221, %v3220
  %v3233 = vpack.c.bf16 %v3223, %v3222
  %v3234 = vpack.c.bf16 %v3225, %v3224
  %v3235 = vpack.c.bf16 %v3227, %v3226
  %s3236 = scalar_lea.vmem %s3, 28
  %v3237 = vld [vmem:[%s3236] sm:$0xf]
  %v3239 = vsel %vm21, %v3228, 0
  %v3242 = vsel %vm21, %v3229, 0
  %v3245 = vsel %vm21, %v3230, 0
  %v3248 = vsel %vm21, %v3231, 0
  %v3251 = vsel %vm21, %v3232, 0
  %v3254 = vsel %vm21, %v3233, 0
  %v3257 = vsel %vm21, %v3234, 0
  %v3260 = vsel %vm21, %v3235, 0
  %v3263 = vsel %vm638, %v3237, 0
  %3265 = vmatprep.subr.bf16.mxu0 0
  %3266 = vmatpush1.bf16.msra.mxu0 0
  %3267 = vmatprep.subr.bf16.mxu0 0
  %3268 = vmatpush1.bf16.msra.mxu0 0
  %3269 = vmatprep.subr.bf16.mxu0 0
  %3270 = vmatpush1.bf16.msra.mxu0 0
  %3271 = vmatprep.subr.bf16.mxu0 0
  %3272 = vmatpush1.bf16.msra.mxu0 0
  %3273 = vmatprep.subr.bf16.mxu0 0
  %3274 = vmatpush1.bf16.msra.mxu0 0
  %3275 = vmatprep.subr.bf16.mxu0 0
  %3276 = vmatpush1.bf16.msra.mxu0 0
  %3277 = vmatprep.subr.bf16.mxu0 0
  %3278 = vmatpush1.bf16.msra.mxu0 0
  %3279 = vmatprep.subr.bf16.mxu0 0
  %3280 = vmatpush1.bf16.msra.mxu0 %v3263
  %3281 = vmatprep.subr.bf16.mxu0 0
  %3282 = vmatpush2.bf16.msra.mxu0 0
  %3283 = vmatprep.subr.bf16.mxu0 0
  %3284 = vmatpush2.bf16.msra.mxu0 0
  %3285 = vmatprep.subr.bf16.mxu0 0
  %3286 = vmatpush2.bf16.msra.mxu0 0
  %3287 = vmatprep.subr.bf16.mxu0 0
  %3288 = vmatpush2.bf16.msra.mxu0 0
  %3289 = vmatprep.subr.bf16.mxu0 0
  %3290 = vmatpush2.bf16.msra.mxu0 0
  %3291 = vmatprep.subr.bf16.mxu0 0
  %3292 = vmatpush2.bf16.msra.mxu0 0
  %3293 = vmatprep.subr.bf16.mxu0 0
  %3294 = vmatpush2.bf16.msra.mxu0 0
  %3295 = vmatprep.subr.bf16.mxu0 0
  %3296 = vmatpush2.bf16.msra.mxu0 0
  %3297 = vmatprep.mubr.bf16.mxu0 0
  %3298 = vmatmul.mubr.bf16.gmra.mxu0 %v3239
  %v3299 = vpop.f32.mrf.mxu0
  %v3300 = vadd.f32 0.0, %v3299
  %v3301 = vpop.f32.mrf.mxu0
  %v3302 = vpop.f32.mrf.mxu0
  %v3303 = vadd.f32 0.0, %v3302
  %v3304 = vpop.f32.mrf.mxu0
  %3305 = vmatprep.mubr.bf16.mxu0 0
  %3306 = vmatmul.mubr.bf16.gmra.mxu0 %v3242
  %v3307 = vpop.f32.mrf.mxu0
  %v3308 = vadd.f32 0.0, %v3307
  %v3309 = vpop.f32.mrf.mxu0
  %v3310 = vpop.f32.mrf.mxu0
  %v3311 = vadd.f32 0.0, %v3310
  %v3312 = vpop.f32.mrf.mxu0
  %3313 = vmatprep.mubr.bf16.mxu0 0
  %3314 = vmatmul.mubr.bf16.gmra.mxu0 %v3245
  %v3315 = vpop.f32.mrf.mxu0
  %v3316 = vadd.f32 0.0, %v3315
  %v3317 = vpop.f32.mrf.mxu0
  %v3318 = vpop.f32.mrf.mxu0
  %v3319 = vadd.f32 0.0, %v3318
  %v3320 = vpop.f32.mrf.mxu0
  %3321 = vmatprep.mubr.bf16.mxu0 0
  %3322 = vmatmul.mubr.bf16.gmra.mxu0 %v3248
  %v3323 = vpop.f32.mrf.mxu0
  %v3324 = vadd.f32 0.0, %v3323
  %v3325 = vpop.f32.mrf.mxu0
  %v3326 = vpop.f32.mrf.mxu0
  %v3327 = vadd.f32 0.0, %v3326
  %v3328 = vpop.f32.mrf.mxu0
  %3329 = vmatprep.mubr.bf16.mxu0 0
  %3330 = vmatmul.mubr.bf16.gmra.mxu0 %v3251
  %v3331 = vpop.f32.mrf.mxu0
  %v3332 = vadd.f32 0.0, %v3331
  %v3333 = vpop.f32.mrf.mxu0
  %v3334 = vpop.f32.mrf.mxu0
  %v3335 = vadd.f32 0.0, %v3334
  %v3336 = vpop.f32.mrf.mxu0
  %3337 = vmatprep.mubr.bf16.mxu0 0
  %3338 = vmatmul.mubr.bf16.gmra.mxu0 %v3254
  %v3339 = vpop.f32.mrf.mxu0
  %v3340 = vadd.f32 0.0, %v3339
  %v3341 = vpop.f32.mrf.mxu0
  %v3342 = vpop.f32.mrf.mxu0
  %v3343 = vadd.f32 0.0, %v3342
  %v3344 = vpop.f32.mrf.mxu0
  %3345 = vmatprep.mubr.bf16.mxu0 0
  %3346 = vmatmul.mubr.bf16.gmra.mxu0 %v3257
  %v3347 = vpop.f32.mrf.mxu0
  %v3348 = vadd.f32 0.0, %v3347
  %v3349 = vpop.f32.mrf.mxu0
  %v3350 = vpop.f32.mrf.mxu0
  %v3351 = vadd.f32 0.0, %v3350
  %v3352 = vpop.f32.mrf.mxu0
  %3353 = vmatprep.mubr.bf16.mxu0 0
  %3354 = vmatmul.mubr.bf16.gmra.mxu0 %v3260
  %v3355 = vpop.f32.mrf.mxu0
  %v3356 = vadd.f32 0.0, %v3355
  %v3357 = vpop.f32.mrf.mxu0
  %v3358 = vpop.f32.mrf.mxu0
  %v3359 = vadd.f32 0.0, %v3358
  %v3360 = vpop.f32.mrf.mxu0
  %3361 = vdwg.mxu0
  %v3362 = vadd.f32 %v3196, %v3300
  %v3363 = vadd.f32 %v3197, %v3303
  %v3364 = vadd.f32 %v3198, %v3308
  %v3365 = vadd.f32 %v3199, %v3311
  %v3366 = vadd.f32 %v3200, %v3316
  %v3367 = vadd.f32 %v3201, %v3319
  %v3368 = vadd.f32 %v3202, %v3324
  %v3369 = vadd.f32 %v3203, %v3327
  %v3370 = vadd.f32 %v3204, %v3332
  %v3371 = vadd.f32 %v3205, %v3335
  %v3372 = vadd.f32 %v3206, %v3340
  %v3373 = vadd.f32 %v3207, %v3343
  %v3374 = vadd.f32 %v3208, %v3348
  %v3375 = vadd.f32 %v3209, %v3351
  %v3376 = vadd.f32 %v3210, %v3356
  %v3377 = vadd.f32 %v3211, %v3359
  %v3378 = vld [vmem:[%s3045 + $0x2] sm:$0xff]
  %v3379 = vld [vmem:[%s3045 + $0x12] sm:$0xff]
  %v3380 = vld [vmem:[%s3045 + $0x22] sm:$0xff]
  %v3381 = vld [vmem:[%s3045 + $0x32] sm:$0xff]
  %v3382 = vld [vmem:[%s3045 + $0x42] sm:$0xff]
  %v3383 = vld [vmem:[%s3045 + $0x52] sm:$0xff]
  %v3384 = vld [vmem:[%s3045 + $0x62] sm:$0xff]
  %v3385 = vld [vmem:[%s3045 + $0x72] sm:$0xff]
  %v3386 = vld [vmem:[%s3045 + $0xa2] sm:$0xff]
  %v3387 = vld [vmem:[%s3045 + $0xb2] sm:$0xff]
  %v3388 = vld [vmem:[%s3045 + $0xc2] sm:$0xff]
  %v3389 = vld [vmem:[%s3045 + $0xd2] sm:$0xff]
  %v3390 = vld [vmem:[%s3045 + $0xe2] sm:$0xff]
  %v3391 = vld [vmem:[%s3045 + $0xf2] sm:$0xff]
  %v3392 = vld [vmem:[%s3045 + $0x102] sm:$0xff]
  %v3393 = vld [vmem:[%s3045 + $0x112] sm:$0xff]
  %v3394 = vpack.c.bf16 %v3379, %v3378
  %v3395 = vpack.c.bf16 %v3381, %v3380
  %v3396 = vpack.c.bf16 %v3383, %v3382
  %v3397 = vpack.c.bf16 %v3385, %v3384
  %v3398 = vpack.c.bf16 %v3387, %v3386
  %v3399 = vpack.c.bf16 %v3389, %v3388
  %v3400 = vpack.c.bf16 %v3391, %v3390
  %v3401 = vpack.c.bf16 %v3393, %v3392
  %s3402 = scalar_lea.vmem %s3, 32
  %v3403 = vld [vmem:[%s3402] sm:$0xf]
  %v3405 = vsel %vm21, %v3394, 0
  %v3408 = vsel %vm21, %v3395, 0
  %v3411 = vsel %vm21, %v3396, 0
  %v3414 = vsel %vm21, %v3397, 0
  %v3417 = vsel %vm21, %v3398, 0
  %v3420 = vsel %vm21, %v3399, 0
  %v3423 = vsel %vm21, %v3400, 0
  %v3426 = vsel %vm21, %v3401, 0
  %v3429 = vsel %vm638, %v3403, 0
  %3431 = vmatprep.subr.bf16.mxu0 0
  %3432 = vmatpush1.bf16.msra.mxu0 0
  %3433 = vmatprep.subr.bf16.mxu0 0
  %3434 = vmatpush1.bf16.msra.mxu0 0
  %3435 = vmatprep.subr.bf16.mxu0 0
  %3436 = vmatpush1.bf16.msra.mxu0 0
  %3437 = vmatprep.subr.bf16.mxu0 0
  %3438 = vmatpush1.bf16.msra.mxu0 0
  %3439 = vmatprep.subr.bf16.mxu0 0
  %3440 = vmatpush1.bf16.msra.mxu0 0
  %3441 = vmatprep.subr.bf16.mxu0 0
  %3442 = vmatpush1.bf16.msra.mxu0 0
  %3443 = vmatprep.subr.bf16.mxu0 0
  %3444 = vmatpush1.bf16.msra.mxu0 0
  %3445 = vmatprep.subr.bf16.mxu0 0
  %3446 = vmatpush1.bf16.msra.mxu0 %v3429
  %3447 = vmatprep.subr.bf16.mxu0 0
  %3448 = vmatpush2.bf16.msra.mxu0 0
  %3449 = vmatprep.subr.bf16.mxu0 0
  %3450 = vmatpush2.bf16.msra.mxu0 0
  %3451 = vmatprep.subr.bf16.mxu0 0
  %3452 = vmatpush2.bf16.msra.mxu0 0
  %3453 = vmatprep.subr.bf16.mxu0 0
  %3454 = vmatpush2.bf16.msra.mxu0 0
  %3455 = vmatprep.subr.bf16.mxu0 0
  %3456 = vmatpush2.bf16.msra.mxu0 0
  %3457 = vmatprep.subr.bf16.mxu0 0
  %3458 = vmatpush2.bf16.msra.mxu0 0
  %3459 = vmatprep.subr.bf16.mxu0 0
  %3460 = vmatpush2.bf16.msra.mxu0 0
  %3461 = vmatprep.subr.bf16.mxu0 0
  %3462 = vmatpush2.bf16.msra.mxu0 0
  %3463 = vmatprep.mubr.bf16.mxu0 0
  %3464 = vmatmul.mubr.bf16.gmra.mxu0 %v3405
  %v3465 = vpop.f32.mrf.mxu0
  %v3466 = vadd.f32 0.0, %v3465
  %v3467 = vpop.f32.mrf.mxu0
  %v3468 = vpop.f32.mrf.mxu0
  %v3469 = vadd.f32 0.0, %v3468
  %v3470 = vpop.f32.mrf.mxu0
  %3471 = vmatprep.mubr.bf16.mxu0 0
  %3472 = vmatmul.mubr.bf16.gmra.mxu0 %v3408
  %v3473 = vpop.f32.mrf.mxu0
  %v3474 = vadd.f32 0.0, %v3473
  %v3475 = vpop.f32.mrf.mxu0
  %v3476 = vpop.f32.mrf.mxu0
  %v3477 = vadd.f32 0.0, %v3476
  %v3478 = vpop.f32.mrf.mxu0
  %3479 = vmatprep.mubr.bf16.mxu0 0
  %3480 = vmatmul.mubr.bf16.gmra.mxu0 %v3411
  %v3481 = vpop.f32.mrf.mxu0
  %v3482 = vadd.f32 0.0, %v3481
  %v3483 = vpop.f32.mrf.mxu0
  %v3484 = vpop.f32.mrf.mxu0
  %v3485 = vadd.f32 0.0, %v3484
  %v3486 = vpop.f32.mrf.mxu0
  %3487 = vmatprep.mubr.bf16.mxu0 0
  %3488 = vmatmul.mubr.bf16.gmra.mxu0 %v3414
  %v3489 = vpop.f32.mrf.mxu0
  %v3490 = vadd.f32 0.0, %v3489
  %v3491 = vpop.f32.mrf.mxu0
  %v3492 = vpop.f32.mrf.mxu0
  %v3493 = vadd.f32 0.0, %v3492
  %v3494 = vpop.f32.mrf.mxu0
  %3495 = vmatprep.mubr.bf16.mxu0 0
  %3496 = vmatmul.mubr.bf16.gmra.mxu0 %v3417
  %v3497 = vpop.f32.mrf.mxu0
  %v3498 = vadd.f32 0.0, %v3497
  %v3499 = vpop.f32.mrf.mxu0
  %v3500 = vpop.f32.mrf.mxu0
  %v3501 = vadd.f32 0.0, %v3500
  %v3502 = vpop.f32.mrf.mxu0
  %3503 = vmatprep.mubr.bf16.mxu0 0
  %3504 = vmatmul.mubr.bf16.gmra.mxu0 %v3420
  %v3505 = vpop.f32.mrf.mxu0
  %v3506 = vadd.f32 0.0, %v3505
  %v3507 = vpop.f32.mrf.mxu0
  %v3508 = vpop.f32.mrf.mxu0
  %v3509 = vadd.f32 0.0, %v3508
  %v3510 = vpop.f32.mrf.mxu0
  %3511 = vmatprep.mubr.bf16.mxu0 0
  %3512 = vmatmul.mubr.bf16.gmra.mxu0 %v3423
  %v3513 = vpop.f32.mrf.mxu0
  %v3514 = vadd.f32 0.0, %v3513
  %v3515 = vpop.f32.mrf.mxu0
  %v3516 = vpop.f32.mrf.mxu0
  %v3517 = vadd.f32 0.0, %v3516
  %v3518 = vpop.f32.mrf.mxu0
  %3519 = vmatprep.mubr.bf16.mxu0 0
  %3520 = vmatmul.mubr.bf16.gmra.mxu0 %v3426
  %v3521 = vpop.f32.mrf.mxu0
  %v3522 = vadd.f32 0.0, %v3521
  %v3523 = vpop.f32.mrf.mxu0
  %v3524 = vpop.f32.mrf.mxu0
  %v3525 = vadd.f32 0.0, %v3524
  %v3526 = vpop.f32.mrf.mxu0
  %3527 = vdwg.mxu0
  %v3528 = vadd.f32 %v3362, %v3466
  %v3529 = vadd.f32 %v3363, %v3469
  %v3530 = vadd.f32 %v3364, %v3474
  %v3531 = vadd.f32 %v3365, %v3477
  %v3532 = vadd.f32 %v3366, %v3482
  %v3533 = vadd.f32 %v3367, %v3485
  %v3534 = vadd.f32 %v3368, %v3490
  %v3535 = vadd.f32 %v3369, %v3493
  %v3536 = vadd.f32 %v3370, %v3498
  %v3537 = vadd.f32 %v3371, %v3501
  %v3538 = vadd.f32 %v3372, %v3506
  %v3539 = vadd.f32 %v3373, %v3509
  %v3540 = vadd.f32 %v3374, %v3514
  %v3541 = vadd.f32 %v3375, %v3517
  %v3542 = vadd.f32 %v3376, %v3522
  %v3543 = vadd.f32 %v3377, %v3525
  %v3544 = vld [vmem:[%s4] sm:$0x1]
  %v3546 = vlaneseq
  %v3547 = vshrl.u32 %v3546, 7
  %v3548 = vsub.s32 0, %v3547
  %v3549 = vrot.slane %v3544, %v3548
  %v3551 = vadd.f32 %v3528, %v3549
  %v3552 = vadd.f32 %v3529, %v3549
  %v3553 = vadd.f32 %v3530, %v3549
  %v3554 = vadd.f32 %v3531, %v3549
  %v3555 = vadd.f32 %v3532, %v3549
  %v3556 = vadd.f32 %v3533, %v3549
  %v3557 = vadd.f32 %v3534, %v3549
  %v3558 = vadd.f32 %v3535, %v3549
  %v3559 = vadd.f32 %v3536, %v3549
  %v3560 = vadd.f32 %v3537, %v3549
  %v3561 = vadd.f32 %v3538, %v3549
  %v3562 = vadd.f32 %v3539, %v3549
  %v3563 = vadd.f32 %v3540, %v3549
  %v3564 = vadd.f32 %v3541, %v3549
  %v3565 = vadd.f32 %v3542, %v3549
  %v3566 = vadd.f32 %v3543, %v3549
  %v3567 = vmax.f32 %v3551, 0.0
  %v3568 = vmax.f32 %v3552, 0.0
  %v3569 = vmax.f32 %v3553, 0.0
  %v3570 = vmax.f32 %v3554, 0.0
  %v3571 = vmax.f32 %v3555, 0.0
  %v3572 = vmax.f32 %v3556, 0.0
  %v3573 = vmax.f32 %v3557, 0.0
  %v3574 = vmax.f32 %v3558, 0.0
  %v3575 = vmax.f32 %v3559, 0.0
  %v3576 = vmax.f32 %v3560, 0.0
  %v3577 = vmax.f32 %v3561, 0.0
  %v3578 = vmax.f32 %v3562, 0.0
  %v3579 = vmax.f32 %v3563, 0.0
  %v3580 = vmax.f32 %v3564, 0.0
  %v3581 = vmax.f32 %v3565, 0.0
  %v3582 = vmax.f32 %v3566, 0.0
  %3583 = vst [vmem:[%s5] sm:$0xff] %v3567
  %3584 = vst [vmem:[%s5 + $0x8] sm:$0xff] %v3568
  %3585 = vst [vmem:[%s5 + $0x10] sm:$0xff] %v3569
  %3586 = vst [vmem:[%s5 + $0x18] sm:$0xff] %v3570
  %3587 = vst [vmem:[%s5 + $0x20] sm:$0xff] %v3571
  %3588 = vst [vmem:[%s5 + $0x28] sm:$0xff] %v3572
  %3589 = vst [vmem:[%s5 + $0x30] sm:$0xff] %v3573
  %3590 = vst [vmem:[%s5 + $0x38] sm:$0xff] %v3574
  %3591 = vst [vmem:[%s5 + $0x40] sm:$0xff] %v3575
  %3592 = vst [vmem:[%s5 + $0x48] sm:$0xff] %v3576
  %3593 = vst [vmem:[%s5 + $0x50] sm:$0xff] %v3577
  %3594 = vst [vmem:[%s5 + $0x58] sm:$0xff] %v3578
  %3595 = vst [vmem:[%s5 + $0x60] sm:$0xff] %v3579
  %3596 = vst [vmem:[%s5 + $0x68] sm:$0xff] %v3580
  %3597 = vst [vmem:[%s5 + $0x70] sm:$0xff] %v3581
  %3598 = vst [vmem:[%s5 + $0x78] sm:$0xff] %v3582
  // Predicated region
  $region22: #{down_forward.1} parent=0 // pred_check
    _
  $region23: #{down_forward.1} parent=0 // pred_check_branch
    %3600 = sbr.rel (0) target = $region25
  $region24: #{down_forward.1} parent=0 // pred_region
    _
  $region25: #{down_forward.1} parent=0 // pred_fallthru
    _
  // Predicated region
  $region26: #{down_forward.1} parent=0 // pred_check
    _
  $region27: #{down_forward.1} parent=0 // pred_check_branch
    %3602 = sbr.rel (0) target = $region29
  $region28: #{down_forward.1} parent=0 // pred_region
    _
  $region29: #{down_forward.1} parent=0 // pred_fallthru
    _

</llo_original>
